<compile_context>
chip_gen: v7x
topology: tpu7x:2x2x1
jax: 0.10.0
libtpu: 0.0.40
codegen_flags: <defaults>
</compile_context>

<pallas_src>
import numpy as np
import jax
import jax.numpy as jnp
from jax.experimental import pallas as pl
from jax.experimental.pallas import tpu as pltpu

B = 2          # batch
L_IN = 70      # conv input length  -> final pooled length 7, 100*7 = 700 = Lin0.in_features
D_RAW = 313    # raw feature dim; x[:, :, 6:-300] keeps 7 channels
C_IN = 7
C_HID = 100
N_CLASSES = 6

L_C1, L_P1 = 68, 34      # conv1 / pool1 lengths
L_C2, L_P2 = 32, 16      # conv2 / pool2 lengths
L_C3, L_P3 = 14, 7       # conv3 / pool3 lengths
LANE = 128
K1 = LANE                # conv1 im2col K (3*7 = 21 used rows, rest zero)
K23 = 3 * LANE           # conv2/conv3 im2col K (taps at 128-aligned offsets)
FLAT = L_P3 * LANE       # 896 lanes: pooled row l lives at [l*128, l*128+100)


def mynn_kernel(x_ref, w1_ref, b1_ref, w2_ref, b2_ref, w3_ref, b3_ref,
                w0_ref, b0_ref, wl1_ref, bl1_ref, wl2_ref, bl2_ref,
                out_ref,
                lhs1_s, c1_s, lhs2_s, c2_s, lhs3_s, c3_s, flat_s):
    """Full forward pass for the whole (small) batch in one invocation."""
    bsz = out_ref.shape[0]
    f32 = jnp.float32

    # Zero the im2col / flat staging once: pad lanes must be finite (they hit
    # zero weight rows, but uninitialized VMEM could hold NaN/Inf bit patterns).
    lhs1_s[...] = jnp.zeros_like(lhs1_s)
    lhs2_s[...] = jnp.zeros_like(lhs2_s)
    lhs3_s[...] = jnp.zeros_like(lhs3_s)
    flat_s[...] = jnp.zeros_like(flat_s)

    # ---------- conv1: im2col (taps at lanes k*7) + ONE (B*68, 128)@(128,100) matmul
    for b in range(bsz):
        for k in range(3):
            lhs1_s[pl.ds(b * L_C1, L_C1), pl.ds(k * C_IN, C_IN)] = \
                x_ref[b, pl.ds(k, L_C1), :]
    c1 = jnp.dot(lhs1_s[...], w1_ref[...], preferred_element_type=f32) + b1_ref[...]
    c1_s[...] = jnp.maximum(c1, 0.0)                              # rows b*68 + l

    # ---------- pool1 (batched stride-2 row max) + conv2 im2col (taps 128-aligned)
    p1 = jnp.maximum(c1_s[pl.ds(0, bsz * L_P1, 2), :],
                     c1_s[pl.ds(1, bsz * L_P1, 2), :])            # rows b*34 + l
    for b in range(bsz):
        for k in range(3):
            lhs2_s[pl.ds(b * L_C2, L_C2), pl.ds(k * LANE, C_HID)] = \
                p1[b * L_P1 + k: b * L_P1 + k + L_C2, :]
    c2 = jnp.dot(lhs2_s[...], w2_ref[...], preferred_element_type=f32) + b2_ref[...]
    c2_s[...] = jnp.maximum(c2, 0.0)                              # rows b*32 + l

    # ---------- pool2 + conv3 im2col
    p2 = jnp.maximum(c2_s[pl.ds(0, bsz * L_P2, 2), :],
                     c2_s[pl.ds(1, bsz * L_P2, 2), :])            # rows b*16 + l
    for b in range(bsz):
        for k in range(3):
            lhs3_s[pl.ds(b * L_C3, L_C3), pl.ds(k * LANE, C_HID)] = \
                p2[b * L_P2 + k: b * L_P2 + k + L_C3, :]
    c3 = jnp.dot(lhs3_s[...], w3_ref[...], preferred_element_type=f32) + b3_ref[...]
    c3_s[...] = jnp.maximum(c3, 0.0)                              # rows b*14 + l

    # ---------- pool3 fused with lane-flatten: one batched (B,100) store per pooled row
    p3 = jnp.maximum(c3_s[pl.ds(0, bsz * L_P3, 2), :],
                     c3_s[pl.ds(1, bsz * L_P3, 2), :])            # rows b*7 + l
    for l in range(L_P3):
        rows = jnp.concatenate(
            [p3[b * L_P3 + l: b * L_P3 + l + 1, :] for b in range(bsz)], axis=0)
        flat_s[:, pl.ds(l * LANE, C_HID)] = rows                  # flat[b, l*128 + c]

    # ---------- batched MLP tail (M = B): Lin0/Lin1/Lin2 + log_softmax
    y0 = jnp.dot(flat_s[...], w0_ref[...], preferred_element_type=f32) + b0_ref[...]
    y0 = jnp.maximum(y0, 0.0)                                     # (B, 300)
    y1 = jnp.dot(y0, wl1_ref[...], preferred_element_type=f32) + bl1_ref[...]
    y1 = jnp.maximum(y1, 0.0)                                     # (B, 100)
    z = jnp.dot(y1, wl2_ref[...], preferred_element_type=f32) + bl2_ref[...]  # (B, 6)

    z = z - jnp.max(z, axis=-1, keepdims=True)
    out_ref[...] = z - jnp.log(jnp.sum(jnp.exp(z), axis=-1, keepdims=True))


def pack_params(params):
    """One-time repack of torch-layout weights into kernel (im2col) layout.

    Call this ONCE outside the per-step path and pass the result to
    mynn_forward; no transposes/reshapes run on the per-call path.
    """
    (w1, b1, w2, b2, w3, b3, w0, b0, w1l, b1l, w2l, b2l) = params

    # conv1: (100, 7, 3) -> rows k*7 + c of a (128, 100) matrix, zero-padded.
    w1k = jnp.transpose(w1, (2, 1, 0)).reshape(3 * C_IN, C_HID)        # (21, 100)
    w1p = jnp.pad(w1k, ((0, K1 - 3 * C_IN), (0, 0)))                   # (128, 100)

    # conv2/conv3: (100, 100, 3) -> rows k*128 + c of a (384, 100) matrix.
    def pack_conv(w):
        wk = jnp.transpose(w, (2, 1, 0))                               # (3, 100, 100)
        wk = jnp.pad(wk, ((0, 0), (0, LANE - C_HID), (0, 0)))          # (3, 128, 100)
        return wk.reshape(K23, C_HID)                                  # (384, 100)

    w2p = pack_conv(w2)
    w3p = pack_conv(w3)

    # Lin0: torch flattens (B, 100, 7) as index c*7 + l; the kernel packs pooled
    # row l at lanes [l*128, l*128+100), so w0p[l*128 + c, j] = W0[j, c*7 + l]
    # with zero rows on the 28 pad lanes of each 128-block.
    w0r = jnp.transpose(w0.reshape(300, C_HID, L_P3), (2, 1, 0))       # (7, 100, 300)
    w0p = jnp.pad(w0r, ((0, 0), (0, LANE - C_HID), (0, 0))).reshape(FLAT, 300)

    return (w1p, b1.reshape(1, -1),
            w2p, b2.reshape(1, -1),
            w3p, b3.reshape(1, -1),
            w0p, b0.reshape(1, -1),
            w1l.T, b1l.reshape(1, -1),
            w2l.T, b2l.reshape(1, -1))


def mynn_forward(x, packed_params):
    # Per-call glue: only the data-dependent input slice remains here.  The
    # sliced xs is already (L, C) per sample, which is the kernel layout.
    xs = x[:, :, 6:x.shape[2] - 300]                   # (B, 70, 7)
    bsz = xs.shape[0]
    args = (xs, *packed_params)

    return pl.pallas_call(
        mynn_kernel,
        out_shape=jax.ShapeDtypeStruct((bsz, N_CLASSES), jnp.float32),
        in_specs=[pl.BlockSpec(memory_space=pltpu.MemorySpace.VMEM)] * len(args),
        out_specs=pl.BlockSpec(memory_space=pltpu.MemorySpace.VMEM),
        scratch_shapes=[
            pltpu.VMEM((bsz * L_C1, K1), jnp.float32),    # conv1 im2col LHS
            pltpu.VMEM((bsz * L_C1, C_HID), jnp.float32), # conv1 output (rows b*68+l)
            pltpu.VMEM((bsz * L_C2, K23), jnp.float32),   # conv2 im2col LHS
            pltpu.VMEM((bsz * L_C2, C_HID), jnp.float32), # conv2 output (rows b*32+l)
            pltpu.VMEM((bsz * L_C3, K23), jnp.float32),   # conv3 im2col LHS
            pltpu.VMEM((bsz * L_C3, C_HID), jnp.float32), # conv3 output (rows b*14+l)
            pltpu.VMEM((bsz, FLAT), jnp.float32),         # flat (B, 896) for Lin0
        ],
    )(*args)


def mynn_reference(x, params):
    """Pure-JAX reference mirroring the PyTorch forward exactly."""
    (w1, b1, w2, b2, w3, b3, w0, b0, w1l, b1l, w2l, b2l) = params
    xs = x[:, :, 6:x.shape[2] - 300]
    h = jnp.transpose(xs, (0, 2, 1))                   # (B, 7, L)  NCL

    def conv1d(h, w, b):
        y = jax.lax.conv_general_dilated(
            h, w, window_strides=(1,), padding='VALID',
            dimension_numbers=('NCH', 'OIH', 'NCH'))
        return y + b[None, :, None]

    def pool(h):
        lp = h.shape[2] // 2
        return jnp.max(h[:, :, :2 * lp].reshape(h.shape[0], h.shape[1], lp, 2),
                       axis=3)

    h = pool(jax.nn.relu(conv1d(h, w1, b1)))
    h = pool(jax.nn.relu(conv1d(h, w2, b2)))
    h = pool(jax.nn.relu(conv1d(h, w3, b3)))
    f = h.reshape(h.shape[0], -1)                      # (B, 700), c*7+l order
    y = jax.nn.relu(f @ w0.T + b0)
    y = jax.nn.relu(y @ w1l.T + b1l)
    z = y @ w2l.T + b2l
    return jax.nn.log_softmax(z, axis=1)


def init_params(key):
    def uni(k, shape, fan_in):
        s = 1.0 / np.sqrt(fan_in)
        return jax.random.uniform(k, shape, jnp.float32, -s, s)

    ks = jax.random.split(key, 12)
    w1 = uni(ks[0], (C_HID, C_IN, 3), C_IN * 3)
    b1 = uni(ks[1], (C_HID,), C_IN * 3)
    w2 = uni(ks[2], (C_HID, C_HID, 3), C_HID * 3)
    b2 = uni(ks[3], (C_HID,), C_HID * 3)
    w3 = uni(ks[4], (C_HID, C_HID, 3), C_HID * 3)
    b3 = uni(ks[5], (C_HID,), C_HID * 3)
    w0 = uni(ks[6], (300, 700), 700)
    b0 = uni(ks[7], (300,), 700)
    w1l = uni(ks[8], (100, 300), 300)
    b1l = uni(ks[9], (100,), 300)
    w2l = uni(ks[10], (N_CLASSES, 100), 100)
    b2l = uni(ks[11], (N_CLASSES,), 100)
    return (w1, b1, w2, b2, w3, b3, w0, b0, w1l, b1l, w2l, b2l)


if __name__ == "__main__":
    key = jax.random.PRNGKey(0)
    kx, kp = jax.random.split(key)
    x = jax.random.normal(kx, (B, L_IN, D_RAW), jnp.float32)
    params = init_params(kp)

    # Weight repacking happens once, outside the per-call (jitted) path.
    packed = pack_params(params)
    packed = tuple(jax.block_until_ready(p) for p in packed)

    out = jax.jit(mynn_forward)(x, packed)
    out = jax.block_until_ready(out)

    ref = jax.block_until_ready(mynn_reference(x, params))
    np.testing.assert_allclose(np.asarray(out), np.asarray(ref),
                               rtol=1e-4, atol=1e-4)
    assert out.shape == (B, N_CLASSES)
    print("KERNEL_OK")
</pallas_src>

<mosaic_0001>
module attributes {stable_mosaic.version = 11 : i64} {
  func.func @mynn_kernel(%arg0: memref<2x70x7xf32, #tpu.memory_space<vmem>>, %arg1: memref<128x100xf32, #tpu.memory_space<vmem>>, %arg2: memref<1x100xf32, #tpu.memory_space<vmem>>, %arg3: memref<384x100xf32, #tpu.memory_space<vmem>>, %arg4: memref<1x100xf32, #tpu.memory_space<vmem>>, %arg5: memref<384x100xf32, #tpu.memory_space<vmem>>, %arg6: memref<1x100xf32, #tpu.memory_space<vmem>>, %arg7: memref<896x300xf32, #tpu.memory_space<vmem>>, %arg8: memref<1x300xf32, #tpu.memory_space<vmem>>, %arg9: memref<300x100xf32, #tpu.memory_space<vmem>>, %arg10: memref<1x100xf32, #tpu.memory_space<vmem>>, %arg11: memref<100x6xf32, #tpu.memory_space<vmem>>, %arg12: memref<1x6xf32, #tpu.memory_space<vmem>>, %arg13: memref<2x6xf32, #tpu.memory_space<vmem>>, %arg14: memref<136x128xf32, #tpu.memory_space<vmem>>, %arg15: memref<136x100xf32, #tpu.memory_space<vmem>>, %arg16: memref<64x384xf32, #tpu.memory_space<vmem>>, %arg17: memref<64x100xf32, #tpu.memory_space<vmem>>, %arg18: memref<28x384xf32, #tpu.memory_space<vmem>>, %arg19: memref<28x100xf32, #tpu.memory_space<vmem>>, %arg20: memref<2x896xf32, #tpu.memory_space<vmem>>) attributes {dimension_semantics = [], scalar_prefetch = 0 : i64, scratch_operands = 7 : i64, tpu.core_type = #tpu.core_type<tc>} {
    %cst = arith.constant 0.000000e+00 : f32
    %0 = vector.broadcast %cst : f32 to vector<136x128xf32>
    %c0 = arith.constant 0 : index
    %c0_0 = arith.constant 0 : index
    %1 = vector.load %arg14[%c0, %c0_0] : memref<136x128xf32, #tpu.memory_space<vmem>>, vector<136x128xf32>
    tpu.vector_store %arg14[%c0, %c0_0], %0 {strides = array<i32>} : memref<136x128xf32, #tpu.memory_space<vmem>>, vector<136x128xf32>,
    %cst_1 = arith.constant 0.000000e+00 : f32
    %2 = vector.broadcast %cst_1 : f32 to vector<64x384xf32>
    %c0_2 = arith.constant 0 : index
    %c0_3 = arith.constant 0 : index
    %3 = vector.load %arg16[%c0_2, %c0_3] : memref<64x384xf32, #tpu.memory_space<vmem>>, vector<64x384xf32>
    tpu.vector_store %arg16[%c0_2, %c0_3], %2 {strides = array<i32>} : memref<64x384xf32, #tpu.memory_space<vmem>>, vector<64x384xf32>,
    %cst_4 = arith.constant 0.000000e+00 : f32
    %4 = vector.broadcast %cst_4 : f32 to vector<28x384xf32>
    %c0_5 = arith.constant 0 : index
    %c0_6 = arith.constant 0 : index
    %5 = vector.load %arg18[%c0_5, %c0_6] : memref<28x384xf32, #tpu.memory_space<vmem>>, vector<28x384xf32>
    tpu.vector_store %arg18[%c0_5, %c0_6], %4 {strides = array<i32>} : memref<28x384xf32, #tpu.memory_space<vmem>>, vector<28x384xf32>,
    %cst_7 = arith.constant 0.000000e+00 : f32
    %6 = vector.broadcast %cst_7 : f32 to vector<2x896xf32>
    %c0_8 = arith.constant 0 : index
    %c0_9 = arith.constant 0 : index
    %7 = vector.load %arg20[%c0_8, %c0_9] : memref<2x896xf32, #tpu.memory_space<vmem>>, vector<2x896xf32>
    tpu.vector_store %arg20[%c0_8, %c0_9], %6 {strides = array<i32>} : memref<2x896xf32, #tpu.memory_space<vmem>>, vector<2x896xf32>,
    %c0_10 = arith.constant 0 : index
    %c0_11 = arith.constant 0 : index
    %c0_12 = arith.constant 0 : index
    %8 = vector.load %arg0[%c0_10, %c0_11, %c0_12] : memref<2x70x7xf32, #tpu.memory_space<vmem>>, vector<1x68x7xf32>
    %9 = vector.shape_cast %8 : vector<1x68x7xf32> to vector<68x7xf32>
    %c0_13 = arith.constant 0 : index
    %c0_14 = arith.constant 0 : index
    %10 = vector.load %arg14[%c0_13, %c0_14] : memref<136x128xf32, #tpu.memory_space<vmem>>, vector<68x7xf32>
    tpu.vector_store %arg14[%c0_13, %c0_14], %9 {strides = array<i32>} : memref<136x128xf32, #tpu.memory_space<vmem>>, vector<68x7xf32>,
    %c0_15 = arith.constant 0 : index
    %c1 = arith.constant 1 : index
    %c0_16 = arith.constant 0 : index
    %11 = vector.load %arg0[%c0_15, %c1, %c0_16] : memref<2x70x7xf32, #tpu.memory_space<vmem>>, vector<1x68x7xf32>
    %12 = vector.shape_cast %11 : vector<1x68x7xf32> to vector<68x7xf32>
    %c0_17 = arith.constant 0 : index
    %c7 = arith.constant 7 : index
    %13 = vector.load %arg14[%c0_17, %c7] : memref<136x128xf32, #tpu.memory_space<vmem>>, vector<68x7xf32>
    tpu.vector_store %arg14[%c0_17, %c7], %12 {strides = array<i32>} : memref<136x128xf32, #tpu.memory_space<vmem>>, vector<68x7xf32>,
    %c0_18 = arith.constant 0 : index
    %c2 = arith.constant 2 : index
    %c0_19 = arith.constant 0 : index
    %14 = vector.load %arg0[%c0_18, %c2, %c0_19] : memref<2x70x7xf32, #tpu.memory_space<vmem>>, vector<1x68x7xf32>
    %15 = vector.shape_cast %14 : vector<1x68x7xf32> to vector<68x7xf32>
    %c0_20 = arith.constant 0 : index
    %c14 = arith.constant 14 : index
    %16 = vector.load %arg14[%c0_20, %c14] : memref<136x128xf32, #tpu.memory_space<vmem>>, vector<68x7xf32>
    tpu.vector_store %arg14[%c0_20, %c14], %15 {strides = array<i32>} : memref<136x128xf32, #tpu.memory_space<vmem>>, vector<68x7xf32>,
    %c1_21 = arith.constant 1 : index
    %c0_22 = arith.constant 0 : index
    %c0_23 = arith.constant 0 : index
    %17 = vector.load %arg0[%c1_21, %c0_22, %c0_23] : memref<2x70x7xf32, #tpu.memory_space<vmem>>, vector<1x68x7xf32>
    %18 = vector.shape_cast %17 : vector<1x68x7xf32> to vector<68x7xf32>
    %c68 = arith.constant 68 : index
    %c0_24 = arith.constant 0 : index
    %19 = vector.load %arg14[%c68, %c0_24] : memref<136x128xf32, #tpu.memory_space<vmem>>, vector<68x7xf32>
    tpu.vector_store %arg14[%c68, %c0_24], %18 {strides = array<i32>} : memref<136x128xf32, #tpu.memory_space<vmem>>, vector<68x7xf32>,
    %c1_25 = arith.constant 1 : index
    %c1_26 = arith.constant 1 : index
    %c0_27 = arith.constant 0 : index
    %20 = vector.load %arg0[%c1_25, %c1_26, %c0_27] : memref<2x70x7xf32, #tpu.memory_space<vmem>>, vector<1x68x7xf32>
    %21 = vector.shape_cast %20 : vector<1x68x7xf32> to vector<68x7xf32>
    %c68_28 = arith.constant 68 : index
    %c7_29 = arith.constant 7 : index
    %22 = vector.load %arg14[%c68_28, %c7_29] : memref<136x128xf32, #tpu.memory_space<vmem>>, vector<68x7xf32>
    tpu.vector_store %arg14[%c68_28, %c7_29], %21 {strides = array<i32>} : memref<136x128xf32, #tpu.memory_space<vmem>>, vector<68x7xf32>,
    %c1_30 = arith.constant 1 : index
    %c2_31 = arith.constant 2 : index
    %c0_32 = arith.constant 0 : index
    %23 = vector.load %arg0[%c1_30, %c2_31, %c0_32] : memref<2x70x7xf32, #tpu.memory_space<vmem>>, vector<1x68x7xf32>
    %24 = vector.shape_cast %23 : vector<1x68x7xf32> to vector<68x7xf32>
    %c68_33 = arith.constant 68 : index
    %c14_34 = arith.constant 14 : index
    %25 = vector.load %arg14[%c68_33, %c14_34] : memref<136x128xf32, #tpu.memory_space<vmem>>, vector<68x7xf32>
    tpu.vector_store %arg14[%c68_33, %c14_34], %24 {strides = array<i32>} : memref<136x128xf32, #tpu.memory_space<vmem>>, vector<68x7xf32>,
    %c0_35 = arith.constant 0 : index
    %c0_36 = arith.constant 0 : index
    %26 = vector.load %arg14[%c0_35, %c0_36] : memref<136x128xf32, #tpu.memory_space<vmem>>, vector<136x128xf32>
    %c0_37 = arith.constant 0 : index
    %c0_38 = arith.constant 0 : index
    %27 = vector.load %arg1[%c0_37, %c0_38] : memref<128x100xf32, #tpu.memory_space<vmem>>, vector<128x100xf32>
    %cst_39 = arith.constant dense<0.000000e+00> : vector<136x100xf32>
    %28 = tpu.matmul %26, %27, %cst_39 {dimension_numbers = #tpu.dot_dimension_numbers<[1], [0], [0], [1], [0, 0, 1, 1], [], []>} : vector<136x128xf32>, vector<128x100xf32>, vector<136x100xf32> -> vector<136x100xf32>
    %c0_40 = arith.constant 0 : index
    %c0_41 = arith.constant 0 : index
    %29 = vector.load %arg2[%c0_40, %c0_41] : memref<1x100xf32, #tpu.memory_space<vmem>>, vector<1x100xf32>
    %30 = vector.broadcast %29 : vector<1x100xf32> to vector<136x100xf32>
    %31 = arith.addf %28, %30 : vector<136x100xf32>
    %cst_42 = arith.constant 0.000000e+00 : f32
    %32 = vector.broadcast %cst_42 : f32 to vector<136x100xf32>
    %33 = arith.maximumf %31, %32 : vector<136x100xf32>
    %c0_43 = arith.constant 0 : index
    %c0_44 = arith.constant 0 : index
    %34 = vector.load %arg15[%c0_43, %c0_44] : memref<136x100xf32, #tpu.memory_space<vmem>>, vector<136x100xf32>
    tpu.vector_store %arg15[%c0_43, %c0_44], %33 {strides = array<i32>} : memref<136x100xf32, #tpu.memory_space<vmem>>, vector<136x100xf32>,
    %c0_45 = arith.constant 0 : index
    %c0_46 = arith.constant 0 : index
    %35 = tpu.strided_load %arg15[%c0_45, %c0_46] {strides = array<i32: 2, 1>} : memref<136x100xf32, #tpu.memory_space<vmem>>, vector<68x100xf32>
    %c1_47 = arith.constant 1 : index
    %c0_48 = arith.constant 0 : index
    %36 = tpu.strided_load %arg15[%c1_47, %c0_48] {strides = array<i32: 2, 1>} : memref<136x100xf32, #tpu.memory_space<vmem>>, vector<68x100xf32>
    %37 = arith.maximumf %35, %36 : vector<68x100xf32>
    %38 = vector.extract_strided_slice %37 {offsets = [0, 0], sizes = [32, 100], strides = [1, 1]} : vector<68x100xf32> to vector<32x100xf32>
    %c0_49 = arith.constant 0 : index
    %c0_50 = arith.constant 0 : index
    %39 = vector.load %arg16[%c0_49, %c0_50] : memref<64x384xf32, #tpu.memory_space<vmem>>, vector<32x100xf32>
    tpu.vector_store %arg16[%c0_49, %c0_50], %38 {strides = array<i32>} : memref<64x384xf32, #tpu.memory_space<vmem>>, vector<32x100xf32>,
    %40 = vector.extract_strided_slice %37 {offsets = [1, 0], sizes = [32, 100], strides = [1, 1]} : vector<68x100xf32> to vector<32x100xf32>
    %c0_51 = arith.constant 0 : index
    %c128 = arith.constant 128 : index
    %41 = vector.load %arg16[%c0_51, %c128] : memref<64x384xf32, #tpu.memory_space<vmem>>, vector<32x100xf32>
    tpu.vector_store %arg16[%c0_51, %c128], %40 {strides = array<i32>} : memref<64x384xf32, #tpu.memory_space<vmem>>, vector<32x100xf32>,
    %42 = vector.extract_strided_slice %37 {offsets = [2, 0], sizes = [32, 100], strides = [1, 1]} : vector<68x100xf32> to vector<32x100xf32>
    %c0_52 = arith.constant 0 : index
    %c256 = arith.constant 256 : index
    %43 = vector.load %arg16[%c0_52, %c256] : memref<64x384xf32, #tpu.memory_space<vmem>>, vector<32x100xf32>
    tpu.vector_store %arg16[%c0_52, %c256], %42 {strides = array<i32>} : memref<64x384xf32, #tpu.memory_space<vmem>>, vector<32x100xf32>,
    %44 = vector.extract_strided_slice %37 {offsets = [34, 0], sizes = [32, 100], strides = [1, 1]} : vector<68x100xf32> to vector<32x100xf32>
    %c32 = arith.constant 32 : index
    %c0_53 = arith.constant 0 : index
    %45 = vector.load %arg16[%c32, %c0_53] : memref<64x384xf32, #tpu.memory_space<vmem>>, vector<32x100xf32>
    tpu.vector_store %arg16[%c32, %c0_53], %44 {strides = array<i32>} : memref<64x384xf32, #tpu.memory_space<vmem>>, vector<32x100xf32>,
    %46 = vector.extract_strided_slice %37 {offsets = [35, 0], sizes = [32, 100], strides = [1, 1]} : vector<68x100xf32> to vector<32x100xf32>
    %c32_54 = arith.constant 32 : index
    %c128_55 = arith.constant 128 : index
    %47 = vector.load %arg16[%c32_54, %c128_55] : memref<64x384xf32, #tpu.memory_space<vmem>>, vector<32x100xf32>
    tpu.vector_store %arg16[%c32_54, %c128_55], %46 {strides = array<i32>} : memref<64x384xf32, #tpu.memory_space<vmem>>, vector<32x100xf32>,
    %48 = vector.extract_strided_slice %37 {offsets = [36, 0], sizes = [32, 100], strides = [1, 1]} : vector<68x100xf32> to vector<32x100xf32>
    %c32_56 = arith.constant 32 : index
    %c256_57 = arith.constant 256 : index
    %49 = vector.load %arg16[%c32_56, %c256_57] : memref<64x384xf32, #tpu.memory_space<vmem>>, vector<32x100xf32>
    tpu.vector_store %arg16[%c32_56, %c256_57], %48 {strides = array<i32>} : memref<64x384xf32, #tpu.memory_space<vmem>>, vector<32x100xf32>,
    %c0_58 = arith.constant 0 : index
    %c0_59 = arith.constant 0 : index
    %50 = vector.load %arg16[%c0_58, %c0_59] : memref<64x384xf32, #tpu.memory_space<vmem>>, vector<64x384xf32>
    %c0_60 = arith.constant 0 : index
    %c0_61 = arith.constant 0 : index
    %51 = vector.load %arg3[%c0_60, %c0_61] : memref<384x100xf32, #tpu.memory_space<vmem>>, vector<384x100xf32>
    %cst_62 = arith.constant dense<0.000000e+00> : vector<64x100xf32>
    %52 = tpu.matmul %50, %51, %cst_62 {dimension_numbers = #tpu.dot_dimension_numbers<[1], [0], [0], [1], [0, 0, 1, 1], [], []>} : vector<64x384xf32>, vector<384x100xf32>, vector<64x100xf32> -> vector<64x100xf32>
    %c0_63 = arith.constant 0 : index
    %c0_64 = arith.constant 0 : index
    %53 = vector.load %arg4[%c0_63, %c0_64] : memref<1x100xf32, #tpu.memory_space<vmem>>, vector<1x100xf32>
    %54 = vector.broadcast %53 : vector<1x100xf32> to vector<64x100xf32>
    %55 = arith.addf %52, %54 : vector<64x100xf32>
    %cst_65 = arith.constant 0.000000e+00 : f32
    %56 = vector.broadcast %cst_65 : f32 to vector<64x100xf32>
    %57 = arith.maximumf %55, %56 : vector<64x100xf32>
    %c0_66 = arith.constant 0 : index
    %c0_67 = arith.constant 0 : index
    %58 = vector.load %arg17[%c0_66, %c0_67] : memref<64x100xf32, #tpu.memory_space<vmem>>, vector<64x100xf32>
    tpu.vector_store %arg17[%c0_66, %c0_67], %57 {strides = array<i32>} : memref<64x100xf32, #tpu.memory_space<vmem>>, vector<64x100xf32>,
    %c0_68 = arith.constant 0 : index
    %c0_69 = arith.constant 0 : index
    %59 = tpu.strided_load %arg17[%c0_68, %c0_69] {strides = array<i32: 2, 1>} : memref<64x100xf32, #tpu.memory_space<vmem>>, vector<32x100xf32>
    %c1_70 = arith.constant 1 : index
    %c0_71 = arith.constant 0 : index
    %60 = tpu.strided_load %arg17[%c1_70, %c0_71] {strides = array<i32: 2, 1>} : memref<64x100xf32, #tpu.memory_space<vmem>>, vector<32x100xf32>
    %61 = arith.maximumf %59, %60 : vector<32x100xf32>
    %62 = vector.extract_strided_slice %61 {offsets = [0, 0], sizes = [14, 100], strides = [1, 1]} : vector<32x100xf32> to vector<14x100xf32>
    %c0_72 = arith.constant 0 : index
    %c0_73 = arith.constant 0 : index
    %63 = vector.load %arg18[%c0_72, %c0_73] : memref<28x384xf32, #tpu.memory_space<vmem>>, vector<14x100xf32>
    tpu.vector_store %arg18[%c0_72, %c0_73], %62 {strides = array<i32>} : memref<28x384xf32, #tpu.memory_space<vmem>>, vector<14x100xf32>,
    %64 = vector.extract_strided_slice %61 {offsets = [1, 0], sizes = [14, 100], strides = [1, 1]} : vector<32x100xf32> to vector<14x100xf32>
    %c0_74 = arith.constant 0 : index
    %c128_75 = arith.constant 128 : index
    %65 = vector.load %arg18[%c0_74, %c128_75] : memref<28x384xf32, #tpu.memory_space<vmem>>, vector<14x100xf32>
    tpu.vector_store %arg18[%c0_74, %c128_75], %64 {strides = array<i32>} : memref<28x384xf32, #tpu.memory_space<vmem>>, vector<14x100xf32>,
    %66 = vector.extract_strided_slice %61 {offsets = [2, 0], sizes = [14, 100], strides = [1, 1]} : vector<32x100xf32> to vector<14x100xf32>
    %c0_76 = arith.constant 0 : index
    %c256_77 = arith.constant 256 : index
    %67 = vector.load %arg18[%c0_76, %c256_77] : memref<28x384xf32, #tpu.memory_space<vmem>>, vector<14x100xf32>
    tpu.vector_store %arg18[%c0_76, %c256_77], %66 {strides = array<i32>} : memref<28x384xf32, #tpu.memory_space<vmem>>, vector<14x100xf32>,
    %68 = vector.extract_strided_slice %61 {offsets = [16, 0], sizes = [14, 100], strides = [1, 1]} : vector<32x100xf32> to vector<14x100xf32>
    %c14_78 = arith.constant 14 : index
    %c0_79 = arith.constant 0 : index
    %69 = vector.load %arg18[%c14_78, %c0_79] : memref<28x384xf32, #tpu.memory_space<vmem>>, vector<14x100xf32>
    tpu.vector_store %arg18[%c14_78, %c0_79], %68 {strides = array<i32>} : memref<28x384xf32, #tpu.memory_space<vmem>>, vector<14x100xf32>,
    %70 = vector.extract_strided_slice %61 {offsets = [17, 0], sizes = [14, 100], strides = [1, 1]} : vector<32x100xf32> to vector<14x100xf32>
    %c14_80 = arith.constant 14 : index
    %c128_81 = arith.constant 128 : index
    %71 = vector.load %arg18[%c14_80, %c128_81] : memref<28x384xf32, #tpu.memory_space<vmem>>, vector<14x100xf32>
    tpu.vector_store %arg18[%c14_80, %c128_81], %70 {strides = array<i32>} : memref<28x384xf32, #tpu.memory_space<vmem>>, vector<14x100xf32>,
    %72 = vector.extract_strided_slice %61 {offsets = [18, 0], sizes = [14, 100], strides = [1, 1]} : vector<32x100xf32> to vector<14x100xf32>
    %c14_82 = arith.constant 14 : index
    %c256_83 = arith.constant 256 : index
    %73 = vector.load %arg18[%c14_82, %c256_83] : memref<28x384xf32, #tpu.memory_space<vmem>>, vector<14x100xf32>
    tpu.vector_store %arg18[%c14_82, %c256_83], %72 {strides = array<i32>} : memref<28x384xf32, #tpu.memory_space<vmem>>, vector<14x100xf32>,
    %c0_84 = arith.constant 0 : index
    %c0_85 = arith.constant 0 : index
    %74 = vector.load %arg18[%c0_84, %c0_85] : memref<28x384xf32, #tpu.memory_space<vmem>>, vector<28x384xf32>
    %c0_86 = arith.constant 0 : index
    %c0_87 = arith.constant 0 : index
    %75 = vector.load %arg5[%c0_86, %c0_87] : memref<384x100xf32, #tpu.memory_space<vmem>>, vector<384x100xf32>
    %cst_88 = arith.constant dense<0.000000e+00> : vector<28x100xf32>
    %76 = tpu.matmul %74, %75, %cst_88 {dimension_numbers = #tpu.dot_dimension_numbers<[1], [0], [0], [1], [0, 0, 1, 1], [], []>} : vector<28x384xf32>, vector<384x100xf32>, vector<28x100xf32> -> vector<28x100xf32>
    %c0_89 = arith.constant 0 : index
    %c0_90 = arith.constant 0 : index
    %77 = vector.load %arg6[%c0_89, %c0_90] : memref<1x100xf32, #tpu.memory_space<vmem>>, vector<1x100xf32>
    %78 = vector.broadcast %77 : vector<1x100xf32> to vector<28x100xf32>
    %79 = arith.addf %76, %78 : vector<28x100xf32>
    %cst_91 = arith.constant 0.000000e+00 : f32
    %80 = vector.broadcast %cst_91 : f32 to vector<28x100xf32>
    %81 = arith.maximumf %79, %80 : vector<28x100xf32>
    %c0_92 = arith.constant 0 : index
    %c0_93 = arith.constant 0 : index
    %82 = vector.load %arg19[%c0_92, %c0_93] : memref<28x100xf32, #tpu.memory_space<vmem>>, vector<28x100xf32>
    tpu.vector_store %arg19[%c0_92, %c0_93], %81 {strides = array<i32>} : memref<28x100xf32, #tpu.memory_space<vmem>>, vector<28x100xf32>,
    %c0_94 = arith.constant 0 : index
    %c0_95 = arith.constant 0 : index
    %83 = tpu.strided_load %arg19[%c0_94, %c0_95] {strides = array<i32: 2, 1>} : memref<28x100xf32, #tpu.memory_space<vmem>>, vector<14x100xf32>
    %c1_96 = arith.constant 1 : index
    %c0_97 = arith.constant 0 : index
    %84 = tpu.strided_load %arg19[%c1_96, %c0_97] {strides = array<i32: 2, 1>} : memref<28x100xf32, #tpu.memory_space<vmem>>, vector<14x100xf32>
    %85 = arith.maximumf %83, %84 : vector<14x100xf32>
    %86 = vector.extract_strided_slice %85 {offsets = [0, 0], sizes = [1, 100], strides = [1, 1]} : vector<14x100xf32> to vector<1x100xf32>
    %87 = vector.extract_strided_slice %85 {offsets = [7, 0], sizes = [1, 100], strides = [1, 1]} : vector<14x100xf32> to vector<1x100xf32>
    %88 = tpu.concatenate %86, %87 in 0 : vector<1x100xf32>, vector<1x100xf32> -> vector<2x100xf32>
    %c0_98 = arith.constant 0 : index
    %c0_99 = arith.constant 0 : index
    %89 = vector.load %arg20[%c0_98, %c0_99] : memref<2x896xf32, #tpu.memory_space<vmem>>, vector<2x100xf32>
    tpu.vector_store %arg20[%c0_98, %c0_99], %88 {strides = array<i32>} : memref<2x896xf32, #tpu.memory_space<vmem>>, vector<2x100xf32>,
    %90 = vector.extract_strided_slice %85 {offsets = [1, 0], sizes = [1, 100], strides = [1, 1]} : vector<14x100xf32> to vector<1x100xf32>
    %91 = vector.extract_strided_slice %85 {offsets = [8, 0], sizes = [1, 100], strides = [1, 1]} : vector<14x100xf32> to vector<1x100xf32>
    %92 = tpu.concatenate %90, %91 in 0 : vector<1x100xf32>, vector<1x100xf32> -> vector<2x100xf32>
    %c0_100 = arith.constant 0 : index
    %c128_101 = arith.constant 128 : index
    %93 = vector.load %arg20[%c0_100, %c128_101] : memref<2x896xf32, #tpu.memory_space<vmem>>, vector<2x100xf32>
    tpu.vector_store %arg20[%c0_100, %c128_101], %92 {strides = array<i32>} : memref<2x896xf32, #tpu.memory_space<vmem>>, vector<2x100xf32>,
    %94 = vector.extract_strided_slice %85 {offsets = [2, 0], sizes = [1, 100], strides = [1, 1]} : vector<14x100xf32> to vector<1x100xf32>
    %95 = vector.extract_strided_slice %85 {offsets = [9, 0], sizes = [1, 100], strides = [1, 1]} : vector<14x100xf32> to vector<1x100xf32>
    %96 = tpu.concatenate %94, %95 in 0 : vector<1x100xf32>, vector<1x100xf32> -> vector<2x100xf32>
    %c0_102 = arith.constant 0 : index
    %c256_103 = arith.constant 256 : index
    %97 = vector.load %arg20[%c0_102, %c256_103] : memref<2x896xf32, #tpu.memory_space<vmem>>, vector<2x100xf32>
    tpu.vector_store %arg20[%c0_102, %c256_103], %96 {strides = array<i32>} : memref<2x896xf32, #tpu.memory_space<vmem>>, vector<2x100xf32>,
    %98 = vector.extract_strided_slice %85 {offsets = [3, 0], sizes = [1, 100], strides = [1, 1]} : vector<14x100xf32> to vector<1x100xf32>
    %99 = vector.extract_strided_slice %85 {offsets = [10, 0], sizes = [1, 100], strides = [1, 1]} : vector<14x100xf32> to vector<1x100xf32>
    %100 = tpu.concatenate %98, %99 in 0 : vector<1x100xf32>, vector<1x100xf32> -> vector<2x100xf32>
    %c0_104 = arith.constant 0 : index
    %c384 = arith.constant 384 : index
    %101 = vector.load %arg20[%c0_104, %c384] : memref<2x896xf32, #tpu.memory_space<vmem>>, vector<2x100xf32>
    tpu.vector_store %arg20[%c0_104, %c384], %100 {strides = array<i32>} : memref<2x896xf32, #tpu.memory_space<vmem>>, vector<2x100xf32>,
    %102 = vector.extract_strided_slice %85 {offsets = [4, 0], sizes = [1, 100], strides = [1, 1]} : vector<14x100xf32> to vector<1x100xf32>
    %103 = vector.extract_strided_slice %85 {offsets = [11, 0], sizes = [1, 100], strides = [1, 1]} : vector<14x100xf32> to vector<1x100xf32>
    %104 = tpu.concatenate %102, %103 in 0 : vector<1x100xf32>, vector<1x100xf32> -> vector<2x100xf32>
    %c0_105 = arith.constant 0 : index
    %c512 = arith.constant 512 : index
    %105 = vector.load %arg20[%c0_105, %c512] : memref<2x896xf32, #tpu.memory_space<vmem>>, vector<2x100xf32>
    tpu.vector_store %arg20[%c0_105, %c512], %104 {strides = array<i32>} : memref<2x896xf32, #tpu.memory_space<vmem>>, vector<2x100xf32>,
    %106 = vector.extract_strided_slice %85 {offsets = [5, 0], sizes = [1, 100], strides = [1, 1]} : vector<14x100xf32> to vector<1x100xf32>
    %107 = vector.extract_strided_slice %85 {offsets = [12, 0], sizes = [1, 100], strides = [1, 1]} : vector<14x100xf32> to vector<1x100xf32>
    %108 = tpu.concatenate %106, %107 in 0 : vector<1x100xf32>, vector<1x100xf32> -> vector<2x100xf32>
    %c0_106 = arith.constant 0 : index
    %c640 = arith.constant 640 : index
    %109 = vector.load %arg20[%c0_106, %c640] : memref<2x896xf32, #tpu.memory_space<vmem>>, vector<2x100xf32>
    tpu.vector_store %arg20[%c0_106, %c640], %108 {strides = array<i32>} : memref<2x896xf32, #tpu.memory_space<vmem>>, vector<2x100xf32>,
    %110 = vector.extract_strided_slice %85 {offsets = [6, 0], sizes = [1, 100], strides = [1, 1]} : vector<14x100xf32> to vector<1x100xf32>
    %111 = vector.extract_strided_slice %85 {offsets = [13, 0], sizes = [1, 100], strides = [1, 1]} : vector<14x100xf32> to vector<1x100xf32>
    %112 = tpu.concatenate %110, %111 in 0 : vector<1x100xf32>, vector<1x100xf32> -> vector<2x100xf32>
    %c0_107 = arith.constant 0 : index
    %c768 = arith.constant 768 : index
    %113 = vector.load %arg20[%c0_107, %c768] : memref<2x896xf32, #tpu.memory_space<vmem>>, vector<2x100xf32>
    tpu.vector_store %arg20[%c0_107, %c768], %112 {strides = array<i32>} : memref<2x896xf32, #tpu.memory_space<vmem>>, vector<2x100xf32>,
    %c0_108 = arith.constant 0 : index
    %c0_109 = arith.constant 0 : index
    %114 = vector.load %arg20[%c0_108, %c0_109] : memref<2x896xf32, #tpu.memory_space<vmem>>, vector<2x896xf32>
    %c0_110 = arith.constant 0 : index
    %c0_111 = arith.constant 0 : index
    %115 = vector.load %arg7[%c0_110, %c0_111] : memref<896x300xf32, #tpu.memory_space<vmem>>, vector<896x300xf32>
    %cst_112 = arith.constant dense<0.000000e+00> : vector<2x300xf32>
    %116 = tpu.matmul %114, %115, %cst_112 {dimension_numbers = #tpu.dot_dimension_numbers<[1], [0], [0], [1], [0, 0, 1, 1], [], []>} : vector<2x896xf32>, vector<896x300xf32>, vector<2x300xf32> -> vector<2x300xf32>
    %c0_113 = arith.constant 0 : index
    %c0_114 = arith.constant 0 : index
    %117 = vector.load %arg8[%c0_113, %c0_114] : memref<1x300xf32, #tpu.memory_space<vmem>>, vector<1x300xf32>
    %118 = vector.broadcast %117 : vector<1x300xf32> to vector<2x300xf32>
    %119 = arith.addf %116, %118 : vector<2x300xf32>
    %cst_115 = arith.constant 0.000000e+00 : f32
    %120 = vector.broadcast %cst_115 : f32 to vector<2x300xf32>
    %121 = arith.maximumf %119, %120 : vector<2x300xf32>
    %c0_116 = arith.constant 0 : index
    %c0_117 = arith.constant 0 : index
    %122 = vector.load %arg9[%c0_116, %c0_117] : memref<300x100xf32, #tpu.memory_space<vmem>>, vector<300x100xf32>
    %cst_118 = arith.constant dense<0.000000e+00> : vector<2x100xf32>
    %123 = tpu.matmul %121, %122, %cst_118 {dimension_numbers = #tpu.dot_dimension_numbers<[1], [0], [0], [1], [0, 0, 1, 1], [], []>} : vector<2x300xf32>, vector<300x100xf32>, vector<2x100xf32> -> vector<2x100xf32>
    %c0_119 = arith.constant 0 : index
    %c0_120 = arith.constant 0 : index
    %124 = vector.load %arg10[%c0_119, %c0_120] : memref<1x100xf32, #tpu.memory_space<vmem>>, vector<1x100xf32>
    %125 = vector.broadcast %124 : vector<1x100xf32> to vector<2x100xf32>
    %126 = arith.addf %123, %125 : vector<2x100xf32>
    %cst_121 = arith.constant 0.000000e+00 : f32
    %127 = vector.broadcast %cst_121 : f32 to vector<2x100xf32>
    %128 = arith.maximumf %126, %127 : vector<2x100xf32>
    %c0_122 = arith.constant 0 : index
    %c0_123 = arith.constant 0 : index
    %129 = vector.load %arg11[%c0_122, %c0_123] : memref<100x6xf32, #tpu.memory_space<vmem>>, vector<100x6xf32>
    %cst_124 = arith.constant dense<0.000000e+00> : vector<2x6xf32>
    %130 = tpu.matmul %128, %129, %cst_124 {dimension_numbers = #tpu.dot_dimension_numbers<[1], [0], [0], [1], [0, 0, 1, 1], [], []>} : vector<2x100xf32>, vector<100x6xf32>, vector<2x6xf32> -> vector<2x6xf32>
    %c0_125 = arith.constant 0 : index
    %c0_126 = arith.constant 0 : index
    %131 = vector.load %arg12[%c0_125, %c0_126] : memref<1x6xf32, #tpu.memory_space<vmem>>, vector<1x6xf32>
    %132 = vector.broadcast %131 : vector<1x6xf32> to vector<2x6xf32>
    %133 = arith.addf %130, %132 : vector<2x6xf32>
    %cst_127 = arith.constant dense<0xFF800000> : vector<2xf32>
    %134 = vector.multi_reduction <maximumf>, %133, %cst_127 [1] : vector<2x6xf32> to vector<2xf32>
    %135 = vector.shape_cast %134 : vector<2xf32> to vector<2x1xf32>
    %136 = vector.broadcast %135 : vector<2x1xf32> to vector<2x6xf32>
    %137 = arith.subf %133, %136 : vector<2x6xf32>
    %138 = math.exp %137 : vector<2x6xf32>
    %cst_128 = arith.constant dense<0.000000e+00> : vector<2xf32>
    %139 = vector.multi_reduction <add>, %138, %cst_128 [1] : vector<2x6xf32> to vector<2xf32>
    %140 = vector.shape_cast %139 : vector<2xf32> to vector<2x1xf32>
    %141 = math.log %140 : vector<2x1xf32>
    %142 = vector.broadcast %141 : vector<2x1xf32> to vector<2x6xf32>
    %143 = arith.subf %137, %142 : vector<2x6xf32>
    %c0_129 = arith.constant 0 : index
    %c0_130 = arith.constant 0 : index
    %144 = vector.load %arg13[%c0_129, %c0_130] : memref<2x6xf32, #tpu.memory_space<vmem>>, vector<2x6xf32>
    tpu.vector_store %arg13[%c0_129, %c0_130], %143 {strides = array<i32>} : memref<2x6xf32, #tpu.memory_space<vmem>>, vector<2x6xf32>,
    return
  }
}

</mosaic_0001>

<llo_original>
// kernel: mynn_forward.1
$region0: #{mynn_forward.1}
  #allocation0 [shape = 'u32[]', space=smem, size = 0x4, offset = 0x4, fixed_abs, tag = 'smem constant byte address 0x4 - core index']
  #allocation1 [shape = 'u32[144,128]{1,0:T(1,128)}', space=vmem, size = 0x12000, scoped, tag = 'internal scratch']
  #allocation2 [shape = 'f32[136,128]{1,0:T(8,128)}', space=vmem, size = 0x11000, scoped, tag = 'scratch operand']
  #allocation3 [shape = 'f32[136,100]{1,0:T(8,128)}', space=vmem, size = 0x11000, scoped, tag = 'scratch operand']
  #allocation4 [shape = 'f32[64,384]{1,0:T(8,128)}', space=vmem, size = 0x18000, scoped, tag = 'scratch operand']
  #allocation5 [shape = 'f32[64,100]{1,0:T(8,128)}', space=vmem, size = 0x8000, scoped, tag = 'scratch operand']
  #allocation6 [shape = 'f32[28,384]{1,0:T(8,128)}', space=vmem, size = 0xc000, scoped, tag = 'scratch operand']
  #allocation7 [shape = 'f32[28,100]{1,0:T(8,128)}', space=vmem, size = 0x4000, scoped, tag = 'scratch operand']
  #allocation8 [shape = 'f32[2,896]{1,0:T(2,128)}', space=vmem, size = 0x1c00, scoped, tag = 'scratch operand']
  %s0 = inlined_call_operand.vmem [shape: f32[2,70,7], index: 0, kind: input, shape index: {}]
  %s1 = inlined_call_operand.vmem [shape: f32[128,100], index: 1, kind: input, shape index: {}]
  %s2 = inlined_call_operand.vmem [shape: f32[1,100], index: 2, kind: input, shape index: {}]
  %s3 = inlined_call_operand.vmem [shape: f32[384,100], index: 3, kind: input, shape index: {}]
  %s4 = inlined_call_operand.vmem [shape: f32[1,100], index: 4, kind: input, shape index: {}]
  %s5 = inlined_call_operand.vmem [shape: f32[384,100], index: 5, kind: input, shape index: {}]
  %s6 = inlined_call_operand.vmem [shape: f32[1,100], index: 6, kind: input, shape index: {}]
  %s7 = inlined_call_operand.vmem [shape: f32[896,300], index: 7, kind: input, shape index: {}]
  %s8 = inlined_call_operand.vmem [shape: f32[1,300], index: 8, kind: input, shape index: {}]
  %s9 = inlined_call_operand.vmem [shape: f32[300,100], index: 9, kind: input, shape index: {}]
  %s10 = inlined_call_operand.vmem [shape: f32[1,100], index: 10, kind: input, shape index: {}]
  %s11 = inlined_call_operand.vmem [shape: f32[100,6], index: 11, kind: input, shape index: {}]
  %s12 = inlined_call_operand.vmem [shape: f32[1,6], index: 12, kind: input, shape index: {}]
  %s13 = inlined_call_operand.hbm [shape: f32[2,6], index: 13, kind: output, shape index: {}]
  %s14 = sld [smem:[#allocation0]]
  $region62: #{mynn_forward.1} parent=0
    _
  %s16 = ssub.s32 1, %s14
  %s17 = scalar_select 0, %s16, %s14
  $region1: #{mynn_forward.1} parent=0
    #allocation9 [shape = 'u8[1024]{0}', space=vmem, size = 0x400, scoped, tag = 'output window, operand 0, single buffered']
    #allocation10 [shape = 's32[1]{0}', space=sflag, size = 0x4, scoped, tag = 'scoped memory for mynn_forward.1']
    %18 = vsyncpa [#allocation10], 0
    // Predicated region
    $region2: #{mynn_forward.1} parent=1 // pred_check
      _
    $region3: #{mynn_forward.1} parent=1 // pred_check_branch
      %20 = sbr.rel (0) target = $region5
    $region4: #{mynn_forward.1} parent=1 // pred_region
      _
    $region5: #{mynn_forward.1} parent=1 // pred_fallthru
      _
    // Predicated region
    $region6: #{mynn_forward.1} parent=1 // pred_check
      _
    $region7: #{mynn_forward.1} parent=1 // pred_check_branch
      %22 = sbr.rel (0) target = $region9
    $region8: #{mynn_forward.1} parent=1 // pred_region
      _
    $region9: #{mynn_forward.1} parent=1 // pred_fallthru
      _
    // Predicated region
    $region10: #{mynn_forward.1} parent=1 // pred_check
      _
    $region11: #{mynn_forward.1} parent=1 // pred_check_branch
      %24 = sbr.rel (0) target = $region13
    $region12: #{mynn_forward.1} parent=1 // pred_region
      _
    $region13: #{mynn_forward.1} parent=1 // pred_fallthru
      _
    // Predicated region
    $region14: #{mynn_forward.1} parent=1 // pred_check
      _
    $region15: #{mynn_forward.1} parent=1 // pred_check_branch
      %26 = sbr.rel (0) target = $region17
    $region16: #{mynn_forward.1} parent=1 // pred_region
      _
    $region17: #{mynn_forward.1} parent=1 // pred_fallthru
      _
    // Predicated region
    $region18: #{mynn_forward.1} parent=1 // pred_check
      _
    $region19: #{mynn_forward.1} parent=1 // pred_check_branch
      %28 = sbr.rel (0) target = $region21
    $region20: #{mynn_forward.1} parent=1 // pred_region
      _
    $region21: #{mynn_forward.1} parent=1 // pred_fallthru
      _
    // Predicated region
    $region22: #{mynn_forward.1} parent=1 // pred_check
      _
    $region23: #{mynn_forward.1} parent=1 // pred_check_branch
      %30 = sbr.rel (0) target = $region25
    $region24: #{mynn_forward.1} parent=1 // pred_region
      _
    $region25: #{mynn_forward.1} parent=1 // pred_fallthru
      _
    // Predicated region
    $region26: #{mynn_forward.1} parent=1 // pred_check
      _
    $region27: #{mynn_forward.1} parent=1 // pred_check_branch
      %32 = sbr.rel (0) target = $region29
    $region28: #{mynn_forward.1} parent=1 // pred_region
      _
    $region29: #{mynn_forward.1} parent=1 // pred_fallthru
      _
    // Predicated region
    $region30: #{mynn_forward.1} parent=1 // pred_check
      _
    $region31: #{mynn_forward.1} parent=1 // pred_check_branch
      %34 = sbr.rel (0) target = $region33
    $region32: #{mynn_forward.1} parent=1 // pred_region
      _
    $region33: #{mynn_forward.1} parent=1 // pred_fallthru
      _
    // Predicated region
    $region34: #{mynn_forward.1} parent=1 // pred_check
      _
    $region35: #{mynn_forward.1} parent=1 // pred_check_branch
      %36 = sbr.rel (0) target = $region37
    $region36: #{mynn_forward.1} parent=1 // pred_region
      _
    $region37: #{mynn_forward.1} parent=1 // pred_fallthru
      _
    // Predicated region
    $region38: #{mynn_forward.1} parent=1 // pred_check
      _
    $region39: #{mynn_forward.1} parent=1 // pred_check_branch
      %38 = sbr.rel (0) target = $region41
    $region40: #{mynn_forward.1} parent=1 // pred_region
      _
    $region41: #{mynn_forward.1} parent=1 // pred_fallthru
      _
    // Predicated region
    $region42: #{mynn_forward.1} parent=1 // pred_check
      _
    $region43: #{mynn_forward.1} parent=1 // pred_check_branch
      %40 = sbr.rel (0) target = $region45
    $region44: #{mynn_forward.1} parent=1 // pred_region
      _
    $region45: #{mynn_forward.1} parent=1 // pred_fallthru
      _
    // Predicated region
    $region46: #{mynn_forward.1} parent=1 // pred_check
      _
    $region47: #{mynn_forward.1} parent=1 // pred_check_branch
      %42 = sbr.rel (0) target = $region49
    $region48: #{mynn_forward.1} parent=1 // pred_region
      _
    $region49: #{mynn_forward.1} parent=1 // pred_fallthru
      _
    // Predicated region
    $region50: #{mynn_forward.1} parent=1 // pred_check
      _
    $region51: #{mynn_forward.1} parent=1 // pred_check_branch
      %44 = sbr.rel (0) target = $region53
    $region52: #{mynn_forward.1} parent=1 // pred_region
      _
    $region53: #{mynn_forward.1} parent=1 // pred_fallthru
      _
    %45 = vst [vmem:[#allocation2] sm:$0xff] 0.0
    %46 = vst [vmem:[#allocation2 + $0x8] sm:$0xff] 0.0
    %47 = vst [vmem:[#allocation2 + $0x10] sm:$0xff] 0.0
    %48 = vst [vmem:[#allocation2 + $0x18] sm:$0xff] 0.0
    %49 = vst [vmem:[#allocation2 + $0x20] sm:$0xff] 0.0
    %50 = vst [vmem:[#allocation2 + $0x28] sm:$0xff] 0.0
    %51 = vst [vmem:[#allocation2 + $0x30] sm:$0xff] 0.0
    %52 = vst [vmem:[#allocation2 + $0x38] sm:$0xff] 0.0
    %53 = vst [vmem:[#allocation2 + $0x40] sm:$0xff] 0.0
    %54 = vst [vmem:[#allocation2 + $0x48] sm:$0xff] 0.0
    %55 = vst [vmem:[#allocation2 + $0x50] sm:$0xff] 0.0
    %56 = vst [vmem:[#allocation2 + $0x58] sm:$0xff] 0.0
    %57 = vst [vmem:[#allocation2 + $0x60] sm:$0xff] 0.0
    %58 = vst [vmem:[#allocation2 + $0x68] sm:$0xff] 0.0
    %59 = vst [vmem:[#allocation2 + $0x70] sm:$0xff] 0.0
    %60 = vst [vmem:[#allocation2 + $0x78] sm:$0xff] 0.0
    %61 = vst [vmem:[#allocation2 + $0x80] sm:$0xff] 0.0
    %62 = vst [vmem:[#allocation4] sm:$0xff] 0.0
    %63 = vst [vmem:[#allocation4 + $0x8] sm:$0xff] 0.0
    %64 = vst [vmem:[#allocation4 + $0x10] sm:$0xff] 0.0
    %65 = vst [vmem:[#allocation4 + $0x18] sm:$0xff] 0.0
    %66 = vst [vmem:[#allocation4 + $0x20] sm:$0xff] 0.0
    %67 = vst [vmem:[#allocation4 + $0x28] sm:$0xff] 0.0
    %68 = vst [vmem:[#allocation4 + $0x30] sm:$0xff] 0.0
    %69 = vst [vmem:[#allocation4 + $0x38] sm:$0xff] 0.0
    %70 = vst [vmem:[#allocation4 + $0x40] sm:$0xff] 0.0
    %71 = vst [vmem:[#allocation4 + $0x48] sm:$0xff] 0.0
    %72 = vst [vmem:[#allocation4 + $0x50] sm:$0xff] 0.0
    %73 = vst [vmem:[#allocation4 + $0x58] sm:$0xff] 0.0
    %74 = vst [vmem:[#allocation4 + $0x60] sm:$0xff] 0.0
    %75 = vst [vmem:[#allocation4 + $0x68] sm:$0xff] 0.0
    %76 = vst [vmem:[#allocation4 + $0x70] sm:$0xff] 0.0
    %77 = vst [vmem:[#allocation4 + $0x78] sm:$0xff] 0.0
    %78 = vst [vmem:[#allocation4 + $0x80] sm:$0xff] 0.0
    %79 = vst [vmem:[#allocation4 + $0x88] sm:$0xff] 0.0
    %80 = vst [vmem:[#allocation4 + $0x90] sm:$0xff] 0.0
    %81 = vst [vmem:[#allocation4 + $0x98] sm:$0xff] 0.0
    %82 = vst [vmem:[#allocation4 + $0xa0] sm:$0xff] 0.0
    %83 = vst [vmem:[#allocation4 + $0xa8] sm:$0xff] 0.0
    %84 = vst [vmem:[#allocation4 + $0xb0] sm:$0xff] 0.0
    %85 = vst [vmem:[#allocation4 + $0xb8] sm:$0xff] 0.0
    %86 = vst [vmem:[#allocation6] sm:$0xff] 0.0
    %87 = vst [vmem:[#allocation6 + $0x8] sm:$0xff] 0.0
    %88 = vst [vmem:[#allocation6 + $0x10] sm:$0xff] 0.0
    %89 = vst [vmem:[#allocation6 + $0x18] sm:$0xff] 0.0
    %90 = vst [vmem:[#allocation6 + $0x20] sm:$0xff] 0.0
    %91 = vst [vmem:[#allocation6 + $0x28] sm:$0xff] 0.0
    %92 = vst [vmem:[#allocation6 + $0x30] sm:$0xff] 0.0
    %93 = vst [vmem:[#allocation6 + $0x38] sm:$0xff] 0.0
    %94 = vst [vmem:[#allocation6 + $0x40] sm:$0xff] 0.0
    %95 = vst [vmem:[#allocation6 + $0x48] sm:$0xf] 0.0
    %96 = vst [vmem:[#allocation6 + $0x50] sm:$0xf] 0.0
    %97 = vst [vmem:[#allocation6 + $0x58] sm:$0xf] 0.0
    %98 = vst [vmem:[#allocation8] sm:$0xff] 0.0
    %99 = vst [vmem:[#allocation8 + $0x8] sm:$0x3f] 0.0
    %v100 = vld [vmem:[%s0] sm:$0xff]
    %v101 = vld [vmem:[%s0 + $0x8] sm:$0xff]
    %v102 = vld [vmem:[%s0 + $0x10] sm:$0xff]
    %v103 = vld [vmem:[%s0 + $0x18] sm:$0xff]
    %v104 = vld [vmem:[%s0 + $0x20] sm:$0xff]
    %v105 = vld [vmem:[%s0 + $0x28] sm:$0xff]
    %v106 = vld [vmem:[%s0 + $0x30] sm:$0xff]
    %v107 = vld [vmem:[%s0 + $0x38] sm:$0xff]
    %v108 = vld [vmem:[%s0 + $0x40] sm:$0xf]
    %vm109 = vcmask 56320
    %110 = vst.msk [vmem:[#allocation2] sm:$0xff] %vm109, %v100
    %111 = vst.msk [vmem:[#allocation2 + $0x8] sm:$0xff] %vm109, %v101
    %112 = vst.msk [vmem:[#allocation2 + $0x10] sm:$0xff] %vm109, %v102
    %113 = vst.msk [vmem:[#allocation2 + $0x18] sm:$0xff] %vm109, %v103
    %114 = vst.msk [vmem:[#allocation2 + $0x20] sm:$0xff] %vm109, %v104
    %115 = vst.msk [vmem:[#allocation2 + $0x28] sm:$0xff] %vm109, %v105
    %116 = vst.msk [vmem:[#allocation2 + $0x30] sm:$0xff] %vm109, %v106
    %117 = vst.msk [vmem:[#allocation2 + $0x38] sm:$0xff] %vm109, %v107
    %vm118 = vcmask 52224
    %119 = vst.msk [vmem:[#allocation2 + $0x40] sm:$0xf] %vm118, %v108
    %v120 = vld [vmem:[%s0 + $0x1] sm:$0xff]
    %v121 = vld [vmem:[%s0 + $0x9] sm:$0xff]
    %v122 = vld [vmem:[%s0 + $0x11] sm:$0xff]
    %v123 = vld [vmem:[%s0 + $0x19] sm:$0xff]
    %v124 = vld [vmem:[%s0 + $0x21] sm:$0xff]
    %v125 = vld [vmem:[%s0 + $0x29] sm:$0xff]
    %v126 = vld [vmem:[%s0 + $0x31] sm:$0xff]
    %v127 = vld [vmem:[%s0 + $0x39] sm:$0xff]
    %v128 = vld [vmem:[%s0 + $0x41] sm:$0xf]
    %138 = vrot.lane.b32.xlu0 %v120, 7
    %v139 = vpop.permute.xlu0 %138
    %140 = vrot.lane.b32.xlu0 %v121, 7
    %v141 = vpop.permute.xlu0 %140
    %142 = vrot.lane.b32.xlu0 %v122, 7
    %v143 = vpop.permute.xlu0 %142
    %144 = vrot.lane.b32.xlu0 %v123, 7
    %v145 = vpop.permute.xlu0 %144
    %146 = vrot.lane.b32.xlu0 %v124, 7
    %v147 = vpop.permute.xlu0 %146
    %148 = vrot.lane.b32.xlu0 %v125, 7
    %v149 = vpop.permute.xlu0 %148
    %150 = vrot.lane.b32.xlu0 %v126, 7
    %v151 = vpop.permute.xlu0 %150
    %152 = vrot.lane.b32.xlu0 %v127, 7
    %v153 = vpop.permute.xlu0 %152
    %154 = vrot.lane.b32.xlu0 %v128, 7
    %v155 = vpop.permute.xlu0 %154
    %vm165 = vcmask 113720
    %166 = vst.msk [vmem:[#allocation2] sm:$0xff] %vm165, %v139
    %167 = vst.msk [vmem:[#allocation2 + $0x8] sm:$0xff] %vm165, %v141
    %168 = vst.msk [vmem:[#allocation2 + $0x10] sm:$0xff] %vm165, %v143
    %169 = vst.msk [vmem:[#allocation2 + $0x18] sm:$0xff] %vm165, %v145
    %170 = vst.msk [vmem:[#allocation2 + $0x20] sm:$0xff] %vm165, %v147
    %171 = vst.msk [vmem:[#allocation2 + $0x28] sm:$0xff] %vm165, %v149
    %172 = vst.msk [vmem:[#allocation2 + $0x30] sm:$0xff] %vm165, %v151
    %173 = vst.msk [vmem:[#allocation2 + $0x38] sm:$0xff] %vm165, %v153
    %vm174 = vcmask 109624
    %175 = vst.msk [vmem:[#allocation2 + $0x40] sm:$0xf] %vm174, %v155
    %v176 = vld [vmem:[%s0 + $0x2] sm:$0xff]
    %v177 = vld [vmem:[%s0 + $0xa] sm:$0xff]
    %v178 = vld [vmem:[%s0 + $0x12] sm:$0xff]
    %v179 = vld [vmem:[%s0 + $0x1a] sm:$0xff]
    %v180 = vld [vmem:[%s0 + $0x22] sm:$0xff]
    %v181 = vld [vmem:[%s0 + $0x2a] sm:$0xff]
    %v182 = vld [vmem:[%s0 + $0x32] sm:$0xff]
    %v183 = vld [vmem:[%s0 + $0x3a] sm:$0xff]
    %v184 = vld [vmem:[%s0 + $0x42] sm:$0xf]
    %194 = vrot.lane.b32.xlu0 %v176, 14
    %v195 = vpop.permute.xlu0 %194
    %196 = vrot.lane.b32.xlu0 %v177, 14
    %v197 = vpop.permute.xlu0 %196
    %198 = vrot.lane.b32.xlu0 %v178, 14
    %v199 = vpop.permute.xlu0 %198
    %200 = vrot.lane.b32.xlu0 %v179, 14
    %v201 = vpop.permute.xlu0 %200
    %202 = vrot.lane.b32.xlu0 %v180, 14
    %v203 = vpop.permute.xlu0 %202
    %204 = vrot.lane.b32.xlu0 %v181, 14
    %v205 = vpop.permute.xlu0 %204
    %206 = vrot.lane.b32.xlu0 %v182, 14
    %v207 = vpop.permute.xlu0 %206
    %208 = vrot.lane.b32.xlu0 %v183, 14
    %v209 = vpop.permute.xlu0 %208
    %210 = vrot.lane.b32.xlu0 %v184, 14
    %v211 = vpop.permute.xlu0 %210
    %vm221 = vcmask 171120
    %222 = vst.msk [vmem:[#allocation2] sm:$0xff] %vm221, %v195
    %223 = vst.msk [vmem:[#allocation2 + $0x8] sm:$0xff] %vm221, %v197
    %224 = vst.msk [vmem:[#allocation2 + $0x10] sm:$0xff] %vm221, %v199
    %225 = vst.msk [vmem:[#allocation2 + $0x18] sm:$0xff] %vm221, %v201
    %226 = vst.msk [vmem:[#allocation2 + $0x20] sm:$0xff] %vm221, %v203
    %227 = vst.msk [vmem:[#allocation2 + $0x28] sm:$0xff] %vm221, %v205
    %228 = vst.msk [vmem:[#allocation2 + $0x30] sm:$0xff] %vm221, %v207
    %229 = vst.msk [vmem:[#allocation2 + $0x38] sm:$0xff] %vm221, %v209
    %vm230 = vcmask 167024
    %231 = vst.msk [vmem:[#allocation2 + $0x40] sm:$0xf] %vm230, %v211
    %s232 = scalar_lea.vmem %s0, 72
    %v233 = vld [vmem:[%s232] sm:$0xff]
    %v234 = vld [vmem:[%s232 + $0x8] sm:$0xff]
    %v235 = vld [vmem:[%s232 + $0x10] sm:$0xff]
    %v236 = vld [vmem:[%s232 + $0x18] sm:$0xff]
    %v237 = vld [vmem:[%s232 + $0x20] sm:$0xff]
    %v238 = vld [vmem:[%s232 + $0x28] sm:$0xff]
    %v239 = vld [vmem:[%s232 + $0x30] sm:$0xff]
    %v240 = vld [vmem:[%s232 + $0x38] sm:$0xff]
    %v241 = vld [vmem:[%s232 + $0x40] sm:$0xf]
    %242 = vst.msk [vmem:[#allocation2 + $0x44] sm:$0xff] %vm109, %v233
    %243 = vst.msk [vmem:[#allocation2 + $0x4c] sm:$0xff] %vm109, %v234
    %244 = vst.msk [vmem:[#allocation2 + $0x54] sm:$0xff] %vm109, %v235
    %245 = vst.msk [vmem:[#allocation2 + $0x5c] sm:$0xff] %vm109, %v236
    %246 = vst.msk [vmem:[#allocation2 + $0x64] sm:$0xff] %vm109, %v237
    %247 = vst.msk [vmem:[#allocation2 + $0x6c] sm:$0xff] %vm109, %v238
    %248 = vst.msk [vmem:[#allocation2 + $0x74] sm:$0xff] %vm109, %v239
    %249 = vst.msk [vmem:[#allocation2 + $0x7c] sm:$0xff] %vm109, %v240
    %250 = vst.msk [vmem:[#allocation2 + $0x84] sm:$0xf] %vm118, %v241
    %v251 = vld [vmem:[%s232 + $0x1] sm:$0xff]
    %v252 = vld [vmem:[%s232 + $0x9] sm:$0xff]
    %v253 = vld [vmem:[%s232 + $0x11] sm:$0xff]
    %v254 = vld [vmem:[%s232 + $0x19] sm:$0xff]
    %v255 = vld [vmem:[%s232 + $0x21] sm:$0xff]
    %v256 = vld [vmem:[%s232 + $0x29] sm:$0xff]
    %v257 = vld [vmem:[%s232 + $0x31] sm:$0xff]
    %v258 = vld [vmem:[%s232 + $0x39] sm:$0xff]
    %v259 = vld [vmem:[%s232 + $0x41] sm:$0xf]
    %269 = vrot.lane.b32.xlu0 %v251, 7
    %v270 = vpop.permute.xlu0 %269
    %271 = vrot.lane.b32.xlu0 %v252, 7
    %v272 = vpop.permute.xlu0 %271
    %273 = vrot.lane.b32.xlu0 %v253, 7
    %v274 = vpop.permute.xlu0 %273
    %275 = vrot.lane.b32.xlu0 %v254, 7
    %v276 = vpop.permute.xlu0 %275
    %277 = vrot.lane.b32.xlu0 %v255, 7
    %v278 = vpop.permute.xlu0 %277
    %279 = vrot.lane.b32.xlu0 %v256, 7
    %v280 = vpop.permute.xlu0 %279
    %281 = vrot.lane.b32.xlu0 %v257, 7
    %v282 = vpop.permute.xlu0 %281
    %283 = vrot.lane.b32.xlu0 %v258, 7
    %v284 = vpop.permute.xlu0 %283
    %285 = vrot.lane.b32.xlu0 %v259, 7
    %v286 = vpop.permute.xlu0 %285
    %296 = vst.msk [vmem:[#allocation2 + $0x44] sm:$0xff] %vm165, %v270
    %297 = vst.msk [vmem:[#allocation2 + $0x4c] sm:$0xff] %vm165, %v272
    %298 = vst.msk [vmem:[#allocation2 + $0x54] sm:$0xff] %vm165, %v274
    %299 = vst.msk [vmem:[#allocation2 + $0x5c] sm:$0xff] %vm165, %v276
    %300 = vst.msk [vmem:[#allocation2 + $0x64] sm:$0xff] %vm165, %v278
    %301 = vst.msk [vmem:[#allocation2 + $0x6c] sm:$0xff] %vm165, %v280
    %302 = vst.msk [vmem:[#allocation2 + $0x74] sm:$0xff] %vm165, %v282
    %303 = vst.msk [vmem:[#allocation2 + $0x7c] sm:$0xff] %vm165, %v284
    %304 = vst.msk [vmem:[#allocation2 + $0x84] sm:$0xf] %vm174, %v286
    %v305 = vld [vmem:[%s232 + $0x2] sm:$0xff]
    %v306 = vld [vmem:[%s232 + $0xa] sm:$0xff]
    %v307 = vld [vmem:[%s232 + $0x12] sm:$0xff]
    %v308 = vld [vmem:[%s232 + $0x1a] sm:$0xff]
    %v309 = vld [vmem:[%s232 + $0x22] sm:$0xff]
    %v310 = vld [vmem:[%s232 + $0x2a] sm:$0xff]
    %v311 = vld [vmem:[%s232 + $0x32] sm:$0xff]
    %v312 = vld [vmem:[%s232 + $0x3a] sm:$0xff]
    %v313 = vld [vmem:[%s232 + $0x42] sm:$0xf]
    %323 = vrot.lane.b32.xlu0 %v305, 14
    %v324 = vpop.permute.xlu0 %323
    %325 = vrot.lane.b32.xlu0 %v306, 14
    %v326 = vpop.permute.xlu0 %325
    %327 = vrot.lane.b32.xlu0 %v307, 14
    %v328 = vpop.permute.xlu0 %327
    %329 = vrot.lane.b32.xlu0 %v308, 14
    %v330 = vpop.permute.xlu0 %329
    %331 = vrot.lane.b32.xlu0 %v309, 14
    %v332 = vpop.permute.xlu0 %331
    %333 = vrot.lane.b32.xlu0 %v310, 14
    %v334 = vpop.permute.xlu0 %333
    %335 = vrot.lane.b32.xlu0 %v311, 14
    %v336 = vpop.permute.xlu0 %335
    %337 = vrot.lane.b32.xlu0 %v312, 14
    %v338 = vpop.permute.xlu0 %337
    %339 = vrot.lane.b32.xlu0 %v313, 14
    %v340 = vpop.permute.xlu0 %339
    %350 = vst.msk [vmem:[#allocation2 + $0x44] sm:$0xff] %vm221, %v324
    %351 = vst.msk [vmem:[#allocation2 + $0x4c] sm:$0xff] %vm221, %v326
    %352 = vst.msk [vmem:[#allocation2 + $0x54] sm:$0xff] %vm221, %v328
    %353 = vst.msk [vmem:[#allocation2 + $0x5c] sm:$0xff] %vm221, %v330
    %354 = vst.msk [vmem:[#allocation2 + $0x64] sm:$0xff] %vm221, %v332
    %355 = vst.msk [vmem:[#allocation2 + $0x6c] sm:$0xff] %vm221, %v334
    %356 = vst.msk [vmem:[#allocation2 + $0x74] sm:$0xff] %vm221, %v336
    %357 = vst.msk [vmem:[#allocation2 + $0x7c] sm:$0xff] %vm221, %v338
    %358 = vst.msk [vmem:[#allocation2 + $0x84] sm:$0xf] %vm230, %v340
    %v359 = vld [vmem:[#allocation2] sm:$0xff]
    %v360 = vld [vmem:[#allocation2 + $0x8] sm:$0xff]
    %v361 = vld [vmem:[#allocation2 + $0x10] sm:$0xff]
    %v362 = vld [vmem:[#allocation2 + $0x18] sm:$0xff]
    %v363 = vld [vmem:[#allocation2 + $0x20] sm:$0xff]
    %v364 = vld [vmem:[#allocation2 + $0x28] sm:$0xff]
    %v365 = vld [vmem:[#allocation2 + $0x30] sm:$0xff]
    %v366 = vld [vmem:[#allocation2 + $0x38] sm:$0xff]
    %v367 = vld [vmem:[#allocation2 + $0x40] sm:$0xff]
    %v368 = vld [vmem:[#allocation2 + $0x48] sm:$0xff]
    %v369 = vld [vmem:[#allocation2 + $0x50] sm:$0xff]
    %v370 = vld [vmem:[#allocation2 + $0x58] sm:$0xff]
    %v371 = vld [vmem:[#allocation2 + $0x60] sm:$0xff]
    %v372 = vld [vmem:[#allocation2 + $0x68] sm:$0xff]
    %v373 = vld [vmem:[#allocation2 + $0x70] sm:$0xff]
    %v374 = vld [vmem:[#allocation2 + $0x78] sm:$0xff]
    %v375 = vld [vmem:[#allocation2 + $0x80] sm:$0xff]
    %v376 = vld [vmem:[%s1] sm:$0xff]
    %v377 = vld [vmem:[%s1 + $0x8] sm:$0xff]
    %v378 = vld [vmem:[%s1 + $0x10] sm:$0xff]
    %v379 = vld [vmem:[%s1 + $0x18] sm:$0xff]
    %v380 = vld [vmem:[%s1 + $0x20] sm:$0xff]
    %v381 = vld [vmem:[%s1 + $0x28] sm:$0xff]
    %v382 = vld [vmem:[%s1 + $0x30] sm:$0xff]
    %v383 = vld [vmem:[%s1 + $0x38] sm:$0xff]
    %v384 = vld [vmem:[%s1 + $0x40] sm:$0xff]
    %v385 = vld [vmem:[%s1 + $0x48] sm:$0xff]
    %v386 = vld [vmem:[%s1 + $0x50] sm:$0xff]
    %v387 = vld [vmem:[%s1 + $0x58] sm:$0xff]
    %v388 = vld [vmem:[%s1 + $0x60] sm:$0xff]
    %v389 = vld [vmem:[%s1 + $0x68] sm:$0xff]
    %v390 = vld [vmem:[%s1 + $0x70] sm:$0xff]
    %v391 = vld [vmem:[%s1 + $0x78] sm:$0xff]
    %v392 = vld [vmem:[%s2] sm:$0x1]
    %v394 = vlaneseq
    %v395 = vshrl.u32 %v394, 7
    %v396 = vsub.s32 0, %v395
    %v397 = vrot.slane %v392, %v396
    %399 = vmatprep.subr.mxu0 0.0
    %400 = vmatpush1.msra.mxu0 %v376
    %401 = vmatprep.subr.mxu0 0.0
    %402 = vmatpush1.msra.mxu0 %v377
    %403 = vmatprep.subr.mxu0 0.0
    %404 = vmatpush1.msra.mxu0 %v378
    %405 = vmatprep.subr.mxu0 0.0
    %406 = vmatpush1.msra.mxu0 %v379
    %407 = vmatprep.subr.mxu0 0.0
    %408 = vmatpush1.msra.mxu0 %v380
    %409 = vmatprep.subr.mxu0 0.0
    %410 = vmatpush1.msra.mxu0 %v381
    %411 = vmatprep.subr.mxu0 0.0
    %412 = vmatpush1.msra.mxu0 %v382
    %413 = vmatprep.subr.mxu0 0.0
    %414 = vmatpush1.msra.mxu0 %v383
    %415 = vmatprep.subr.mxu0 0.0
    %416 = vmatpush1.msra.mxu0 %v384
    %417 = vmatprep.subr.mxu0 0.0
    %418 = vmatpush1.msra.mxu0 %v385
    %419 = vmatprep.subr.mxu0 0.0
    %420 = vmatpush1.msra.mxu0 %v386
    %421 = vmatprep.subr.mxu0 0.0
    %422 = vmatpush1.msra.mxu0 %v387
    %423 = vmatprep.subr.mxu0 0.0
    %424 = vmatpush1.msra.mxu0 %v388
    %425 = vmatprep.subr.mxu0 0.0
    %426 = vmatpush1.msra.mxu0 %v389
    %427 = vmatprep.subr.mxu0 0.0
    %428 = vmatpush1.msra.mxu0 %v390
    %429 = vmatprep.subr.mxu0 0.0
    %430 = vmatpush1.msra.mxu0 %v391
    %431 = vmatprep.subr.mxu0 0.0
    %432 = vmatpush1.msra.mxu0 0.0
    %433 = vmatprep.subr.mxu0 0.0
    %434 = vmatpush1.msra.mxu0 0.0
    %435 = vmatprep.subr.mxu0 0.0
    %436 = vmatpush1.msra.mxu0 0.0
    %437 = vmatprep.subr.mxu0 0.0
    %438 = vmatpush1.msra.mxu0 0.0
    %439 = vmatprep.subr.mxu0 0.0
    %440 = vmatpush1.msra.mxu0 0.0
    %441 = vmatprep.subr.mxu0 0.0
    %442 = vmatpush1.msra.mxu0 0.0
    %443 = vmatprep.subr.mxu0 0.0
    %444 = vmatpush1.msra.mxu0 0.0
    %445 = vmatprep.subr.mxu0 0.0
    %446 = vmatpush1.msra.mxu0 0.0
    %447 = vmatprep.subr.mxu0 0.0
    %448 = vmatpush1.msra.mxu0 0.0
    %449 = vmatprep.subr.mxu0 0.0
    %450 = vmatpush1.msra.mxu0 0.0
    %451 = vmatprep.subr.mxu0 0.0
    %452 = vmatpush1.msra.mxu0 0.0
    %453 = vmatprep.subr.mxu0 0.0
    %454 = vmatpush1.msra.mxu0 0.0
    %455 = vmatprep.subr.mxu0 0.0
    %456 = vmatpush1.msra.mxu0 0.0
    %457 = vmatprep.subr.mxu0 0.0
    %458 = vmatpush1.msra.mxu0 0.0
    %459 = vmatprep.subr.mxu0 0.0
    %460 = vmatpush1.msra.mxu0 0.0
    %461 = vmatprep.subr.mxu0 0.0
    %462 = vmatpush1.msra.mxu0 0.0
    %463 = vmatprep.mubr.f32.mxu0 0.0
    %464 = vmatmul.mubr.f32.gmra.mrb[0].mxu0 %v359
    %v465 = vpop.f32.mrb[0].mxu0
    %v466 = vadd.f32 %v397, %v465
    %v467 = vpop.f32.mrb[0].mxu0
    %468 = vmatprep.mubr.f32.mxu0 0.0
    %469 = vmatmul.mubr.f32.gmra.mrb[0].mxu0 %v360
    %v470 = vpop.f32.mrb[0].mxu0
    %v471 = vadd.f32 %v397, %v470
    %v472 = vpop.f32.mrb[0].mxu0
    %473 = vmatprep.mubr.f32.mxu0 0.0
    %474 = vmatmul.mubr.f32.gmra.mrb[0].mxu0 %v361
    %v475 = vpop.f32.mrb[0].mxu0
    %v476 = vadd.f32 %v397, %v475
    %v477 = vpop.f32.mrb[0].mxu0
    %478 = vmatprep.mubr.f32.mxu0 0.0
    %479 = vmatmul.mubr.f32.gmra.mrb[0].mxu0 %v362
    %v480 = vpop.f32.mrb[0].mxu0
    %v481 = vadd.f32 %v397, %v480
    %v482 = vpop.f32.mrb[0].mxu0
    %483 = vmatprep.mubr.f32.mxu0 0.0
    %484 = vmatmul.mubr.f32.gmra.mrb[0].mxu0 %v363
    %v485 = vpop.f32.mrb[0].mxu0
    %v486 = vadd.f32 %v397, %v485
    %v487 = vpop.f32.mrb[0].mxu0
    %488 = vmatprep.mubr.f32.mxu0 0.0
    %489 = vmatmul.mubr.f32.gmra.mrb[0].mxu0 %v364
    %v490 = vpop.f32.mrb[0].mxu0
    %v491 = vadd.f32 %v397, %v490
    %v492 = vpop.f32.mrb[0].mxu0
    %493 = vmatprep.mubr.f32.mxu0 0.0
    %494 = vmatmul.mubr.f32.gmra.mrb[0].mxu0 %v365
    %v495 = vpop.f32.mrb[0].mxu0
    %v496 = vadd.f32 %v397, %v495
    %v497 = vpop.f32.mrb[0].mxu0
    %498 = vmatprep.mubr.f32.mxu0 0.0
    %499 = vmatmul.mubr.f32.gmra.mrb[0].mxu0 %v366
    %v500 = vpop.f32.mrb[0].mxu0
    %v501 = vadd.f32 %v397, %v500
    %v502 = vpop.f32.mrb[0].mxu0
    %503 = vmatprep.mubr.f32.mxu0 0.0
    %504 = vmatmul.mubr.f32.gmra.mrb[0].mxu0 %v367
    %v505 = vpop.f32.mrb[0].mxu0
    %v506 = vadd.f32 %v397, %v505
    %v507 = vpop.f32.mrb[0].mxu0
    %508 = vmatprep.mubr.f32.mxu0 0.0
    %509 = vmatmul.mubr.f32.gmra.mrb[0].mxu0 %v368
    %v510 = vpop.f32.mrb[0].mxu0
    %v511 = vadd.f32 %v397, %v510
    %v512 = vpop.f32.mrb[0].mxu0
    %513 = vmatprep.mubr.f32.mxu0 0.0
    %514 = vmatmul.mubr.f32.gmra.mrb[0].mxu0 %v369
    %v515 = vpop.f32.mrb[0].mxu0
    %v516 = vadd.f32 %v397, %v515
    %v517 = vpop.f32.mrb[0].mxu0
    %518 = vmatprep.mubr.f32.mxu0 0.0
    %519 = vmatmul.mubr.f32.gmra.mrb[0].mxu0 %v370
    %v520 = vpop.f32.mrb[0].mxu0
    %v521 = vadd.f32 %v397, %v520
    %v522 = vpop.f32.mrb[0].mxu0
    %523 = vmatprep.mubr.f32.mxu0 0.0
    %524 = vmatmul.mubr.f32.gmra.mrb[0].mxu0 %v371
    %v525 = vpop.f32.mrb[0].mxu0
    %v526 = vadd.f32 %v397, %v525
    %v527 = vpop.f32.mrb[0].mxu0
    %528 = vmatprep.mubr.f32.mxu0 0.0
    %529 = vmatmul.mubr.f32.gmra.mrb[0].mxu0 %v372
    %v530 = vpop.f32.mrb[0].mxu0
    %v531 = vadd.f32 %v397, %v530
    %v532 = vpop.f32.mrb[0].mxu0
    %533 = vmatprep.mubr.f32.mxu0 0.0
    %534 = vmatmul.mubr.f32.gmra.mrb[0].mxu0 %v373
    %v535 = vpop.f32.mrb[0].mxu0
    %v536 = vadd.f32 %v397, %v535
    %v537 = vpop.f32.mrb[0].mxu0
    %538 = vmatprep.mubr.f32.mxu0 0.0
    %539 = vmatmul.mubr.f32.gmra.mrb[0].mxu0 %v374
    %v540 = vpop.f32.mrb[0].mxu0
    %v541 = vadd.f32 %v397, %v540
    %v542 = vpop.f32.mrb[0].mxu0
    %543 = vmatprep.mubr.f32.mxu0 0.0
    %544 = vmatmul.mubr.f32.gmra.mrb[0].mxu0 %v375
    %v545 = vpop.f32.mrb[0].mxu0
    %v546 = vadd.f32 %v397, %v545
    %v547 = vpop.f32.mrb[0].mxu0
    %548 = vdwg.mxu0
    %v549 = vmax.f32 %v466, 0.0
    %v550 = vmax.f32 %v471, 0.0
    %v551 = vmax.f32 %v476, 0.0
    %v552 = vmax.f32 %v481, 0.0
    %v553 = vmax.f32 %v486, 0.0
    %v554 = vmax.f32 %v491, 0.0
    %v555 = vmax.f32 %v496, 0.0
    %v556 = vmax.f32 %v501, 0.0
    %v557 = vmax.f32 %v506, 0.0
    %v558 = vmax.f32 %v511, 0.0
    %v559 = vmax.f32 %v516, 0.0
    %v560 = vmax.f32 %v521, 0.0
    %v561 = vmax.f32 %v526, 0.0
    %v562 = vmax.f32 %v531, 0.0
    %v563 = vmax.f32 %v536, 0.0
    %v564 = vmax.f32 %v541, 0.0
    %v565 = vmax.f32 %v546, 0.0
    %vm566 = vcmask 818176
    %567 = vst.msk [vmem:[#allocation3] sm:$0xff] %vm566, %v549
    %568 = vst.msk [vmem:[#allocation3 + $0x8] sm:$0xff] %vm566, %v550
    %569 = vst.msk [vmem:[#allocation3 + $0x10] sm:$0xff] %vm566, %v551
    %570 = vst.msk [vmem:[#allocation3 + $0x18] sm:$0xff] %vm566, %v552
    %571 = vst.msk [vmem:[#allocation3 + $0x20] sm:$0xff] %vm566, %v553
    %572 = vst.msk [vmem:[#allocation3 + $0x28] sm:$0xff] %vm566, %v554
    %573 = vst.msk [vmem:[#allocation3 + $0x30] sm:$0xff] %vm566, %v555
    %574 = vst.msk [vmem:[#allocation3 + $0x38] sm:$0xff] %vm566, %v556
    %575 = vst.msk [vmem:[#allocation3 + $0x40] sm:$0xff] %vm566, %v557
    %576 = vst.msk [vmem:[#allocation3 + $0x48] sm:$0xff] %vm566, %v558
    %577 = vst.msk [vmem:[#allocation3 + $0x50] sm:$0xff] %vm566, %v559
    %578 = vst.msk [vmem:[#allocation3 + $0x58] sm:$0xff] %vm566, %v560
    %579 = vst.msk [vmem:[#allocation3 + $0x60] sm:$0xff] %vm566, %v561
    %580 = vst.msk [vmem:[#allocation3 + $0x68] sm:$0xff] %vm566, %v562
    %581 = vst.msk [vmem:[#allocation3 + $0x70] sm:$0xff] %vm566, %v563
    %582 = vst.msk [vmem:[#allocation3 + $0x78] sm:$0xff] %vm566, %v564
    %583 = vst.msk [vmem:[#allocation3 + $0x80] sm:$0xff] %vm566, %v565
    %v584 = vld [vmem:[#allocation3] ss:$2 sm:$0xff]
    %s585 = scalar_lea.vmem [#allocation3], 16
    %v586 = vld [vmem:[%s585] ss:$2 sm:$0xff]
    %s587 = scalar_lea.vmem [#allocation3], 32
    %v588 = vld [vmem:[%s587] ss:$2 sm:$0xff]
    %s589 = scalar_lea.vmem [#allocation3], 48
    %v590 = vld [vmem:[%s589] ss:$2 sm:$0xff]
    %s591 = scalar_lea.vmem [#allocation3], 64
    %v592 = vld [vmem:[%s591] ss:$2 sm:$0xff]
    %s593 = scalar_lea.vmem [#allocation3], 80
    %v594 = vld [vmem:[%s593] ss:$2 sm:$0xff]
    %s595 = scalar_lea.vmem [#allocation3], 96
    %v596 = vld [vmem:[%s595] ss:$2 sm:$0xff]
    %s597 = scalar_lea.vmem [#allocation3], 112
    %v598 = vld [vmem:[%s597] ss:$2 sm:$0xff]
    %s599 = scalar_lea.vmem [#allocation3], 128
    %v600 = vld [vmem:[%s599] ss:$2 sm:$0xf]
    %s601 = scalar_lea.vmem [#allocation3], 1
    %v602 = vld [vmem:[%s601] ss:$2 sm:$0xff]
    %s603 = scalar_lea.vmem [#allocation3], 17
    %v604 = vld [vmem:[%s603] ss:$2 sm:$0xff]
    %s605 = scalar_lea.vmem [#allocation3], 33
    %v606 = vld [vmem:[%s605] ss:$2 sm:$0xff]
    %s607 = scalar_lea.vmem [#allocation3], 49
    %v608 = vld [vmem:[%s607] ss:$2 sm:$0xff]
    %s609 = scalar_lea.vmem [#allocation3], 65
    %v610 = vld [vmem:[%s609] ss:$2 sm:$0xff]
    %s611 = scalar_lea.vmem [#allocation3], 81
    %v612 = vld [vmem:[%s611] ss:$2 sm:$0xff]
    %s613 = scalar_lea.vmem [#allocation3], 97
    %v614 = vld [vmem:[%s613] ss:$2 sm:$0xff]
    %s615 = scalar_lea.vmem [#allocation3], 113
    %v616 = vld [vmem:[%s615] ss:$2 sm:$0xff]
    %s617 = scalar_lea.vmem [#allocation3], 129
    %v618 = vld [vmem:[%s617] ss:$2 sm:$0xf]
    %v619 = vmax.f32 %v584, %v602
    %v620 = vmax.f32 %v586, %v604
    %v621 = vmax.f32 %v588, %v606
    %v622 = vmax.f32 %v590, %v608
    %v623 = vmax.f32 %v592, %v610
    %v624 = vmax.f32 %v594, %v612
    %v625 = vmax.f32 %v596, %v614
    %v626 = vmax.f32 %v598, %v616
    %v627 = vmax.f32 %v600, %v618
    %628 = vst.msk [vmem:[#allocation4] sm:$0xff] %vm566, %v619
    %629 = vst.msk [vmem:[#allocation4 + $0x18] sm:$0xff] %vm566, %v620
    %630 = vst.msk [vmem:[#allocation4 + $0x30] sm:$0xff] %vm566, %v621
    %631 = vst.msk [vmem:[#allocation4 + $0x48] sm:$0xff] %vm566, %v622
    %vm637 = vcmask 1046528
    %v638 = vrot.slane %v619, 1
    %v639 = vrot.slane %v620, 1
    %v640 = vsel %vm637, %v638, %v639
    %v641 = vrot.slane %v621, 1
    %v642 = vsel %vm637, %v639, %v641
    %v643 = vrot.slane %v622, 1
    %v644 = vsel %vm637, %v641, %v643
    %v645 = vrot.slane %v623, 1
    %v646 = vsel %vm637, %v643, %v645
    %651 = vst.msk [vmem:[#allocation4 + $0x8] sm:$0xff] %vm566, %v640
    %652 = vst.msk [vmem:[#allocation4 + $0x20] sm:$0xff] %vm566, %v642
    %653 = vst.msk [vmem:[#allocation4 + $0x38] sm:$0xff] %vm566, %v644
    %654 = vst.msk [vmem:[#allocation4 + $0x50] sm:$0xff] %vm566, %v646
    %vm655 = vcmask 1045504
    %v656 = vrot.slane %v619, 2
    %v657 = vrot.slane %v620, 2
    %v658 = vsel %vm655, %v656, %v657
    %v659 = vrot.slane %v621, 2
    %v660 = vsel %vm655, %v657, %v659
    %v661 = vrot.slane %v622, 2
    %v662 = vsel %vm655, %v659, %v661
    %v663 = vrot.slane %v623, 2
    %v664 = vsel %vm655, %v661, %v663
    %669 = vst.msk [vmem:[#allocation4 + $0x10] sm:$0xff] %vm566, %v658
    %670 = vst.msk [vmem:[#allocation4 + $0x28] sm:$0xff] %vm566, %v660
    %671 = vst.msk [vmem:[#allocation4 + $0x40] sm:$0xff] %vm566, %v662
    %672 = vst.msk [vmem:[#allocation4 + $0x58] sm:$0xff] %vm566, %v664
    %v677 = vrot.slane %v624, 2
    %v678 = vsel %vm655, %v663, %v677
    %v679 = vrot.slane %v625, 2
    %v680 = vsel %vm655, %v677, %v679
    %v681 = vrot.slane %v626, 2
    %v682 = vsel %vm655, %v679, %v681
    %v683 = vrot.slane %v627, 2
    %v684 = vsel %vm655, %v681, %v683
    %689 = vst.msk [vmem:[#allocation4 + $0x60] sm:$0xff] %vm566, %v678
    %690 = vst.msk [vmem:[#allocation4 + $0x78] sm:$0xff] %vm566, %v680
    %691 = vst.msk [vmem:[#allocation4 + $0x90] sm:$0xff] %vm566, %v682
    %692 = vst.msk [vmem:[#allocation4 + $0xa8] sm:$0xff] %vm566, %v684
    %vm693 = vcmask 1044480
    %v694 = vrot.slane %v623, 3
    %v695 = vrot.slane %v624, 3
    %v696 = vsel %vm693, %v694, %v695
    %v697 = vrot.slane %v625, 3
    %v698 = vsel %vm693, %v695, %v697
    %v699 = vrot.slane %v626, 3
    %v700 = vsel %vm693, %v697, %v699
    %v701 = vrot.slane %v627, 3
    %v702 = vsel %vm693, %v699, %v701
    %707 = vst.msk [vmem:[#allocation4 + $0x68] sm:$0xff] %vm566, %v696
    %708 = vst.msk [vmem:[#allocation4 + $0x80] sm:$0xff] %vm566, %v698
    %709 = vst.msk [vmem:[#allocation4 + $0x98] sm:$0xff] %vm566, %v700
    %710 = vst.msk [vmem:[#allocation4 + $0xb0] sm:$0xff] %vm566, %v702
    %vm711 = vcmask 1043456
    %v712 = vrot.slane %v623, 4
    %v713 = vrot.slane %v624, 4
    %v714 = vsel %vm711, %v712, %v713
    %v715 = vrot.slane %v625, 4
    %v716 = vsel %vm711, %v713, %v715
    %v717 = vrot.slane %v626, 4
    %v718 = vsel %vm711, %v715, %v717
    %v719 = vrot.slane %v627, 4
    %v720 = vsel %vm711, %v717, %v719
    %725 = vst.msk [vmem:[#allocation4 + $0x70] sm:$0xff] %vm566, %v714
    %726 = vst.msk [vmem:[#allocation4 + $0x88] sm:$0xff] %vm566, %v716
    %727 = vst.msk [vmem:[#allocation4 + $0xa0] sm:$0xff] %vm566, %v718
    %728 = vst.msk [vmem:[#allocation4 + $0xb8] sm:$0xff] %vm566, %v720
    %v729 = vld [vmem:[#allocation4] sm:$0xff]
    %v730 = vld [vmem:[#allocation4 + $0x8] sm:$0xff]
    %v731 = vld [vmem:[#allocation4 + $0x10] sm:$0xff]
    %v732 = vld [vmem:[#allocation4 + $0x18] sm:$0xff]
    %v733 = vld [vmem:[#allocation4 + $0x20] sm:$0xff]
    %v734 = vld [vmem:[#allocation4 + $0x28] sm:$0xff]
    %v735 = vld [vmem:[#allocation4 + $0x30] sm:$0xff]
    %v736 = vld [vmem:[#allocation4 + $0x38] sm:$0xff]
    %v737 = vld [vmem:[#allocation4 + $0x40] sm:$0xff]
    %v738 = vld [vmem:[#allocation4 + $0x48] sm:$0xff]
    %v739 = vld [vmem:[#allocation4 + $0x50] sm:$0xff]
    %v740 = vld [vmem:[#allocation4 + $0x58] sm:$0xff]
    %v741 = vld [vmem:[#allocation4 + $0x60] sm:$0xff]
    %v742 = vld [vmem:[#allocation4 + $0x68] sm:$0xff]
    %v743 = vld [vmem:[#allocation4 + $0x70] sm:$0xff]
    %v744 = vld [vmem:[#allocation4 + $0x78] sm:$0xff]
    %v745 = vld [vmem:[#allocation4 + $0x80] sm:$0xff]
    %v746 = vld [vmem:[#allocation4 + $0x88] sm:$0xff]
    %v747 = vld [vmem:[#allocation4 + $0x90] sm:$0xff]
    %v748 = vld [vmem:[#allocation4 + $0x98] sm:$0xff]
    %v749 = vld [vmem:[#allocation4 + $0xa0] sm:$0xff]
    %v750 = vld [vmem:[#allocation4 + $0xa8] sm:$0xff]
    %v751 = vld [vmem:[#allocation4 + $0xb0] sm:$0xff]
    %v752 = vld [vmem:[#allocation4 + $0xb8] sm:$0xff]
    %v753 = vld [vmem:[%s3] sm:$0xff]
    %v754 = vld [vmem:[%s3 + $0x8] sm:$0xff]
    %v755 = vld [vmem:[%s3 + $0x10] sm:$0xff]
    %v756 = vld [vmem:[%s3 + $0x18] sm:$0xff]
    %v757 = vld [vmem:[%s3 + $0x20] sm:$0xff]
    %v758 = vld [vmem:[%s3 + $0x28] sm:$0xff]
    %v759 = vld [vmem:[%s3 + $0x30] sm:$0xff]
    %v760 = vld [vmem:[%s3 + $0x38] sm:$0xff]
    %v761 = vld [vmem:[%s3 + $0x40] sm:$0xff]
    %v762 = vld [vmem:[%s3 + $0x48] sm:$0xff]
    %v763 = vld [vmem:[%s3 + $0x50] sm:$0xff]
    %v764 = vld [vmem:[%s3 + $0x58] sm:$0xff]
    %v765 = vld [vmem:[%s3 + $0x60] sm:$0xff]
    %v766 = vld [vmem:[%s3 + $0x68] sm:$0xff]
    %v767 = vld [vmem:[%s3 + $0x70] sm:$0xff]
    %v768 = vld [vmem:[%s3 + $0x78] sm:$0xff]
    %v769 = vld [vmem:[%s3 + $0x80] sm:$0xff]
    %v770 = vld [vmem:[%s3 + $0x88] sm:$0xff]
    %v771 = vld [vmem:[%s3 + $0x90] sm:$0xff]
    %v772 = vld [vmem:[%s3 + $0x98] sm:$0xff]
    %v773 = vld [vmem:[%s3 + $0xa0] sm:$0xff]
    %v774 = vld [vmem:[%s3 + $0xa8] sm:$0xff]
    %v775 = vld [vmem:[%s3 + $0xb0] sm:$0xff]
    %v776 = vld [vmem:[%s3 + $0xb8] sm:$0xff]
    %v777 = vld [vmem:[%s3 + $0xc0] sm:$0xff]
    %v778 = vld [vmem:[%s3 + $0xc8] sm:$0xff]
    %v779 = vld [vmem:[%s3 + $0xd0] sm:$0xff]
    %v780 = vld [vmem:[%s3 + $0xd8] sm:$0xff]
    %v781 = vld [vmem:[%s3 + $0xe0] sm:$0xff]
    %v782 = vld [vmem:[%s3 + $0xe8] sm:$0xff]
    %v783 = vld [vmem:[%s3 + $0xf0] sm:$0xff]
    %v784 = vld [vmem:[%s3 + $0xf8] sm:$0xff]
    %v785 = vld [vmem:[%s3 + $0x100] sm:$0xff]
    %v786 = vld [vmem:[%s3 + $0x108] sm:$0xff]
    %v787 = vld [vmem:[%s3 + $0x110] sm:$0xff]
    %v788 = vld [vmem:[%s3 + $0x118] sm:$0xff]
    %v789 = vld [vmem:[%s3 + $0x120] sm:$0xff]
    %v790 = vld [vmem:[%s3 + $0x128] sm:$0xff]
    %v791 = vld [vmem:[%s3 + $0x130] sm:$0xff]
    %v792 = vld [vmem:[%s3 + $0x138] sm:$0xff]
    %v793 = vld [vmem:[%s3 + $0x140] sm:$0xff]
    %v794 = vld [vmem:[%s3 + $0x148] sm:$0xff]
    %v795 = vld [vmem:[%s3 + $0x150] sm:$0xff]
    %v796 = vld [vmem:[%s3 + $0x158] sm:$0xff]
    %v797 = vld [vmem:[%s3 + $0x160] sm:$0xff]
    %v798 = vld [vmem:[%s3 + $0x168] sm:$0xff]
    %v799 = vld [vmem:[%s3 + $0x170] sm:$0xff]
    %v800 = vld [vmem:[%s3 + $0x178] sm:$0xff]
    %v801 = vld [vmem:[%s4] sm:$0x1]
    %v803 = vlaneseq
    %v804 = vshrl.u32 %v803, 7
    %v805 = vsub.s32 0, %v804
    %v806 = vrot.slane %v801, %v805
    %808 = vmatprep.subr.mxu0 0.0
    %809 = vmatpush1.msra.mxu0 %v753
    %810 = vmatprep.subr.mxu0 0.0
    %811 = vmatpush1.msra.mxu0 %v754
    %812 = vmatprep.subr.mxu0 0.0
    %813 = vmatpush1.msra.mxu0 %v755
    %814 = vmatprep.subr.mxu0 0.0
    %815 = vmatpush1.msra.mxu0 %v756
    %816 = vmatprep.subr.mxu0 0.0
    %817 = vmatpush1.msra.mxu0 %v757
    %818 = vmatprep.subr.mxu0 0.0
    %819 = vmatpush1.msra.mxu0 %v758
    %820 = vmatprep.subr.mxu0 0.0
    %821 = vmatpush1.msra.mxu0 %v759
    %822 = vmatprep.subr.mxu0 0.0
    %823 = vmatpush1.msra.mxu0 %v760
    %824 = vmatprep.subr.mxu0 0.0
    %825 = vmatpush1.msra.mxu0 %v761
    %826 = vmatprep.subr.mxu0 0.0
    %827 = vmatpush1.msra.mxu0 %v762
    %828 = vmatprep.subr.mxu0 0.0
    %829 = vmatpush1.msra.mxu0 %v763
    %830 = vmatprep.subr.mxu0 0.0
    %831 = vmatpush1.msra.mxu0 %v764
    %832 = vmatprep.subr.mxu0 0.0
    %833 = vmatpush1.msra.mxu0 %v765
    %834 = vmatprep.subr.mxu0 0.0
    %835 = vmatpush1.msra.mxu0 %v766
    %836 = vmatprep.subr.mxu0 0.0
    %837 = vmatpush1.msra.mxu0 %v767
    %838 = vmatprep.subr.mxu0 0.0
    %839 = vmatpush1.msra.mxu0 %v768
    %840 = vmatprep.subr.mxu0 0.0
    %841 = vmatpush1.msra.mxu0 %v769
    %842 = vmatprep.subr.mxu0 0.0
    %843 = vmatpush1.msra.mxu0 %v770
    %844 = vmatprep.subr.mxu0 0.0
    %845 = vmatpush1.msra.mxu0 %v771
    %846 = vmatprep.subr.mxu0 0.0
    %847 = vmatpush1.msra.mxu0 %v772
    %848 = vmatprep.subr.mxu0 0.0
    %849 = vmatpush1.msra.mxu0 %v773
    %850 = vmatprep.subr.mxu0 0.0
    %851 = vmatpush1.msra.mxu0 %v774
    %852 = vmatprep.subr.mxu0 0.0
    %853 = vmatpush1.msra.mxu0 %v775
    %854 = vmatprep.subr.mxu0 0.0
    %855 = vmatpush1.msra.mxu0 %v776
    %856 = vmatprep.subr.mxu0 0.0
    %857 = vmatpush1.msra.mxu0 %v777
    %858 = vmatprep.subr.mxu0 0.0
    %859 = vmatpush1.msra.mxu0 %v778
    %860 = vmatprep.subr.mxu0 0.0
    %861 = vmatpush1.msra.mxu0 %v779
    %862 = vmatprep.subr.mxu0 0.0
    %863 = vmatpush1.msra.mxu0 %v780
    %864 = vmatprep.subr.mxu0 0.0
    %865 = vmatpush1.msra.mxu0 %v781
    %866 = vmatprep.subr.mxu0 0.0
    %867 = vmatpush1.msra.mxu0 %v782
    %868 = vmatprep.subr.mxu0 0.0
    %869 = vmatpush1.msra.mxu0 %v783
    %870 = vmatprep.subr.mxu0 0.0
    %871 = vmatpush1.msra.mxu0 %v784
    %872 = vmatprep.mubr.f32.mxu0 %v730
    %873 = vmatmul.mubr.f32.gmra.mrb[0].mxu0 %v729
    %v874 = vpop.f32.mrb[0].mxu0
    %v875 = vadd.f32 %v806, %v874
    %v876 = vpop.f32.mrb[0].mxu0
    %877 = vmatprep.mubr.f32.mxu0 %v733
    %878 = vmatmul.mubr.f32.gmra.mrb[0].mxu0 %v732
    %v879 = vpop.f32.mrb[0].mxu0
    %v880 = vadd.f32 %v806, %v879
    %v881 = vpop.f32.mrb[0].mxu0
    %882 = vmatprep.mubr.f32.mxu0 %v736
    %883 = vmatmul.mubr.f32.gmra.mrb[0].mxu0 %v735
    %v884 = vpop.f32.mrb[0].mxu0
    %v885 = vadd.f32 %v806, %v884
    %v886 = vpop.f32.mrb[0].mxu0
    %887 = vmatprep.mubr.f32.mxu0 %v739
    %888 = vmatmul.mubr.f32.gmra.mrb[0].mxu0 %v738
    %v889 = vpop.f32.mrb[0].mxu0
    %v890 = vadd.f32 %v806, %v889
    %v891 = vpop.f32.mrb[0].mxu0
    %892 = vmatprep.mubr.f32.mxu0 %v742
    %893 = vmatmul.mubr.f32.gmra.mrb[0].mxu0 %v741
    %v894 = vpop.f32.mrb[0].mxu0
    %v895 = vadd.f32 %v806, %v894
    %v896 = vpop.f32.mrb[0].mxu0
    %897 = vmatprep.mubr.f32.mxu0 %v745
    %898 = vmatmul.mubr.f32.gmra.mrb[0].mxu0 %v744
    %v899 = vpop.f32.mrb[0].mxu0
    %v900 = vadd.f32 %v806, %v899
    %v901 = vpop.f32.mrb[0].mxu0
    %902 = vmatprep.mubr.f32.mxu0 %v748
    %903 = vmatmul.mubr.f32.gmra.mrb[0].mxu0 %v747
    %v904 = vpop.f32.mrb[0].mxu0
    %v905 = vadd.f32 %v806, %v904
    %v906 = vpop.f32.mrb[0].mxu0
    %907 = vmatprep.mubr.f32.mxu0 %v751
    %908 = vmatmul.mubr.f32.gmra.mrb[0].mxu0 %v750
    %v909 = vpop.f32.mrb[0].mxu0
    %v910 = vadd.f32 %v806, %v909
    %v911 = vpop.f32.mrb[0].mxu0
    %912 = vdwg.mxu0
    %913 = vmatprep.subr.mxu0 0.0
    %914 = vmatpush1.msra.mxu0 %v785
    %915 = vmatprep.subr.mxu0 0.0
    %916 = vmatpush1.msra.mxu0 %v786
    %917 = vmatprep.subr.mxu0 0.0
    %918 = vmatpush1.msra.mxu0 %v787
    %919 = vmatprep.subr.mxu0 0.0
    %920 = vmatpush1.msra.mxu0 %v788
    %921 = vmatprep.subr.mxu0 0.0
    %922 = vmatpush1.msra.mxu0 %v789
    %923 = vmatprep.subr.mxu0 0.0
    %924 = vmatpush1.msra.mxu0 %v790
    %925 = vmatprep.subr.mxu0 0.0
    %926 = vmatpush1.msra.mxu0 %v791
    %927 = vmatprep.subr.mxu0 0.0
    %928 = vmatpush1.msra.mxu0 %v792
    %929 = vmatprep.subr.mxu0 0.0
    %930 = vmatpush1.msra.mxu0 %v793
    %931 = vmatprep.subr.mxu0 0.0
    %932 = vmatpush1.msra.mxu0 %v794
    %933 = vmatprep.subr.mxu0 0.0
    %934 = vmatpush1.msra.mxu0 %v795
    %935 = vmatprep.subr.mxu0 0.0
    %936 = vmatpush1.msra.mxu0 %v796
    %937 = vmatprep.subr.mxu0 0.0
    %938 = vmatpush1.msra.mxu0 %v797
    %939 = vmatprep.subr.mxu0 0.0
    %940 = vmatpush1.msra.mxu0 %v798
    %941 = vmatprep.subr.mxu0 0.0
    %942 = vmatpush1.msra.mxu0 %v799
    %943 = vmatprep.subr.mxu0 0.0
    %944 = vmatpush1.msra.mxu0 %v800
    %945 = vmatprep.subr.mxu0 0.0
    %946 = vmatpush1.msra.mxu0 0.0
    %947 = vmatprep.subr.mxu0 0.0
    %948 = vmatpush1.msra.mxu0 0.0
    %949 = vmatprep.subr.mxu0 0.0
    %950 = vmatpush1.msra.mxu0 0.0
    %951 = vmatprep.subr.mxu0 0.0
    %952 = vmatpush1.msra.mxu0 0.0
    %953 = vmatprep.subr.mxu0 0.0
    %954 = vmatpush1.msra.mxu0 0.0
    %955 = vmatprep.subr.mxu0 0.0
    %956 = vmatpush1.msra.mxu0 0.0
    %957 = vmatprep.subr.mxu0 0.0
    %958 = vmatpush1.msra.mxu0 0.0
    %959 = vmatprep.subr.mxu0 0.0
    %960 = vmatpush1.msra.mxu0 0.0
    %961 = vmatprep.subr.mxu0 0.0
    %962 = vmatpush1.msra.mxu0 0.0
    %963 = vmatprep.subr.mxu0 0.0
    %964 = vmatpush1.msra.mxu0 0.0
    %965 = vmatprep.subr.mxu0 0.0
    %966 = vmatpush1.msra.mxu0 0.0
    %967 = vmatprep.subr.mxu0 0.0
    %968 = vmatpush1.msra.mxu0 0.0
    %969 = vmatprep.subr.mxu0 0.0
    %970 = vmatpush1.msra.mxu0 0.0
    %971 = vmatprep.subr.mxu0 0.0
    %972 = vmatpush1.msra.mxu0 0.0
    %973 = vmatprep.subr.mxu0 0.0
    %974 = vmatpush1.msra.mxu0 0.0
    %975 = vmatprep.subr.mxu0 0.0
    %976 = vmatpush1.msra.mxu0 0.0
    %977 = vmatprep.mubr.f32.mxu0 0.0
    %978 = vmatmul.mubr.f32.gmra.mrb[0].mxu0 %v731
    %v979 = vpop.f32.mrb[0].mxu0
    %v980 = vadd.f32 %v875, %v979
    %v981 = vpop.f32.mrb[0].mxu0
    %982 = vmatprep.mubr.f32.mxu0 0.0
    %983 = vmatmul.mubr.f32.gmra.mrb[0].mxu0 %v734
    %v984 = vpop.f32.mrb[0].mxu0
    %v985 = vadd.f32 %v880, %v984
    %v986 = vpop.f32.mrb[0].mxu0
    %987 = vmatprep.mubr.f32.mxu0 0.0
    %988 = vmatmul.mubr.f32.gmra.mrb[0].mxu0 %v737
    %v989 = vpop.f32.mrb[0].mxu0
    %v990 = vadd.f32 %v885, %v989
    %v991 = vpop.f32.mrb[0].mxu0
    %992 = vmatprep.mubr.f32.mxu0 0.0
    %993 = vmatmul.mubr.f32.gmra.mrb[0].mxu0 %v740
    %v994 = vpop.f32.mrb[0].mxu0
    %v995 = vadd.f32 %v890, %v994
    %v996 = vpop.f32.mrb[0].mxu0
    %997 = vmatprep.mubr.f32.mxu0 0.0
    %998 = vmatmul.mubr.f32.gmra.mrb[0].mxu0 %v743
    %v999 = vpop.f32.mrb[0].mxu0
    %v1000 = vadd.f32 %v895, %v999
    %v1001 = vpop.f32.mrb[0].mxu0
    %1002 = vmatprep.mubr.f32.mxu0 0.0
    %1003 = vmatmul.mubr.f32.gmra.mrb[0].mxu0 %v746
    %v1004 = vpop.f32.mrb[0].mxu0
    %v1005 = vadd.f32 %v900, %v1004
    %v1006 = vpop.f32.mrb[0].mxu0
    %1007 = vmatprep.mubr.f32.mxu0 0.0
    %1008 = vmatmul.mubr.f32.gmra.mrb[0].mxu0 %v749
    %v1009 = vpop.f32.mrb[0].mxu0
    %v1010 = vadd.f32 %v905, %v1009
    %v1011 = vpop.f32.mrb[0].mxu0
    %1012 = vmatprep.mubr.f32.mxu0 0.0
    %1013 = vmatmul.mubr.f32.gmra.mrb[0].mxu0 %v752
    %v1014 = vpop.f32.mrb[0].mxu0
    %v1015 = vadd.f32 %v910, %v1014
    %v1016 = vpop.f32.mrb[0].mxu0
    %1017 = vdwg.mxu0
    %v1018 = vmax.f32 %v980, 0.0
    %v1019 = vmax.f32 %v985, 0.0
    %v1020 = vmax.f32 %v990, 0.0
    %v1021 = vmax.f32 %v995, 0.0
    %v1022 = vmax.f32 %v1000, 0.0
    %v1023 = vmax.f32 %v1005, 0.0
    %v1024 = vmax.f32 %v1010, 0.0
    %v1025 = vmax.f32 %v1015, 0.0
    %1026 = vst.msk [vmem:[#allocation5] sm:$0xff] %vm566, %v1018
    %1027 = vst.msk [vmem:[#allocation5 + $0x8] sm:$0xff] %vm566, %v1019
    %1028 = vst.msk [vmem:[#allocation5 + $0x10] sm:$0xff] %vm566, %v1020
    %1029 = vst.msk [vmem:[#allocation5 + $0x18] sm:$0xff] %vm566, %v1021
    %1030 = vst.msk [vmem:[#allocation5 + $0x20] sm:$0xff] %vm566, %v1022
    %1031 = vst.msk [vmem:[#allocation5 + $0x28] sm:$0xff] %vm566, %v1023
    %1032 = vst.msk [vmem:[#allocation5 + $0x30] sm:$0xff] %vm566, %v1024
    %1033 = vst.msk [vmem:[#allocation5 + $0x38] sm:$0xff] %vm566, %v1025
    %v1034 = vld [vmem:[#allocation5] ss:$2 sm:$0xff]
    %s1035 = scalar_lea.vmem [#allocation5], 16
    %v1036 = vld [vmem:[%s1035] ss:$2 sm:$0xff]
    %s1037 = scalar_lea.vmem [#allocation5], 32
    %v1038 = vld [vmem:[%s1037] ss:$2 sm:$0xff]
    %s1039 = scalar_lea.vmem [#allocation5], 48
    %v1040 = vld [vmem:[%s1039] ss:$2 sm:$0xff]
    %s1041 = scalar_lea.vmem [#allocation5], 1
    %v1042 = vld [vmem:[%s1041] ss:$2 sm:$0xff]
    %s1043 = scalar_lea.vmem [#allocation5], 17
    %v1044 = vld [vmem:[%s1043] ss:$2 sm:$0xff]
    %s1045 = scalar_lea.vmem [#allocation5], 33
    %v1046 = vld [vmem:[%s1045] ss:$2 sm:$0xff]
    %s1047 = scalar_lea.vmem [#allocation5], 49
    %v1048 = vld [vmem:[%s1047] ss:$2 sm:$0xff]
    %v1049 = vmax.f32 %v1034, %v1042
    %v1050 = vmax.f32 %v1036, %v1044
    %v1051 = vmax.f32 %v1038, %v1046
    %v1052 = vmax.f32 %v1040, %v1048
    %1053 = vst.msk [vmem:[#allocation6] sm:$0xff] %vm566, %v1049
    %vm1054 = vcmask 816128
    %1055 = vst.msk [vmem:[#allocation6 + $0x18] sm:$0x3f] %vm1054, %v1050
    %v1058 = vrot.slane %v1049, 1
    %v1059 = vrot.slane %v1050, 1
    %v1060 = vsel %vm637, %v1058, %v1059
    %1063 = vst.msk [vmem:[#allocation6 + $0x8] sm:$0xff] %vm566, %v1060
    %1064 = vst.msk [vmem:[#allocation6 + $0x20] sm:$0x3f] %vm1054, %v1059
    %v1065 = vrot.slane %v1049, 2
    %v1066 = vrot.slane %v1050, 2
    %v1067 = vsel %vm655, %v1065, %v1066
    %1070 = vst.msk [vmem:[#allocation6 + $0x10] sm:$0xff] %vm566, %v1067
    %1071 = vst.msk [vmem:[#allocation6 + $0x28] sm:$0x3f] %vm1054, %v1066
    %v1074 = vrot.slane %v1051, 2
    %v1075 = vrot.slane %v1052, 2
    %v1076 = vsel %vm655, %v1074, %v1075
    %vm1080 = vcmask 818182
    %1081 = vst.msk [vmem:[#allocation6 + $0x18] sm:$0xc0] %vm1080, %v1074
    %1082 = vst.msk [vmem:[#allocation6 + $0x30] sm:$0xff] %vm566, %v1076
    %vm1083 = vcmask 814080
    %1084 = vst.msk [vmem:[#allocation6 + $0x48] sm:$0xf] %vm1083, %v1075
    %v1085 = vrot.slane %v1051, 3
    %v1086 = vrot.slane %v1052, 3
    %v1087 = vsel %vm693, %v1085, %v1086
    %1091 = vst.msk [vmem:[#allocation6 + $0x20] sm:$0xc0] %vm1080, %v1085
    %1092 = vst.msk [vmem:[#allocation6 + $0x38] sm:$0xff] %vm566, %v1087
    %1093 = vst.msk [vmem:[#allocation6 + $0x50] sm:$0xf] %vm1083, %v1086
    %v1094 = vrot.slane %v1051, 4
    %v1095 = vrot.slane %v1052, 4
    %v1096 = vsel %vm711, %v1094, %v1095
    %1100 = vst.msk [vmem:[#allocation6 + $0x28] sm:$0xc0] %vm1080, %v1094
    %1101 = vst.msk [vmem:[#allocation6 + $0x40] sm:$0xff] %vm566, %v1096
    %1102 = vst.msk [vmem:[#allocation6 + $0x58] sm:$0xf] %vm1083, %v1095
    %v1103 = vld [vmem:[#allocation6] sm:$0xff]
    %v1104 = vld [vmem:[#allocation6 + $0x8] sm:$0xff]
    %v1105 = vld [vmem:[#allocation6 + $0x10] sm:$0xff]
    %v1106 = vld [vmem:[#allocation6 + $0x18] sm:$0xff]
    %v1107 = vld [vmem:[#allocation6 + $0x20] sm:$0xff]
    %v1108 = vld [vmem:[#allocation6 + $0x28] sm:$0xff]
    %v1109 = vld [vmem:[#allocation6 + $0x30] sm:$0xff]
    %v1110 = vld [vmem:[#allocation6 + $0x38] sm:$0xff]
    %v1111 = vld [vmem:[#allocation6 + $0x40] sm:$0xff]
    %v1112 = vld [vmem:[#allocation6 + $0x48] sm:$0xf]
    %v1113 = vld [vmem:[#allocation6 + $0x50] sm:$0xf]
    %v1114 = vld [vmem:[#allocation6 + $0x58] sm:$0xf]
    %v1115 = vld [vmem:[%s5] sm:$0xff]
    %v1116 = vld [vmem:[%s5 + $0x8] sm:$0xff]
    %v1117 = vld [vmem:[%s5 + $0x10] sm:$0xff]
    %v1118 = vld [vmem:[%s5 + $0x18] sm:$0xff]
    %v1119 = vld [vmem:[%s5 + $0x20] sm:$0xff]
    %v1120 = vld [vmem:[%s5 + $0x28] sm:$0xff]
    %v1121 = vld [vmem:[%s5 + $0x30] sm:$0xff]
    %v1122 = vld [vmem:[%s5 + $0x38] sm:$0xff]
    %v1123 = vld [vmem:[%s5 + $0x40] sm:$0xff]
    %v1124 = vld [vmem:[%s5 + $0x48] sm:$0xff]
    %v1125 = vld [vmem:[%s5 + $0x50] sm:$0xff]
    %v1126 = vld [vmem:[%s5 + $0x58] sm:$0xff]
    %v1127 = vld [vmem:[%s5 + $0x60] sm:$0xff]
    %v1128 = vld [vmem:[%s5 + $0x68] sm:$0xff]
    %v1129 = vld [vmem:[%s5 + $0x70] sm:$0xff]
    %v1130 = vld [vmem:[%s5 + $0x78] sm:$0xff]
    %v1131 = vld [vmem:[%s5 + $0x80] sm:$0xff]
    %v1132 = vld [vmem:[%s5 + $0x88] sm:$0xff]
    %v1133 = vld [vmem:[%s5 + $0x90] sm:$0xff]
    %v1134 = vld [vmem:[%s5 + $0x98] sm:$0xff]
    %v1135 = vld [vmem:[%s5 + $0xa0] sm:$0xff]
    %v1136 = vld [vmem:[%s5 + $0xa8] sm:$0xff]
    %v1137 = vld [vmem:[%s5 + $0xb0] sm:$0xff]
    %v1138 = vld [vmem:[%s5 + $0xb8] sm:$0xff]
    %v1139 = vld [vmem:[%s5 + $0xc0] sm:$0xff]
    %v1140 = vld [vmem:[%s5 + $0xc8] sm:$0xff]
    %v1141 = vld [vmem:[%s5 + $0xd0] sm:$0xff]
    %v1142 = vld [vmem:[%s5 + $0xd8] sm:$0xff]
    %v1143 = vld [vmem:[%s5 + $0xe0] sm:$0xff]
    %v1144 = vld [vmem:[%s5 + $0xe8] sm:$0xff]
    %v1145 = vld [vmem:[%s5 + $0xf0] sm:$0xff]
    %v1146 = vld [vmem:[%s5 + $0xf8] sm:$0xff]
    %v1147 = vld [vmem:[%s5 + $0x100] sm:$0xff]
    %v1148 = vld [vmem:[%s5 + $0x108] sm:$0xff]
    %v1149 = vld [vmem:[%s5 + $0x110] sm:$0xff]
    %v1150 = vld [vmem:[%s5 + $0x118] sm:$0xff]
    %v1151 = vld [vmem:[%s5 + $0x120] sm:$0xff]
    %v1152 = vld [vmem:[%s5 + $0x128] sm:$0xff]
    %v1153 = vld [vmem:[%s5 + $0x130] sm:$0xff]
    %v1154 = vld [vmem:[%s5 + $0x138] sm:$0xff]
    %v1155 = vld [vmem:[%s5 + $0x140] sm:$0xff]
    %v1156 = vld [vmem:[%s5 + $0x148] sm:$0xff]
    %v1157 = vld [vmem:[%s5 + $0x150] sm:$0xff]
    %v1158 = vld [vmem:[%s5 + $0x158] sm:$0xff]
    %v1159 = vld [vmem:[%s5 + $0x160] sm:$0xff]
    %v1160 = vld [vmem:[%s5 + $0x168] sm:$0xff]
    %v1161 = vld [vmem:[%s5 + $0x170] sm:$0xff]
    %v1162 = vld [vmem:[%s5 + $0x178] sm:$0xff]
    %v1163 = vld [vmem:[%s6] sm:$0x1]
    %v1165 = vlaneseq
    %v1166 = vshrl.u32 %v1165, 7
    %v1167 = vsub.s32 0, %v1166
    %v1168 = vrot.slane %v1163, %v1167
    %1170 = vmatprep.subr.mxu0 0.0
    %1171 = vmatpush1.msra.mxu0 %v1115
    %1172 = vmatprep.subr.mxu0 0.0
    %1173 = vmatpush1.msra.mxu0 %v1116
    %1174 = vmatprep.subr.mxu0 0.0
    %1175 = vmatpush1.msra.mxu0 %v1117
    %1176 = vmatprep.subr.mxu0 0.0
    %1177 = vmatpush1.msra.mxu0 %v1118
    %1178 = vmatprep.subr.mxu0 0.0
    %1179 = vmatpush1.msra.mxu0 %v1119
    %1180 = vmatprep.subr.mxu0 0.0
    %1181 = vmatpush1.msra.mxu0 %v1120
    %1182 = vmatprep.subr.mxu0 0.0
    %1183 = vmatpush1.msra.mxu0 %v1121
    %1184 = vmatprep.subr.mxu0 0.0
    %1185 = vmatpush1.msra.mxu0 %v1122
    %1186 = vmatprep.subr.mxu0 0.0
    %1187 = vmatpush1.msra.mxu0 %v1123
    %1188 = vmatprep.subr.mxu0 0.0
    %1189 = vmatpush1.msra.mxu0 %v1124
    %1190 = vmatprep.subr.mxu0 0.0
    %1191 = vmatpush1.msra.mxu0 %v1125
    %1192 = vmatprep.subr.mxu0 0.0
    %1193 = vmatpush1.msra.mxu0 %v1126
    %1194 = vmatprep.subr.mxu0 0.0
    %1195 = vmatpush1.msra.mxu0 %v1127
    %1196 = vmatprep.subr.mxu0 0.0
    %1197 = vmatpush1.msra.mxu0 %v1128
    %1198 = vmatprep.subr.mxu0 0.0
    %1199 = vmatpush1.msra.mxu0 %v1129
    %1200 = vmatprep.subr.mxu0 0.0
    %1201 = vmatpush1.msra.mxu0 %v1130
    %1202 = vmatprep.subr.mxu0 0.0
    %1203 = vmatpush1.msra.mxu0 %v1131
    %1204 = vmatprep.subr.mxu0 0.0
    %1205 = vmatpush1.msra.mxu0 %v1132
    %1206 = vmatprep.subr.mxu0 0.0
    %1207 = vmatpush1.msra.mxu0 %v1133
    %1208 = vmatprep.subr.mxu0 0.0
    %1209 = vmatpush1.msra.mxu0 %v1134
    %1210 = vmatprep.subr.mxu0 0.0
    %1211 = vmatpush1.msra.mxu0 %v1135
    %1212 = vmatprep.subr.mxu0 0.0
    %1213 = vmatpush1.msra.mxu0 %v1136
    %1214 = vmatprep.subr.mxu0 0.0
    %1215 = vmatpush1.msra.mxu0 %v1137
    %1216 = vmatprep.subr.mxu0 0.0
    %1217 = vmatpush1.msra.mxu0 %v1138
    %1218 = vmatprep.subr.mxu0 0.0
    %1219 = vmatpush1.msra.mxu0 %v1139
    %1220 = vmatprep.subr.mxu0 0.0
    %1221 = vmatpush1.msra.mxu0 %v1140
    %1222 = vmatprep.subr.mxu0 0.0
    %1223 = vmatpush1.msra.mxu0 %v1141
    %1224 = vmatprep.subr.mxu0 0.0
    %1225 = vmatpush1.msra.mxu0 %v1142
    %1226 = vmatprep.subr.mxu0 0.0
    %1227 = vmatpush1.msra.mxu0 %v1143
    %1228 = vmatprep.subr.mxu0 0.0
    %1229 = vmatpush1.msra.mxu0 %v1144
    %1230 = vmatprep.subr.mxu0 0.0
    %1231 = vmatpush1.msra.mxu0 %v1145
    %1232 = vmatprep.subr.mxu0 0.0
    %1233 = vmatpush1.msra.mxu0 %v1146
    %1234 = vmatprep.mubr.f32.mxu0 %v1104
    %1235 = vmatmul.mubr.f32.gmra.mrb[0].mxu0 %v1103
    %v1236 = vpop.f32.mrb[0].mxu0
    %v1237 = vadd.f32 %v1168, %v1236
    %v1238 = vpop.f32.mrb[0].mxu0
    %1239 = vmatprep.mubr.f32.mxu0 %v1107
    %1240 = vmatmul.mubr.f32.gmra.mrb[0].mxu0 %v1106
    %v1241 = vpop.f32.mrb[0].mxu0
    %v1242 = vadd.f32 %v1168, %v1241
    %v1243 = vpop.f32.mrb[0].mxu0
    %1244 = vmatprep.mubr.f32.mxu0 %v1110
    %1245 = vmatmul.mubr.f32.gmra.mrb[0].mxu0 %v1109
    %v1246 = vpop.f32.mrb[0].mxu0
    %v1247 = vadd.f32 %v1168, %v1246
    %v1248 = vpop.f32.mrb[0].mxu0
    %1249 = vmatprep.mubr.f32.mxu0 %v1113
    %1250 = vmatmul.mubr.f32.gmra.mrb[0].mxu0 %v1112
    %v1251 = vpop.f32.mrb[0].mxu0
    %v1252 = vadd.f32 %v1168, %v1251
    %v1253 = vpop.f32.mrb[0].mxu0
    %1254 = vdwg.mxu0
    %1255 = vmatprep.subr.mxu0 0.0
    %1256 = vmatpush1.msra.mxu0 %v1147
    %1257 = vmatprep.subr.mxu0 0.0
    %1258 = vmatpush1.msra.mxu0 %v1148
    %1259 = vmatprep.subr.mxu0 0.0
    %1260 = vmatpush1.msra.mxu0 %v1149
    %1261 = vmatprep.subr.mxu0 0.0
    %1262 = vmatpush1.msra.mxu0 %v1150
    %1263 = vmatprep.subr.mxu0 0.0
    %1264 = vmatpush1.msra.mxu0 %v1151
    %1265 = vmatprep.subr.mxu0 0.0
    %1266 = vmatpush1.msra.mxu0 %v1152
    %1267 = vmatprep.subr.mxu0 0.0
    %1268 = vmatpush1.msra.mxu0 %v1153
    %1269 = vmatprep.subr.mxu0 0.0
    %1270 = vmatpush1.msra.mxu0 %v1154
    %1271 = vmatprep.subr.mxu0 0.0
    %1272 = vmatpush1.msra.mxu0 %v1155
    %1273 = vmatprep.subr.mxu0 0.0
    %1274 = vmatpush1.msra.mxu0 %v1156
    %1275 = vmatprep.subr.mxu0 0.0
    %1276 = vmatpush1.msra.mxu0 %v1157
    %1277 = vmatprep.subr.mxu0 0.0
    %1278 = vmatpush1.msra.mxu0 %v1158
    %1279 = vmatprep.subr.mxu0 0.0
    %1280 = vmatpush1.msra.mxu0 %v1159
    %1281 = vmatprep.subr.mxu0 0.0
    %1282 = vmatpush1.msra.mxu0 %v1160
    %1283 = vmatprep.subr.mxu0 0.0
    %1284 = vmatpush1.msra.mxu0 %v1161
    %1285 = vmatprep.subr.mxu0 0.0
    %1286 = vmatpush1.msra.mxu0 %v1162
    %1287 = vmatprep.subr.mxu0 0.0
    %1288 = vmatpush1.msra.mxu0 0.0
    %1289 = vmatprep.subr.mxu0 0.0
    %1290 = vmatpush1.msra.mxu0 0.0
    %1291 = vmatprep.subr.mxu0 0.0
    %1292 = vmatpush1.msra.mxu0 0.0
    %1293 = vmatprep.subr.mxu0 0.0
    %1294 = vmatpush1.msra.mxu0 0.0
    %1295 = vmatprep.subr.mxu0 0.0
    %1296 = vmatpush1.msra.mxu0 0.0
    %1297 = vmatprep.subr.mxu0 0.0
    %1298 = vmatpush1.msra.mxu0 0.0
    %1299 = vmatprep.subr.mxu0 0.0
    %1300 = vmatpush1.msra.mxu0 0.0
    %1301 = vmatprep.subr.mxu0 0.0
    %1302 = vmatpush1.msra.mxu0 0.0
    %1303 = vmatprep.subr.mxu0 0.0
    %1304 = vmatpush1.msra.mxu0 0.0
    %1305 = vmatprep.subr.mxu0 0.0
    %1306 = vmatpush1.msra.mxu0 0.0
    %1307 = vmatprep.subr.mxu0 0.0
    %1308 = vmatpush1.msra.mxu0 0.0
    %1309 = vmatprep.subr.mxu0 0.0
    %1310 = vmatpush1.msra.mxu0 0.0
    %1311 = vmatprep.subr.mxu0 0.0
    %1312 = vmatpush1.msra.mxu0 0.0
    %1313 = vmatprep.subr.mxu0 0.0
    %1314 = vmatpush1.msra.mxu0 0.0
    %1315 = vmatprep.subr.mxu0 0.0
    %1316 = vmatpush1.msra.mxu0 0.0
    %1317 = vmatprep.subr.mxu0 0.0
    %1318 = vmatpush1.msra.mxu0 0.0
    %1319 = vmatprep.mubr.f32.mxu0 0.0
    %1320 = vmatmul.mubr.f32.gmra.mrb[0].mxu0 %v1105
    %v1321 = vpop.f32.mrb[0].mxu0
    %v1322 = vadd.f32 %v1237, %v1321
    %v1323 = vpop.f32.mrb[0].mxu0
    %1324 = vmatprep.mubr.f32.mxu0 0.0
    %1325 = vmatmul.mubr.f32.gmra.mrb[0].mxu0 %v1108
    %v1326 = vpop.f32.mrb[0].mxu0
    %v1327 = vadd.f32 %v1242, %v1326
    %v1328 = vpop.f32.mrb[0].mxu0
    %1329 = vmatprep.mubr.f32.mxu0 0.0
    %1330 = vmatmul.mubr.f32.gmra.mrb[0].mxu0 %v1111
    %v1331 = vpop.f32.mrb[0].mxu0
    %v1332 = vadd.f32 %v1247, %v1331
    %v1333 = vpop.f32.mrb[0].mxu0
    %1334 = vmatprep.mubr.f32.mxu0 0.0
    %1335 = vmatmul.mubr.f32.gmra.mrb[0].mxu0 %v1114
    %v1336 = vpop.f32.mrb[0].mxu0
    %v1337 = vadd.f32 %v1252, %v1336
    %v1338 = vpop.f32.mrb[0].mxu0
    %1339 = vdwg.mxu0
    %v1340 = vmax.f32 %v1322, 0.0
    %v1341 = vmax.f32 %v1327, 0.0
    %v1342 = vmax.f32 %v1332, 0.0
    %v1343 = vmax.f32 %v1337, 0.0
    %1344 = vst.msk [vmem:[#allocation7] sm:$0xff] %vm566, %v1340
    %1345 = vst.msk [vmem:[#allocation7 + $0x8] sm:$0xff] %vm566, %v1341
    %1346 = vst.msk [vmem:[#allocation7 + $0x10] sm:$0xff] %vm566, %v1342
    %1347 = vst.msk [vmem:[#allocation7 + $0x18] sm:$0xf] %vm1083, %v1343
    %v1348 = vld [vmem:[#allocation7] ss:$2 sm:$0xff]
    %s1349 = scalar_lea.vmem [#allocation7], 16
    %v1350 = vld [vmem:[%s1349] ss:$2 sm:$0x3f]
    %s1351 = scalar_lea.vmem [#allocation7], 1
    %v1352 = vld [vmem:[%s1351] ss:$2 sm:$0xff]
    %s1353 = scalar_lea.vmem [#allocation7], 17
    %v1354 = vld [vmem:[%s1353] ss:$2 sm:$0x3f]
    %v1355 = vmax.f32 %v1348, %v1352
    %v1356 = vmax.f32 %v1350, %v1354
    %v1358 = vrot.slane %v1355, 6
    %vm1360 = vcmask 1040384
    %v1361 = vsel %vm1360, %v1355, %v1358
    %vm1362 = vcmask 812032
    %1363 = vst.msk [vmem:[#allocation8] sm:$0x3] %vm1362, %v1361
    %v1364 = vrot.slane %v1355, 1
    %v1367 = vrot.slane %v1356, 7
    %v1369 = vsel %vm1360, %v1364, %v1367
    %1370 = vst.msk [vmem:[#allocation8 + $0x2] sm:$0x3] %vm1362, %v1369
    %v1371 = vrot.slane %v1355, 2
    %v1373 = vsel %vm1360, %v1371, %v1356
    %1374 = vst.msk [vmem:[#allocation8 + $0x4] sm:$0x3] %vm1362, %v1373
    %v1375 = vrot.slane %v1355, 3
    %v1377 = vrot.slane %v1356, 1
    %v1379 = vsel %vm1360, %v1375, %v1377
    %1380 = vst.msk [vmem:[#allocation8 + $0x6] sm:$0x3] %vm1362, %v1379
    %v1381 = vrot.slane %v1355, 4
    %v1383 = vrot.slane %v1356, 2
    %v1385 = vsel %vm1360, %v1381, %v1383
    %1386 = vst.msk [vmem:[#allocation8 + $0x8] sm:$0x3] %vm1362, %v1385
    %v1387 = vrot.slane %v1355, 5
    %v1389 = vrot.slane %v1356, 3
    %v1391 = vsel %vm1360, %v1387, %v1389
    %1392 = vst.msk [vmem:[#allocation8 + $0xa] sm:$0x3] %vm1362, %v1391
    %v1393 = vrot.slane %v1356, 4
    %v1395 = vsel %vm1360, %v1358, %v1393
    %1396 = vst.msk [vmem:[#allocation8 + $0xc] sm:$0x3] %vm1362, %v1395
    %v1397 = vld [vmem:[#allocation8] sm:$0xff]
    %v1398 = vld [vmem:[#allocation8 + $0x8] sm:$0x3f]
    %v1399 = vld [vmem:[%s7] sm:$0xff]
    %v1400 = vld [vmem:[%s7 + $0x8] sm:$0xff]
    %v1401 = vld [vmem:[%s7 + $0x10] sm:$0xff]
    %v1402 = vld [vmem:[%s7 + $0x18] sm:$0xff]
    %v1403 = vld [vmem:[%s7 + $0x20] sm:$0xff]
    %v1404 = vld [vmem:[%s7 + $0x28] sm:$0xff]
    %v1405 = vld [vmem:[%s7 + $0x30] sm:$0xff]
    %v1406 = vld [vmem:[%s7 + $0x38] sm:$0xff]
    %v1407 = vld [vmem:[%s7 + $0x40] sm:$0xff]
    %v1408 = vld [vmem:[%s7 + $0x48] sm:$0xff]
    %v1409 = vld [vmem:[%s7 + $0x50] sm:$0xff]
    %v1410 = vld [vmem:[%s7 + $0x58] sm:$0xff]
    %v1411 = vld [vmem:[%s7 + $0x60] sm:$0xff]
    %v1412 = vld [vmem:[%s7 + $0x68] sm:$0xff]
    %v1413 = vld [vmem:[%s7 + $0x70] sm:$0xff]
    %v1414 = vld [vmem:[%s7 + $0x78] sm:$0xff]
    %v1415 = vld [vmem:[%s7 + $0x80] sm:$0xff]
    %v1416 = vld [vmem:[%s7 + $0x88] sm:$0xff]
    %v1417 = vld [vmem:[%s7 + $0x90] sm:$0xff]
    %v1418 = vld [vmem:[%s7 + $0x98] sm:$0xff]
    %v1419 = vld [vmem:[%s7 + $0xa0] sm:$0xff]
    %v1420 = vld [vmem:[%s7 + $0xa8] sm:$0xff]
    %v1421 = vld [vmem:[%s7 + $0xb0] sm:$0xff]
    %v1422 = vld [vmem:[%s7 + $0xb8] sm:$0xff]
    %v1423 = vld [vmem:[%s7 + $0xc0] sm:$0xff]
    %v1424 = vld [vmem:[%s7 + $0xc8] sm:$0xff]
    %v1425 = vld [vmem:[%s7 + $0xd0] sm:$0xff]
    %v1426 = vld [vmem:[%s7 + $0xd8] sm:$0xff]
    %v1427 = vld [vmem:[%s7 + $0xe0] sm:$0xff]
    %v1428 = vld [vmem:[%s7 + $0xe8] sm:$0xff]
    %v1429 = vld [vmem:[%s7 + $0xf0] sm:$0xff]
    %v1430 = vld [vmem:[%s7 + $0xf8] sm:$0xff]
    %v1431 = vld [vmem:[%s7 + $0x100] sm:$0xff]
    %v1432 = vld [vmem:[%s7 + $0x108] sm:$0xff]
    %v1433 = vld [vmem:[%s7 + $0x110] sm:$0xff]
    %v1434 = vld [vmem:[%s7 + $0x118] sm:$0xff]
    %v1435 = vld [vmem:[%s7 + $0x120] sm:$0xff]
    %v1436 = vld [vmem:[%s7 + $0x128] sm:$0xff]
    %v1437 = vld [vmem:[%s7 + $0x130] sm:$0xff]
    %v1438 = vld [vmem:[%s7 + $0x138] sm:$0xff]
    %v1439 = vld [vmem:[%s7 + $0x140] sm:$0xff]
    %v1440 = vld [vmem:[%s7 + $0x148] sm:$0xff]
    %v1441 = vld [vmem:[%s7 + $0x150] sm:$0xff]
    %v1442 = vld [vmem:[%s7 + $0x158] sm:$0xff]
    %v1443 = vld [vmem:[%s7 + $0x160] sm:$0xff]
    %v1444 = vld [vmem:[%s7 + $0x168] sm:$0xff]
    %v1445 = vld [vmem:[%s7 + $0x170] sm:$0xff]
    %v1446 = vld [vmem:[%s7 + $0x178] sm:$0xff]
    %v1447 = vld [vmem:[%s7 + $0x180] sm:$0xff]
    %v1448 = vld [vmem:[%s7 + $0x188] sm:$0xff]
    %v1449 = vld [vmem:[%s7 + $0x190] sm:$0xff]
    %v1450 = vld [vmem:[%s7 + $0x198] sm:$0xff]
    %v1451 = vld [vmem:[%s7 + $0x1a0] sm:$0xff]
    %v1452 = vld [vmem:[%s7 + $0x1a8] sm:$0xff]
    %v1453 = vld [vmem:[%s7 + $0x1b0] sm:$0xff]
    %v1454 = vld [vmem:[%s7 + $0x1b8] sm:$0xff]
    %v1455 = vld [vmem:[%s7 + $0x1c0] sm:$0xff]
    %v1456 = vld [vmem:[%s7 + $0x1c8] sm:$0xff]
    %v1457 = vld [vmem:[%s7 + $0x1d0] sm:$0xff]
    %v1458 = vld [vmem:[%s7 + $0x1d8] sm:$0xff]
    %v1459 = vld [vmem:[%s7 + $0x1e0] sm:$0xff]
    %v1460 = vld [vmem:[%s7 + $0x1e8] sm:$0xff]
    %v1461 = vld [vmem:[%s7 + $0x1f0] sm:$0xff]
    %v1462 = vld [vmem:[%s7 + $0x1f8] sm:$0xff]
    %v1463 = vld [vmem:[%s7 + $0x200] sm:$0xff]
    %v1464 = vld [vmem:[%s7 + $0x208] sm:$0xff]
    %v1465 = vld [vmem:[%s7 + $0x210] sm:$0xff]
    %v1466 = vld [vmem:[%s7 + $0x218] sm:$0xff]
    %v1467 = vld [vmem:[%s7 + $0x220] sm:$0xff]
    %v1468 = vld [vmem:[%s7 + $0x228] sm:$0xff]
    %v1469 = vld [vmem:[%s7 + $0x230] sm:$0xff]
    %v1470 = vld [vmem:[%s7 + $0x238] sm:$0xff]
    %v1471 = vld [vmem:[%s7 + $0x240] sm:$0xff]
    %v1472 = vld [vmem:[%s7 + $0x248] sm:$0xff]
    %v1473 = vld [vmem:[%s7 + $0x250] sm:$0xff]
    %v1474 = vld [vmem:[%s7 + $0x258] sm:$0xff]
    %v1475 = vld [vmem:[%s7 + $0x260] sm:$0xff]
    %v1476 = vld [vmem:[%s7 + $0x268] sm:$0xff]
    %v1477 = vld [vmem:[%s7 + $0x270] sm:$0xff]
    %v1478 = vld [vmem:[%s7 + $0x278] sm:$0xff]
    %v1479 = vld [vmem:[%s7 + $0x280] sm:$0xff]
    %v1480 = vld [vmem:[%s7 + $0x288] sm:$0xff]
    %v1481 = vld [vmem:[%s7 + $0x290] sm:$0xff]
    %v1482 = vld [vmem:[%s7 + $0x298] sm:$0xff]
    %v1483 = vld [vmem:[%s7 + $0x2a0] sm:$0xff]
    %v1484 = vld [vmem:[%s7 + $0x2a8] sm:$0xff]
    %v1485 = vld [vmem:[%s7 + $0x2b0] sm:$0xff]
    %v1486 = vld [vmem:[%s7 + $0x2b8] sm:$0xff]
    %v1487 = vld [vmem:[%s7 + $0x2c0] sm:$0xff]
    %v1488 = vld [vmem:[%s7 + $0x2c8] sm:$0xff]
    %v1489 = vld [vmem:[%s7 + $0x2d0] sm:$0xff]
    %v1490 = vld [vmem:[%s7 + $0x2d8] sm:$0xff]
    %v1491 = vld [vmem:[%s7 + $0x2e0] sm:$0xff]
    %v1492 = vld [vmem:[%s7 + $0x2e8] sm:$0xff]
    %v1493 = vld [vmem:[%s7 + $0x2f0] sm:$0xff]
    %v1494 = vld [vmem:[%s7 + $0x2f8] sm:$0xff]
    %v1495 = vld [vmem:[%s7 + $0x300] sm:$0xff]
    %v1496 = vld [vmem:[%s7 + $0x308] sm:$0xff]
    %v1497 = vld [vmem:[%s7 + $0x310] sm:$0xff]
    %v1498 = vld [vmem:[%s7 + $0x318] sm:$0xff]
    %v1499 = vld [vmem:[%s7 + $0x320] sm:$0xff]
    %v1500 = vld [vmem:[%s7 + $0x328] sm:$0xff]
    %v1501 = vld [vmem:[%s7 + $0x330] sm:$0xff]
    %v1502 = vld [vmem:[%s7 + $0x338] sm:$0xff]
    %v1503 = vld [vmem:[%s7 + $0x340] sm:$0xff]
    %v1504 = vld [vmem:[%s7 + $0x348] sm:$0xff]
    %v1505 = vld [vmem:[%s7 + $0x350] sm:$0xff]
    %v1506 = vld [vmem:[%s7 + $0x358] sm:$0xff]
    %v1507 = vld [vmem:[%s7 + $0x360] sm:$0xff]
    %v1508 = vld [vmem:[%s7 + $0x368] sm:$0xff]
    %v1509 = vld [vmem:[%s7 + $0x370] sm:$0xff]
    %v1510 = vld [vmem:[%s7 + $0x378] sm:$0xff]
    %v1511 = vld [vmem:[%s7 + $0x380] sm:$0xff]
    %v1512 = vld [vmem:[%s7 + $0x388] sm:$0xff]
    %v1513 = vld [vmem:[%s7 + $0x390] sm:$0xff]
    %v1514 = vld [vmem:[%s7 + $0x398] sm:$0xff]
    %v1515 = vld [vmem:[%s7 + $0x3a0] sm:$0xff]
    %v1516 = vld [vmem:[%s7 + $0x3a8] sm:$0xff]
    %v1517 = vld [vmem:[%s7 + $0x3b0] sm:$0xff]
    %v1518 = vld [vmem:[%s7 + $0x3b8] sm:$0xff]
    %v1519 = vld [vmem:[%s7 + $0x3c0] sm:$0xff]
    %v1520 = vld [vmem:[%s7 + $0x3c8] sm:$0xff]
    %v1521 = vld [vmem:[%s7 + $0x3d0] sm:$0xff]
    %v1522 = vld [vmem:[%s7 + $0x3d8] sm:$0xff]
    %v1523 = vld [vmem:[%s7 + $0x3e0] sm:$0xff]
    %v1524 = vld [vmem:[%s7 + $0x3e8] sm:$0xff]
    %v1525 = vld [vmem:[%s7 + $0x3f0] sm:$0xff]
    %v1526 = vld [vmem:[%s7 + $0x3f8] sm:$0xff]
    %v1527 = vld [vmem:[%s7 + $0x400] sm:$0xff]
    %v1528 = vld [vmem:[%s7 + $0x408] sm:$0xff]
    %v1529 = vld [vmem:[%s7 + $0x410] sm:$0xff]
    %v1530 = vld [vmem:[%s7 + $0x418] sm:$0xff]
    %v1531 = vld [vmem:[%s7 + $0x420] sm:$0xff]
    %v1532 = vld [vmem:[%s7 + $0x428] sm:$0xff]
    %v1533 = vld [vmem:[%s7 + $0x430] sm:$0xff]
    %v1534 = vld [vmem:[%s7 + $0x438] sm:$0xff]
    %v1535 = vld [vmem:[%s7 + $0x440] sm:$0xff]
    %v1536 = vld [vmem:[%s7 + $0x448] sm:$0xff]
    %v1537 = vld [vmem:[%s7 + $0x450] sm:$0xff]
    %v1538 = vld [vmem:[%s7 + $0x458] sm:$0xff]
    %v1539 = vld [vmem:[%s7 + $0x460] sm:$0xff]
    %v1540 = vld [vmem:[%s7 + $0x468] sm:$0xff]
    %v1541 = vld [vmem:[%s7 + $0x470] sm:$0xff]
    %v1542 = vld [vmem:[%s7 + $0x478] sm:$0xff]
    %v1543 = vld [vmem:[%s7 + $0x480] sm:$0xff]
    %v1544 = vld [vmem:[%s7 + $0x488] sm:$0xff]
    %v1545 = vld [vmem:[%s7 + $0x490] sm:$0xff]
    %v1546 = vld [vmem:[%s7 + $0x498] sm:$0xff]
    %v1547 = vld [vmem:[%s7 + $0x4a0] sm:$0xff]
    %v1548 = vld [vmem:[%s7 + $0x4a8] sm:$0xff]
    %v1549 = vld [vmem:[%s7 + $0x4b0] sm:$0xff]
    %v1550 = vld [vmem:[%s7 + $0x4b8] sm:$0xff]
    %v1551 = vld [vmem:[%s7 + $0x4c0] sm:$0xff]
    %v1552 = vld [vmem:[%s7 + $0x4c8] sm:$0xff]
    %v1553 = vld [vmem:[%s7 + $0x4d0] sm:$0xff]
    %v1554 = vld [vmem:[%s7 + $0x4d8] sm:$0xff]
    %v1555 = vld [vmem:[%s7 + $0x4e0] sm:$0xff]
    %v1556 = vld [vmem:[%s7 + $0x4e8] sm:$0xff]
    %v1557 = vld [vmem:[%s7 + $0x4f0] sm:$0xff]
    %v1558 = vld [vmem:[%s7 + $0x4f8] sm:$0xff]
    %v1559 = vld [vmem:[%s7 + $0x500] sm:$0xff]
    %v1560 = vld [vmem:[%s7 + $0x508] sm:$0xff]
    %v1561 = vld [vmem:[%s7 + $0x510] sm:$0xff]
    %v1562 = vld [vmem:[%s7 + $0x518] sm:$0xff]
    %v1563 = vld [vmem:[%s7 + $0x520] sm:$0xff]
    %v1564 = vld [vmem:[%s7 + $0x528] sm:$0xff]
    %v1565 = vld [vmem:[%s7 + $0x530] sm:$0xff]
    %v1566 = vld [vmem:[%s7 + $0x538] sm:$0xff]
    %v1567 = vld [vmem:[%s7 + $0x540] sm:$0xff]
    %v1568 = vld [vmem:[%s7 + $0x548] sm:$0xff]
    %v1569 = vld [vmem:[%s7 + $0x550] sm:$0xff]
    %v1570 = vld [vmem:[%s7 + $0x558] sm:$0xff]
    %v1571 = vld [vmem:[%s7 + $0x560] sm:$0xff]
    %v1572 = vld [vmem:[%s7 + $0x568] sm:$0xff]
    %v1573 = vld [vmem:[%s7 + $0x570] sm:$0xff]
    %v1574 = vld [vmem:[%s7 + $0x578] sm:$0xff]
    %v1575 = vld [vmem:[%s7 + $0x580] sm:$0xff]
    %v1576 = vld [vmem:[%s7 + $0x588] sm:$0xff]
    %v1577 = vld [vmem:[%s7 + $0x590] sm:$0xff]
    %v1578 = vld [vmem:[%s7 + $0x598] sm:$0xff]
    %v1579 = vld [vmem:[%s7 + $0x5a0] sm:$0xff]
    %v1580 = vld [vmem:[%s7 + $0x5a8] sm:$0xff]
    %v1581 = vld [vmem:[%s7 + $0x5b0] sm:$0xff]
    %v1582 = vld [vmem:[%s7 + $0x5b8] sm:$0xff]
    %v1583 = vld [vmem:[%s7 + $0x5c0] sm:$0xff]
    %v1584 = vld [vmem:[%s7 + $0x5c8] sm:$0xff]
    %v1585 = vld [vmem:[%s7 + $0x5d0] sm:$0xff]
    %v1586 = vld [vmem:[%s7 + $0x5d8] sm:$0xff]
    %v1587 = vld [vmem:[%s7 + $0x5e0] sm:$0xff]
    %v1588 = vld [vmem:[%s7 + $0x5e8] sm:$0xff]
    %v1589 = vld [vmem:[%s7 + $0x5f0] sm:$0xff]
    %v1590 = vld [vmem:[%s7 + $0x5f8] sm:$0xff]
    %v1591 = vld [vmem:[%s7 + $0x600] sm:$0xff]
    %v1592 = vld [vmem:[%s7 + $0x608] sm:$0xff]
    %v1593 = vld [vmem:[%s7 + $0x610] sm:$0xff]
    %v1594 = vld [vmem:[%s7 + $0x618] sm:$0xff]
    %v1595 = vld [vmem:[%s7 + $0x620] sm:$0xff]
    %v1596 = vld [vmem:[%s7 + $0x628] sm:$0xff]
    %v1597 = vld [vmem:[%s7 + $0x630] sm:$0xff]
    %v1598 = vld [vmem:[%s7 + $0x638] sm:$0xff]
    %v1599 = vld [vmem:[%s7 + $0x640] sm:$0xff]
    %v1600 = vld [vmem:[%s7 + $0x648] sm:$0xff]
    %v1601 = vld [vmem:[%s7 + $0x650] sm:$0xff]
    %v1602 = vld [vmem:[%s7 + $0x658] sm:$0xff]
    %v1603 = vld [vmem:[%s7 + $0x660] sm:$0xff]
    %v1604 = vld [vmem:[%s7 + $0x668] sm:$0xff]
    %v1605 = vld [vmem:[%s7 + $0x670] sm:$0xff]
    %v1606 = vld [vmem:[%s7 + $0x678] sm:$0xff]
    %v1607 = vld [vmem:[%s7 + $0x680] sm:$0xff]
    %v1608 = vld [vmem:[%s7 + $0x688] sm:$0xff]
    %v1609 = vld [vmem:[%s7 + $0x690] sm:$0xff]
    %v1610 = vld [vmem:[%s7 + $0x698] sm:$0xff]
    %v1611 = vld [vmem:[%s7 + $0x6a0] sm:$0xff]
    %v1612 = vld [vmem:[%s7 + $0x6a8] sm:$0xff]
    %v1613 = vld [vmem:[%s7 + $0x6b0] sm:$0xff]
    %v1614 = vld [vmem:[%s7 + $0x6b8] sm:$0xff]
    %v1615 = vld [vmem:[%s7 + $0x6c0] sm:$0xff]
    %v1616 = vld [vmem:[%s7 + $0x6c8] sm:$0xff]
    %v1617 = vld [vmem:[%s7 + $0x6d0] sm:$0xff]
    %v1618 = vld [vmem:[%s7 + $0x6d8] sm:$0xff]
    %v1619 = vld [vmem:[%s7 + $0x6e0] sm:$0xff]
    %v1620 = vld [vmem:[%s7 + $0x6e8] sm:$0xff]
    %v1621 = vld [vmem:[%s7 + $0x6f0] sm:$0xff]
    %v1622 = vld [vmem:[%s7 + $0x6f8] sm:$0xff]
    %v1623 = vld [vmem:[%s7 + $0x700] sm:$0xff]
    %v1624 = vld [vmem:[%s7 + $0x708] sm:$0xff]
    %v1625 = vld [vmem:[%s7 + $0x710] sm:$0xff]
    %v1626 = vld [vmem:[%s7 + $0x718] sm:$0xff]
    %v1627 = vld [vmem:[%s7 + $0x720] sm:$0xff]
    %v1628 = vld [vmem:[%s7 + $0x728] sm:$0xff]
    %v1629 = vld [vmem:[%s7 + $0x730] sm:$0xff]
    %v1630 = vld [vmem:[%s7 + $0x738] sm:$0xff]
    %v1631 = vld [vmem:[%s7 + $0x740] sm:$0xff]
    %v1632 = vld [vmem:[%s7 + $0x748] sm:$0xff]
    %v1633 = vld [vmem:[%s7 + $0x750] sm:$0xff]
    %v1634 = vld [vmem:[%s7 + $0x758] sm:$0xff]
    %v1635 = vld [vmem:[%s7 + $0x760] sm:$0xff]
    %v1636 = vld [vmem:[%s7 + $0x768] sm:$0xff]
    %v1637 = vld [vmem:[%s7 + $0x770] sm:$0xff]
    %v1638 = vld [vmem:[%s7 + $0x778] sm:$0xff]
    %v1639 = vld [vmem:[%s7 + $0x780] sm:$0xff]
    %v1640 = vld [vmem:[%s7 + $0x788] sm:$0xff]
    %v1641 = vld [vmem:[%s7 + $0x790] sm:$0xff]
    %v1642 = vld [vmem:[%s7 + $0x798] sm:$0xff]
    %v1643 = vld [vmem:[%s7 + $0x7a0] sm:$0xff]
    %v1644 = vld [vmem:[%s7 + $0x7a8] sm:$0xff]
    %v1645 = vld [vmem:[%s7 + $0x7b0] sm:$0xff]
    %v1646 = vld [vmem:[%s7 + $0x7b8] sm:$0xff]
    %v1647 = vld [vmem:[%s7 + $0x7c0] sm:$0xff]
    %v1648 = vld [vmem:[%s7 + $0x7c8] sm:$0xff]
    %v1649 = vld [vmem:[%s7 + $0x7d0] sm:$0xff]
    %v1650 = vld [vmem:[%s7 + $0x7d8] sm:$0xff]
    %v1651 = vld [vmem:[%s7 + $0x7e0] sm:$0xff]
    %v1652 = vld [vmem:[%s7 + $0x7e8] sm:$0xff]
    %v1653 = vld [vmem:[%s7 + $0x7f0] sm:$0xff]
    %v1654 = vld [vmem:[%s7 + $0x7f8] sm:$0xff]
    %v1655 = vld [vmem:[%s7 + $0x800] sm:$0xff]
    %v1656 = vld [vmem:[%s7 + $0x808] sm:$0xff]
    %v1657 = vld [vmem:[%s7 + $0x810] sm:$0xff]
    %v1658 = vld [vmem:[%s7 + $0x818] sm:$0xff]
    %v1659 = vld [vmem:[%s7 + $0x820] sm:$0xff]
    %v1660 = vld [vmem:[%s7 + $0x828] sm:$0xff]
    %v1661 = vld [vmem:[%s7 + $0x830] sm:$0xff]
    %v1662 = vld [vmem:[%s7 + $0x838] sm:$0xff]
    %v1663 = vld [vmem:[%s7 + $0x840] sm:$0xff]
    %v1664 = vld [vmem:[%s7 + $0x848] sm:$0xff]
    %v1665 = vld [vmem:[%s7 + $0x850] sm:$0xff]
    %v1666 = vld [vmem:[%s7 + $0x858] sm:$0xff]
    %v1667 = vld [vmem:[%s7 + $0x860] sm:$0xff]
    %v1668 = vld [vmem:[%s7 + $0x868] sm:$0xff]
    %v1669 = vld [vmem:[%s7 + $0x870] sm:$0xff]
    %v1670 = vld [vmem:[%s7 + $0x878] sm:$0xff]
    %v1671 = vld [vmem:[%s7 + $0x880] sm:$0xff]
    %v1672 = vld [vmem:[%s7 + $0x888] sm:$0xff]
    %v1673 = vld [vmem:[%s7 + $0x890] sm:$0xff]
    %v1674 = vld [vmem:[%s7 + $0x898] sm:$0xff]
    %v1675 = vld [vmem:[%s7 + $0x8a0] sm:$0xff]
    %v1676 = vld [vmem:[%s7 + $0x8a8] sm:$0xff]
    %v1677 = vld [vmem:[%s7 + $0x8b0] sm:$0xff]
    %v1678 = vld [vmem:[%s7 + $0x8b8] sm:$0xff]
    %v1679 = vld [vmem:[%s7 + $0x8c0] sm:$0xff]
    %v1680 = vld [vmem:[%s7 + $0x8c8] sm:$0xff]
    %v1681 = vld [vmem:[%s7 + $0x8d0] sm:$0xff]
    %v1682 = vld [vmem:[%s7 + $0x8d8] sm:$0xff]
    %v1683 = vld [vmem:[%s7 + $0x8e0] sm:$0xff]
    %v1684 = vld [vmem:[%s7 + $0x8e8] sm:$0xff]
    %v1685 = vld [vmem:[%s7 + $0x8f0] sm:$0xff]
    %v1686 = vld [vmem:[%s7 + $0x8f8] sm:$0xff]
    %v1687 = vld [vmem:[%s7 + $0x900] sm:$0xff]
    %v1688 = vld [vmem:[%s7 + $0x908] sm:$0xff]
    %v1689 = vld [vmem:[%s7 + $0x910] sm:$0xff]
    %v1690 = vld [vmem:[%s7 + $0x918] sm:$0xff]
    %v1691 = vld [vmem:[%s7 + $0x920] sm:$0xff]
    %v1692 = vld [vmem:[%s7 + $0x928] sm:$0xff]
    %v1693 = vld [vmem:[%s7 + $0x930] sm:$0xff]
    %v1694 = vld [vmem:[%s7 + $0x938] sm:$0xff]
    %v1695 = vld [vmem:[%s7 + $0x940] sm:$0xff]
    %v1696 = vld [vmem:[%s7 + $0x948] sm:$0xff]
    %v1697 = vld [vmem:[%s7 + $0x950] sm:$0xff]
    %v1698 = vld [vmem:[%s7 + $0x958] sm:$0xff]
    %v1699 = vld [vmem:[%s7 + $0x960] sm:$0xff]
    %v1700 = vld [vmem:[%s7 + $0x968] sm:$0xff]
    %v1701 = vld [vmem:[%s7 + $0x970] sm:$0xff]
    %v1702 = vld [vmem:[%s7 + $0x978] sm:$0xff]
    %v1703 = vld [vmem:[%s7 + $0x980] sm:$0xff]
    %v1704 = vld [vmem:[%s7 + $0x988] sm:$0xff]
    %v1705 = vld [vmem:[%s7 + $0x990] sm:$0xff]
    %v1706 = vld [vmem:[%s7 + $0x998] sm:$0xff]
    %v1707 = vld [vmem:[%s7 + $0x9a0] sm:$0xff]
    %v1708 = vld [vmem:[%s7 + $0x9a8] sm:$0xff]
    %v1709 = vld [vmem:[%s7 + $0x9b0] sm:$0xff]
    %v1710 = vld [vmem:[%s7 + $0x9b8] sm:$0xff]
    %v1711 = vld [vmem:[%s7 + $0x9c0] sm:$0xff]
    %v1712 = vld [vmem:[%s7 + $0x9c8] sm:$0xff]
    %v1713 = vld [vmem:[%s7 + $0x9d0] sm:$0xff]
    %v1714 = vld [vmem:[%s7 + $0x9d8] sm:$0xff]
    %v1715 = vld [vmem:[%s7 + $0x9e0] sm:$0xff]
    %v1716 = vld [vmem:[%s7 + $0x9e8] sm:$0xff]
    %v1717 = vld [vmem:[%s7 + $0x9f0] sm:$0xff]
    %v1718 = vld [vmem:[%s7 + $0x9f8] sm:$0xff]
    %v1719 = vld [vmem:[%s7 + $0xa00] sm:$0xff]
    %v1720 = vld [vmem:[%s7 + $0xa08] sm:$0xff]
    %v1721 = vld [vmem:[%s7 + $0xa10] sm:$0xff]
    %v1722 = vld [vmem:[%s7 + $0xa18] sm:$0xff]
    %v1723 = vld [vmem:[%s7 + $0xa20] sm:$0xff]
    %v1724 = vld [vmem:[%s7 + $0xa28] sm:$0xff]
    %v1725 = vld [vmem:[%s7 + $0xa30] sm:$0xff]
    %v1726 = vld [vmem:[%s7 + $0xa38] sm:$0xff]
    %v1727 = vld [vmem:[%s7 + $0xa40] sm:$0xff]
    %v1728 = vld [vmem:[%s7 + $0xa48] sm:$0xff]
    %v1729 = vld [vmem:[%s7 + $0xa50] sm:$0xff]
    %v1730 = vld [vmem:[%s7 + $0xa58] sm:$0xff]
    %v1731 = vld [vmem:[%s7 + $0xa60] sm:$0xff]
    %v1732 = vld [vmem:[%s7 + $0xa68] sm:$0xff]
    %v1733 = vld [vmem:[%s7 + $0xa70] sm:$0xff]
    %v1734 = vld [vmem:[%s7 + $0xa78] sm:$0xff]
    %v1735 = vld [vmem:[%s8] sm:$0x7]
    %v1737 = vlaneseq
    %v1738 = vshrl.u32 %v1737, 7
    %v1739 = vsub.s32 0, %v1738
    %v1740 = vrot.slane %v1735, %v1739
    %v1741 = vlaneseq
    %v1742 = vshrl.u32 %v1741, 7
    %v1743 = vsub.s32 1, %v1742
    %v1744 = vrot.slane %v1735, %v1743
    %v1745 = vlaneseq
    %v1746 = vshrl.u32 %v1745, 7
    %v1747 = vsub.s32 2, %v1746
    %v1748 = vrot.slane %v1735, %v1747
    %v1754 = vcombine.high %v1397, %v1397
    %v1756 = vunpack.c.l.s4 1983009808
    %v1757 = vunpack.c.0.s8 %v1756
    %v1758 = vlaneseq
    %v1759 = vshrl.u32 %v1758, 7
    %v1760 = vsub.s32 %v1757, %v1759
    %v1761 = vrot.slane %v1397, %v1760
    %v1763 = vunpack.c.l.s4 1983009808
    %v1764 = vunpack.c.0.s8 %v1763
    %v1765 = vlaneseq
    %v1766 = vshrl.u32 %v1765, 7
    %v1767 = vsub.s32 %v1764, %v1766
    %v1768 = vrot.slane %v1754, %v1767
    %v1769 = vcombine.high %v1761, %v1761
    %v1770 = vcombine.high %v1768, %v1768
    %v1771 = vcombine.high %v1398, %v1398
    %v1773 = vunpack.c.l.s4 1983009808
    %v1774 = vunpack.c.0.s8 %v1773
    %v1775 = vlaneseq
    %v1776 = vshrl.u32 %v1775, 7
    %v1777 = vsub.s32 %v1774, %v1776
    %v1778 = vrot.slane %v1398, %v1777
    %v1780 = vunpack.c.l.s4 1983009808
    %v1781 = vunpack.c.0.s8 %v1780
    %v1782 = vlaneseq
    %v1783 = vshrl.u32 %v1782, 7
    %v1784 = vsub.s32 %v1781, %v1783
    %v1785 = vrot.slane %v1771, %v1784
    %v1786 = vcombine.high %v1778, %v1778
    %1794 = vmatprep.subr.mxu0 %v1400
    %1795 = vmatpush1.msra.mxu0 %v1399
    %1796 = vmatprep.subr.mxu0 %v1403
    %1797 = vmatpush1.msra.mxu0 %v1402
    %1798 = vmatprep.subr.mxu0 %v1406
    %1799 = vmatpush1.msra.mxu0 %v1405
    %1800 = vmatprep.subr.mxu0 %v1409
    %1801 = vmatpush1.msra.mxu0 %v1408
    %1802 = vmatprep.subr.mxu0 %v1412
    %1803 = vmatpush1.msra.mxu0 %v1411
    %1804 = vmatprep.subr.mxu0 %v1415
    %1805 = vmatpush1.msra.mxu0 %v1414
    %1806 = vmatprep.subr.mxu0 %v1418
    %1807 = vmatpush1.msra.mxu0 %v1417
    %1808 = vmatprep.subr.mxu0 %v1421
    %1809 = vmatpush1.msra.mxu0 %v1420
    %1810 = vmatprep.subr.mxu0 %v1424
    %1811 = vmatpush1.msra.mxu0 %v1423
    %1812 = vmatprep.subr.mxu0 %v1427
    %1813 = vmatpush1.msra.mxu0 %v1426
    %1814 = vmatprep.subr.mxu0 %v1430
    %1815 = vmatpush1.msra.mxu0 %v1429
    %1816 = vmatprep.subr.mxu0 %v1433
    %1817 = vmatpush1.msra.mxu0 %v1432
    %1818 = vmatprep.subr.mxu0 %v1436
    %1819 = vmatpush1.msra.mxu0 %v1435
    %1820 = vmatprep.subr.mxu0 %v1439
    %1821 = vmatpush1.msra.mxu0 %v1438
    %1822 = vmatprep.subr.mxu0 %v1442
    %1823 = vmatpush1.msra.mxu0 %v1441
    %1824 = vmatprep.subr.mxu0 %v1445
    %1825 = vmatpush1.msra.mxu0 %v1444
    %1826 = vmatprep.subr.mxu0 %v1448
    %1827 = vmatpush1.msra.mxu0 %v1447
    %1828 = vmatprep.subr.mxu0 %v1451
    %1829 = vmatpush1.msra.mxu0 %v1450
    %1830 = vmatprep.subr.mxu0 %v1454
    %1831 = vmatpush1.msra.mxu0 %v1453
    %1832 = vmatprep.subr.mxu0 %v1457
    %1833 = vmatpush1.msra.mxu0 %v1456
    %1834 = vmatprep.subr.mxu0 %v1460
    %1835 = vmatpush1.msra.mxu0 %v1459
    %1836 = vmatprep.subr.mxu0 %v1463
    %1837 = vmatpush1.msra.mxu0 %v1462
    %1838 = vmatprep.subr.mxu0 %v1466
    %1839 = vmatpush1.msra.mxu0 %v1465
    %1840 = vmatprep.subr.mxu0 %v1469
    %1841 = vmatpush1.msra.mxu0 %v1468
    %1842 = vmatprep.subr.mxu0 %v1472
    %1843 = vmatpush1.msra.mxu0 %v1471
    %1844 = vmatprep.subr.mxu0 %v1475
    %1845 = vmatpush1.msra.mxu0 %v1474
    %1846 = vmatprep.subr.mxu0 %v1478
    %1847 = vmatpush1.msra.mxu0 %v1477
    %1848 = vmatprep.subr.mxu0 %v1481
    %1849 = vmatpush1.msra.mxu0 %v1480
    %1850 = vmatprep.subr.mxu0 %v1484
    %1851 = vmatpush1.msra.mxu0 %v1483
    %1852 = vmatprep.subr.mxu0 %v1487
    %1853 = vmatpush1.msra.mxu0 %v1486
    %1854 = vmatprep.subr.mxu0 %v1490
    %1855 = vmatpush1.msra.mxu0 %v1489
    %1856 = vmatprep.subr.mxu0 %v1493
    %1857 = vmatpush1.msra.mxu0 %v1492
    %1858 = vmatprep.mubr.f32.mxu0 %v1769
    %1859 = vmatmul.mubr.f32.gmra.mrb[0].mxu0 %v1761
    %v1860 = vpop.f32.mrb[0].mxu0
    %v1861 = vadd.f32 %v1740, %v1860
    %v1862 = vpop.f32.mrb[0].mxu0
    %v1863 = vadd.f32 %v1744, %v1862
    %1864 = vdwg.mxu0
    %1865 = vmatprep.subr.mxu0 %v1496
    %1866 = vmatpush1.msra.mxu0 %v1495
    %1867 = vmatprep.subr.mxu0 %v1499
    %1868 = vmatpush1.msra.mxu0 %v1498
    %1869 = vmatprep.subr.mxu0 %v1502
    %1870 = vmatpush1.msra.mxu0 %v1501
    %1871 = vmatprep.subr.mxu0 %v1505
    %1872 = vmatpush1.msra.mxu0 %v1504
    %1873 = vmatprep.subr.mxu0 %v1508
    %1874 = vmatpush1.msra.mxu0 %v1507
    %1875 = vmatprep.subr.mxu0 %v1511
    %1876 = vmatpush1.msra.mxu0 %v1510
    %1877 = vmatprep.subr.mxu0 %v1514
    %1878 = vmatpush1.msra.mxu0 %v1513
    %1879 = vmatprep.subr.mxu0 %v1517
    %1880 = vmatpush1.msra.mxu0 %v1516
    %1881 = vmatprep.subr.mxu0 %v1520
    %1882 = vmatpush1.msra.mxu0 %v1519
    %1883 = vmatprep.subr.mxu0 %v1523
    %1884 = vmatpush1.msra.mxu0 %v1522
    %1885 = vmatprep.subr.mxu0 %v1526
    %1886 = vmatpush1.msra.mxu0 %v1525
    %1887 = vmatprep.subr.mxu0 %v1529
    %1888 = vmatpush1.msra.mxu0 %v1528
    %1889 = vmatprep.subr.mxu0 %v1532
    %1890 = vmatpush1.msra.mxu0 %v1531
    %1891 = vmatprep.subr.mxu0 %v1535
    %1892 = vmatpush1.msra.mxu0 %v1534
    %1893 = vmatprep.subr.mxu0 %v1538
    %1894 = vmatpush1.msra.mxu0 %v1537
    %1895 = vmatprep.subr.mxu0 %v1541
    %1896 = vmatpush1.msra.mxu0 %v1540
    %1897 = vmatprep.subr.mxu0 %v1544
    %1898 = vmatpush1.msra.mxu0 %v1543
    %1899 = vmatprep.subr.mxu0 %v1547
    %1900 = vmatpush1.msra.mxu0 %v1546
    %1901 = vmatprep.subr.mxu0 %v1550
    %1902 = vmatpush1.msra.mxu0 %v1549
    %1903 = vmatprep.subr.mxu0 %v1553
    %1904 = vmatpush1.msra.mxu0 %v1552
    %1905 = vmatprep.subr.mxu0 %v1556
    %1906 = vmatpush1.msra.mxu0 %v1555
    %1907 = vmatprep.subr.mxu0 %v1559
    %1908 = vmatpush1.msra.mxu0 %v1558
    %1909 = vmatprep.subr.mxu0 %v1562
    %1910 = vmatpush1.msra.mxu0 %v1561
    %1911 = vmatprep.subr.mxu0 %v1565
    %1912 = vmatpush1.msra.mxu0 %v1564
    %1913 = vmatprep.subr.mxu0 %v1568
    %1914 = vmatpush1.msra.mxu0 %v1567
    %1915 = vmatprep.subr.mxu0 %v1571
    %1916 = vmatpush1.msra.mxu0 %v1570
    %1917 = vmatprep.subr.mxu0 %v1574
    %1918 = vmatpush1.msra.mxu0 %v1573
    %1919 = vmatprep.subr.mxu0 %v1577
    %1920 = vmatpush1.msra.mxu0 %v1576
    %1921 = vmatprep.subr.mxu0 %v1580
    %1922 = vmatpush1.msra.mxu0 %v1579
    %1923 = vmatprep.subr.mxu0 %v1583
    %1924 = vmatpush1.msra.mxu0 %v1582
    %1925 = vmatprep.subr.mxu0 %v1586
    %1926 = vmatpush1.msra.mxu0 %v1585
    %1927 = vmatprep.subr.mxu0 %v1589
    %1928 = vmatpush1.msra.mxu0 %v1588
    %1929 = vmatprep.mubr.f32.mxu0 %v1770
    %1930 = vmatmul.mubr.f32.gmra.mrb[0].mxu0 %v1768
    %v1931 = vpop.f32.mrb[0].mxu0
    %v1932 = vadd.f32 %v1861, %v1931
    %v1933 = vpop.f32.mrb[0].mxu0
    %v1934 = vadd.f32 %v1863, %v1933
    %1935 = vdwg.mxu0
    %1936 = vmatprep.subr.mxu0 %v1592
    %1937 = vmatpush1.msra.mxu0 %v1591
    %1938 = vmatprep.subr.mxu0 %v1595
    %1939 = vmatpush1.msra.mxu0 %v1594
    %1940 = vmatprep.subr.mxu0 %v1598
    %1941 = vmatpush1.msra.mxu0 %v1597
    %1942 = vmatprep.subr.mxu0 %v1601
    %1943 = vmatpush1.msra.mxu0 %v1600
    %1944 = vmatprep.subr.mxu0 %v1604
    %1945 = vmatpush1.msra.mxu0 %v1603
    %1946 = vmatprep.subr.mxu0 %v1607
    %1947 = vmatpush1.msra.mxu0 %v1606
    %1948 = vmatprep.subr.mxu0 %v1610
    %1949 = vmatpush1.msra.mxu0 %v1609
    %1950 = vmatprep.subr.mxu0 %v1613
    %1951 = vmatpush1.msra.mxu0 %v1612
    %1952 = vmatprep.subr.mxu0 %v1616
    %1953 = vmatpush1.msra.mxu0 %v1615
    %1954 = vmatprep.subr.mxu0 %v1619
    %1955 = vmatpush1.msra.mxu0 %v1618
    %1956 = vmatprep.subr.mxu0 %v1622
    %1957 = vmatpush1.msra.mxu0 %v1621
    %1958 = vmatprep.subr.mxu0 %v1625
    %1959 = vmatpush1.msra.mxu0 %v1624
    %1960 = vmatprep.subr.mxu0 %v1628
    %1961 = vmatpush1.msra.mxu0 %v1627
    %1962 = vmatprep.subr.mxu0 %v1631
    %1963 = vmatpush1.msra.mxu0 %v1630
    %1964 = vmatprep.subr.mxu0 %v1634
    %1965 = vmatpush1.msra.mxu0 %v1633
    %1966 = vmatprep.subr.mxu0 %v1637
    %1967 = vmatpush1.msra.mxu0 %v1636
    %1968 = vmatprep.subr.mxu0 %v1640
    %1969 = vmatpush1.msra.mxu0 %v1639
    %1970 = vmatprep.subr.mxu0 %v1643
    %1971 = vmatpush1.msra.mxu0 %v1642
    %1972 = vmatprep.subr.mxu0 %v1646
    %1973 = vmatpush1.msra.mxu0 %v1645
    %1974 = vmatprep.subr.mxu0 %v1649
    %1975 = vmatpush1.msra.mxu0 %v1648
    %1976 = vmatprep.subr.mxu0 %v1652
    %1977 = vmatpush1.msra.mxu0 %v1651
    %1978 = vmatprep.subr.mxu0 %v1655
    %1979 = vmatpush1.msra.mxu0 %v1654
    %1980 = vmatprep.subr.mxu0 %v1658
    %1981 = vmatpush1.msra.mxu0 %v1657
    %1982 = vmatprep.subr.mxu0 %v1661
    %1983 = vmatpush1.msra.mxu0 %v1660
    %1984 = vmatprep.subr.mxu0 %v1664
    %1985 = vmatpush1.msra.mxu0 %v1663
    %1986 = vmatprep.subr.mxu0 %v1667
    %1987 = vmatpush1.msra.mxu0 %v1666
    %1988 = vmatprep.subr.mxu0 %v1670
    %1989 = vmatpush1.msra.mxu0 %v1669
    %1990 = vmatprep.subr.mxu0 %v1673
    %1991 = vmatpush1.msra.mxu0 %v1672
    %1992 = vmatprep.subr.mxu0 %v1676
    %1993 = vmatpush1.msra.mxu0 %v1675
    %1994 = vmatprep.subr.mxu0 %v1679
    %1995 = vmatpush1.msra.mxu0 %v1678
    %1996 = vmatprep.subr.mxu0 %v1682
    %1997 = vmatpush1.msra.mxu0 %v1681
    %1998 = vmatprep.subr.mxu0 %v1685
    %1999 = vmatpush1.msra.mxu0 %v1684
    %2000 = vmatprep.mubr.f32.mxu0 %v1786
    %2001 = vmatmul.mubr.f32.gmra.mrb[0].mxu0 %v1778
    %v2002 = vpop.f32.mrb[0].mxu0
    %v2003 = vadd.f32 %v1932, %v2002
    %v2004 = vpop.f32.mrb[0].mxu0
    %v2005 = vadd.f32 %v1934, %v2004
    %2006 = vdwg.mxu0
    %2007 = vmatprep.subr.mxu0 %v1688
    %2008 = vmatpush1.msra.mxu0 %v1687
    %2009 = vmatprep.subr.mxu0 %v1691
    %2010 = vmatpush1.msra.mxu0 %v1690
    %2011 = vmatprep.subr.mxu0 %v1694
    %2012 = vmatpush1.msra.mxu0 %v1693
    %2013 = vmatprep.subr.mxu0 %v1697
    %2014 = vmatpush1.msra.mxu0 %v1696
    %2015 = vmatprep.subr.mxu0 %v1700
    %2016 = vmatpush1.msra.mxu0 %v1699
    %2017 = vmatprep.subr.mxu0 %v1703
    %2018 = vmatpush1.msra.mxu0 %v1702
    %2019 = vmatprep.subr.mxu0 %v1706
    %2020 = vmatpush1.msra.mxu0 %v1705
    %2021 = vmatprep.subr.mxu0 %v1709
    %2022 = vmatpush1.msra.mxu0 %v1708
    %2023 = vmatprep.subr.mxu0 %v1712
    %2024 = vmatpush1.msra.mxu0 %v1711
    %2025 = vmatprep.subr.mxu0 %v1715
    %2026 = vmatpush1.msra.mxu0 %v1714
    %2027 = vmatprep.subr.mxu0 %v1718
    %2028 = vmatpush1.msra.mxu0 %v1717
    %2029 = vmatprep.subr.mxu0 %v1721
    %2030 = vmatpush1.msra.mxu0 %v1720
    %2031 = vmatprep.subr.mxu0 %v1724
    %2032 = vmatpush1.msra.mxu0 %v1723
    %2033 = vmatprep.subr.mxu0 %v1727
    %2034 = vmatpush1.msra.mxu0 %v1726
    %2035 = vmatprep.subr.mxu0 %v1730
    %2036 = vmatpush1.msra.mxu0 %v1729
    %2037 = vmatprep.subr.mxu0 %v1733
    %2038 = vmatpush1.msra.mxu0 %v1732
    %2039 = vmatprep.subr.mxu0 0.0
    %2040 = vmatpush1.msra.mxu0 0.0
    %2041 = vmatprep.subr.mxu0 0.0
    %2042 = vmatpush1.msra.mxu0 0.0
    %2043 = vmatprep.subr.mxu0 0.0
    %2044 = vmatpush1.msra.mxu0 0.0
    %2045 = vmatprep.subr.mxu0 0.0
    %2046 = vmatpush1.msra.mxu0 0.0
    %2047 = vmatprep.subr.mxu0 0.0
    %2048 = vmatpush1.msra.mxu0 0.0
    %2049 = vmatprep.subr.mxu0 0.0
    %2050 = vmatpush1.msra.mxu0 0.0
    %2051 = vmatprep.subr.mxu0 0.0
    %2052 = vmatpush1.msra.mxu0 0.0
    %2053 = vmatprep.subr.mxu0 0.0
    %2054 = vmatpush1.msra.mxu0 0.0
    %2055 = vmatprep.subr.mxu0 0.0
    %2056 = vmatpush1.msra.mxu0 0.0
    %2057 = vmatprep.subr.mxu0 0.0
    %2058 = vmatpush1.msra.mxu0 0.0
    %2059 = vmatprep.subr.mxu0 0.0
    %2060 = vmatpush1.msra.mxu0 0.0
    %2061 = vmatprep.subr.mxu0 0.0
    %2062 = vmatpush1.msra.mxu0 0.0
    %2063 = vmatprep.subr.mxu0 0.0
    %2064 = vmatpush1.msra.mxu0 0.0
    %2065 = vmatprep.subr.mxu0 0.0
    %2066 = vmatpush1.msra.mxu0 0.0
    %2067 = vmatprep.subr.mxu0 0.0
    %2068 = vmatpush1.msra.mxu0 0.0
    %2069 = vmatprep.subr.mxu0 0.0
    %2070 = vmatpush1.msra.mxu0 0.0
    %2071 = vmatprep.mubr.f32.mxu0 0.0
    %2072 = vmatmul.mubr.f32.gmra.mrb[0].mxu0 %v1785
    %v2073 = vpop.f32.mrb[0].mxu0
    %v2074 = vadd.f32 %v2003, %v2073
    %v2075 = vpop.f32.mrb[0].mxu0
    %v2076 = vadd.f32 %v2005, %v2075
    %2077 = vdwg.mxu0
    %2078 = vmatprep.subr.mxu0 0.0
    %2079 = vmatpush1.msra.mxu0 %v1401
    %2080 = vmatprep.subr.mxu0 0.0
    %2081 = vmatpush1.msra.mxu0 %v1404
    %2082 = vmatprep.subr.mxu0 0.0
    %2083 = vmatpush1.msra.mxu0 %v1407
    %2084 = vmatprep.subr.mxu0 0.0
    %2085 = vmatpush1.msra.mxu0 %v1410
    %2086 = vmatprep.subr.mxu0 0.0
    %2087 = vmatpush1.msra.mxu0 %v1413
    %2088 = vmatprep.subr.mxu0 0.0
    %2089 = vmatpush1.msra.mxu0 %v1416
    %2090 = vmatprep.subr.mxu0 0.0
    %2091 = vmatpush1.msra.mxu0 %v1419
    %2092 = vmatprep.subr.mxu0 0.0
    %2093 = vmatpush1.msra.mxu0 %v1422
    %2094 = vmatprep.subr.mxu0 0.0
    %2095 = vmatpush1.msra.mxu0 %v1425
    %2096 = vmatprep.subr.mxu0 0.0
    %2097 = vmatpush1.msra.mxu0 %v1428
    %2098 = vmatprep.subr.mxu0 0.0
    %2099 = vmatpush1.msra.mxu0 %v1431
    %2100 = vmatprep.subr.mxu0 0.0
    %2101 = vmatpush1.msra.mxu0 %v1434
    %2102 = vmatprep.subr.mxu0 0.0
    %2103 = vmatpush1.msra.mxu0 %v1437
    %2104 = vmatprep.subr.mxu0 0.0
    %2105 = vmatpush1.msra.mxu0 %v1440
    %2106 = vmatprep.subr.mxu0 0.0
    %2107 = vmatpush1.msra.mxu0 %v1443
    %2108 = vmatprep.subr.mxu0 0.0
    %2109 = vmatpush1.msra.mxu0 %v1446
    %2110 = vmatprep.subr.mxu0 0.0
    %2111 = vmatpush1.msra.mxu0 %v1449
    %2112 = vmatprep.subr.mxu0 0.0
    %2113 = vmatpush1.msra.mxu0 %v1452
    %2114 = vmatprep.subr.mxu0 0.0
    %2115 = vmatpush1.msra.mxu0 %v1455
    %2116 = vmatprep.subr.mxu0 0.0
    %2117 = vmatpush1.msra.mxu0 %v1458
    %2118 = vmatprep.subr.mxu0 0.0
    %2119 = vmatpush1.msra.mxu0 %v1461
    %2120 = vmatprep.subr.mxu0 0.0
    %2121 = vmatpush1.msra.mxu0 %v1464
    %2122 = vmatprep.subr.mxu0 0.0
    %2123 = vmatpush1.msra.mxu0 %v1467
    %2124 = vmatprep.subr.mxu0 0.0
    %2125 = vmatpush1.msra.mxu0 %v1470
    %2126 = vmatprep.subr.mxu0 0.0
    %2127 = vmatpush1.msra.mxu0 %v1473
    %2128 = vmatprep.subr.mxu0 0.0
    %2129 = vmatpush1.msra.mxu0 %v1476
    %2130 = vmatprep.subr.mxu0 0.0
    %2131 = vmatpush1.msra.mxu0 %v1479
    %2132 = vmatprep.subr.mxu0 0.0
    %2133 = vmatpush1.msra.mxu0 %v1482
    %2134 = vmatprep.subr.mxu0 0.0
    %2135 = vmatpush1.msra.mxu0 %v1485
    %2136 = vmatprep.subr.mxu0 0.0
    %2137 = vmatpush1.msra.mxu0 %v1488
    %2138 = vmatprep.subr.mxu0 0.0
    %2139 = vmatpush1.msra.mxu0 %v1491
    %2140 = vmatprep.subr.mxu0 0.0
    %2141 = vmatpush1.msra.mxu0 %v1494
    %2142 = vmatprep.mubr.f32.mxu0 %v1769
    %2143 = vmatmul.mubr.f32.gmra.mrb[0].mxu0 %v1761
    %v2144 = vpop.f32.mrb[0].mxu0
    %v2145 = vadd.f32 %v1748, %v2144
    %v2146 = vpop.f32.mrb[0].mxu0
    %2147 = vdwg.mxu0
    %2148 = vmatprep.subr.mxu0 0.0
    %2149 = vmatpush1.msra.mxu0 %v1497
    %2150 = vmatprep.subr.mxu0 0.0
    %2151 = vmatpush1.msra.mxu0 %v1500
    %2152 = vmatprep.subr.mxu0 0.0
    %2153 = vmatpush1.msra.mxu0 %v1503
    %2154 = vmatprep.subr.mxu0 0.0
    %2155 = vmatpush1.msra.mxu0 %v1506
    %2156 = vmatprep.subr.mxu0 0.0
    %2157 = vmatpush1.msra.mxu0 %v1509
    %2158 = vmatprep.subr.mxu0 0.0
    %2159 = vmatpush1.msra.mxu0 %v1512
    %2160 = vmatprep.subr.mxu0 0.0
    %2161 = vmatpush1.msra.mxu0 %v1515
    %2162 = vmatprep.subr.mxu0 0.0
    %2163 = vmatpush1.msra.mxu0 %v1518
    %2164 = vmatprep.subr.mxu0 0.0
    %2165 = vmatpush1.msra.mxu0 %v1521
    %2166 = vmatprep.subr.mxu0 0.0
    %2167 = vmatpush1.msra.mxu0 %v1524
    %2168 = vmatprep.subr.mxu0 0.0
    %2169 = vmatpush1.msra.mxu0 %v1527
    %2170 = vmatprep.subr.mxu0 0.0
    %2171 = vmatpush1.msra.mxu0 %v1530
    %2172 = vmatprep.subr.mxu0 0.0
    %2173 = vmatpush1.msra.mxu0 %v1533
    %2174 = vmatprep.subr.mxu0 0.0
    %2175 = vmatpush1.msra.mxu0 %v1536
    %2176 = vmatprep.subr.mxu0 0.0
    %2177 = vmatpush1.msra.mxu0 %v1539
    %2178 = vmatprep.subr.mxu0 0.0
    %2179 = vmatpush1.msra.mxu0 %v1542
    %2180 = vmatprep.subr.mxu0 0.0
    %2181 = vmatpush1.msra.mxu0 %v1545
    %2182 = vmatprep.subr.mxu0 0.0
    %2183 = vmatpush1.msra.mxu0 %v1548
    %2184 = vmatprep.subr.mxu0 0.0
    %2185 = vmatpush1.msra.mxu0 %v1551
    %2186 = vmatprep.subr.mxu0 0.0
    %2187 = vmatpush1.msra.mxu0 %v1554
    %2188 = vmatprep.subr.mxu0 0.0
    %2189 = vmatpush1.msra.mxu0 %v1557
    %2190 = vmatprep.subr.mxu0 0.0
    %2191 = vmatpush1.msra.mxu0 %v1560
    %2192 = vmatprep.subr.mxu0 0.0
    %2193 = vmatpush1.msra.mxu0 %v1563
    %2194 = vmatprep.subr.mxu0 0.0
    %2195 = vmatpush1.msra.mxu0 %v1566
    %2196 = vmatprep.subr.mxu0 0.0
    %2197 = vmatpush1.msra.mxu0 %v1569
    %2198 = vmatprep.subr.mxu0 0.0
    %2199 = vmatpush1.msra.mxu0 %v1572
    %2200 = vmatprep.subr.mxu0 0.0
    %2201 = vmatpush1.msra.mxu0 %v1575
    %2202 = vmatprep.subr.mxu0 0.0
    %2203 = vmatpush1.msra.mxu0 %v1578
    %2204 = vmatprep.subr.mxu0 0.0
    %2205 = vmatpush1.msra.mxu0 %v1581
    %2206 = vmatprep.subr.mxu0 0.0
    %2207 = vmatpush1.msra.mxu0 %v1584
    %2208 = vmatprep.subr.mxu0 0.0
    %2209 = vmatpush1.msra.mxu0 %v1587
    %2210 = vmatprep.subr.mxu0 0.0
    %2211 = vmatpush1.msra.mxu0 %v1590
    %2212 = vmatprep.mubr.f32.mxu0 %v1770
    %2213 = vmatmul.mubr.f32.gmra.mrb[0].mxu0 %v1768
    %v2214 = vpop.f32.mrb[0].mxu0
    %v2215 = vadd.f32 %v2145, %v2214
    %v2216 = vpop.f32.mrb[0].mxu0
    %2217 = vdwg.mxu0
    %2218 = vmatprep.subr.mxu0 0.0
    %2219 = vmatpush1.msra.mxu0 %v1593
    %2220 = vmatprep.subr.mxu0 0.0
    %2221 = vmatpush1.msra.mxu0 %v1596
    %2222 = vmatprep.subr.mxu0 0.0
    %2223 = vmatpush1.msra.mxu0 %v1599
    %2224 = vmatprep.subr.mxu0 0.0
    %2225 = vmatpush1.msra.mxu0 %v1602
    %2226 = vmatprep.subr.mxu0 0.0
    %2227 = vmatpush1.msra.mxu0 %v1605
    %2228 = vmatprep.subr.mxu0 0.0
    %2229 = vmatpush1.msra.mxu0 %v1608
    %2230 = vmatprep.subr.mxu0 0.0
    %2231 = vmatpush1.msra.mxu0 %v1611
    %2232 = vmatprep.subr.mxu0 0.0
    %2233 = vmatpush1.msra.mxu0 %v1614
    %2234 = vmatprep.subr.mxu0 0.0
    %2235 = vmatpush1.msra.mxu0 %v1617
    %2236 = vmatprep.subr.mxu0 0.0
    %2237 = vmatpush1.msra.mxu0 %v1620
    %2238 = vmatprep.subr.mxu0 0.0
    %2239 = vmatpush1.msra.mxu0 %v1623
    %2240 = vmatprep.subr.mxu0 0.0
    %2241 = vmatpush1.msra.mxu0 %v1626
    %2242 = vmatprep.subr.mxu0 0.0
    %2243 = vmatpush1.msra.mxu0 %v1629
    %2244 = vmatprep.subr.mxu0 0.0
    %2245 = vmatpush1.msra.mxu0 %v1632
    %2246 = vmatprep.subr.mxu0 0.0
    %2247 = vmatpush1.msra.mxu0 %v1635
    %2248 = vmatprep.subr.mxu0 0.0
    %2249 = vmatpush1.msra.mxu0 %v1638
    %2250 = vmatprep.subr.mxu0 0.0
    %2251 = vmatpush1.msra.mxu0 %v1641
    %2252 = vmatprep.subr.mxu0 0.0
    %2253 = vmatpush1.msra.mxu0 %v1644
    %2254 = vmatprep.subr.mxu0 0.0
    %2255 = vmatpush1.msra.mxu0 %v1647
    %2256 = vmatprep.subr.mxu0 0.0
    %2257 = vmatpush1.msra.mxu0 %v1650
    %2258 = vmatprep.subr.mxu0 0.0
    %2259 = vmatpush1.msra.mxu0 %v1653
    %2260 = vmatprep.subr.mxu0 0.0
    %2261 = vmatpush1.msra.mxu0 %v1656
    %2262 = vmatprep.subr.mxu0 0.0
    %2263 = vmatpush1.msra.mxu0 %v1659
    %2264 = vmatprep.subr.mxu0 0.0
    %2265 = vmatpush1.msra.mxu0 %v1662
    %2266 = vmatprep.subr.mxu0 0.0
    %2267 = vmatpush1.msra.mxu0 %v1665
    %2268 = vmatprep.subr.mxu0 0.0
    %2269 = vmatpush1.msra.mxu0 %v1668
    %2270 = vmatprep.subr.mxu0 0.0
    %2271 = vmatpush1.msra.mxu0 %v1671
    %2272 = vmatprep.subr.mxu0 0.0
    %2273 = vmatpush1.msra.mxu0 %v1674
    %2274 = vmatprep.subr.mxu0 0.0
    %2275 = vmatpush1.msra.mxu0 %v1677
    %2276 = vmatprep.subr.mxu0 0.0
    %2277 = vmatpush1.msra.mxu0 %v1680
    %2278 = vmatprep.subr.mxu0 0.0
    %2279 = vmatpush1.msra.mxu0 %v1683
    %2280 = vmatprep.subr.mxu0 0.0
    %2281 = vmatpush1.msra.mxu0 %v1686
    %2282 = vmatprep.mubr.f32.mxu0 %v1786
    %2283 = vmatmul.mubr.f32.gmra.mrb[0].mxu0 %v1778
    %v2284 = vpop.f32.mrb[0].mxu0
    %v2285 = vadd.f32 %v2215, %v2284
    %v2286 = vpop.f32.mrb[0].mxu0
    %2287 = vdwg.mxu0
    %2288 = vmatprep.subr.mxu0 0.0
    %2289 = vmatpush1.msra.mxu0 %v1689
    %2290 = vmatprep.subr.mxu0 0.0
    %2291 = vmatpush1.msra.mxu0 %v1692
    %2292 = vmatprep.subr.mxu0 0.0
    %2293 = vmatpush1.msra.mxu0 %v1695
    %2294 = vmatprep.subr.mxu0 0.0
    %2295 = vmatpush1.msra.mxu0 %v1698
    %2296 = vmatprep.subr.mxu0 0.0
    %2297 = vmatpush1.msra.mxu0 %v1701
    %2298 = vmatprep.subr.mxu0 0.0
    %2299 = vmatpush1.msra.mxu0 %v1704
    %2300 = vmatprep.subr.mxu0 0.0
    %2301 = vmatpush1.msra.mxu0 %v1707
    %2302 = vmatprep.subr.mxu0 0.0
    %2303 = vmatpush1.msra.mxu0 %v1710
    %2304 = vmatprep.subr.mxu0 0.0
    %2305 = vmatpush1.msra.mxu0 %v1713
    %2306 = vmatprep.subr.mxu0 0.0
    %2307 = vmatpush1.msra.mxu0 %v1716
    %2308 = vmatprep.subr.mxu0 0.0
    %2309 = vmatpush1.msra.mxu0 %v1719
    %2310 = vmatprep.subr.mxu0 0.0
    %2311 = vmatpush1.msra.mxu0 %v1722
    %2312 = vmatprep.subr.mxu0 0.0
    %2313 = vmatpush1.msra.mxu0 %v1725
    %2314 = vmatprep.subr.mxu0 0.0
    %2315 = vmatpush1.msra.mxu0 %v1728
    %2316 = vmatprep.subr.mxu0 0.0
    %2317 = vmatpush1.msra.mxu0 %v1731
    %2318 = vmatprep.subr.mxu0 0.0
    %2319 = vmatpush1.msra.mxu0 %v1734
    %2320 = vmatprep.subr.mxu0 0.0
    %2321 = vmatpush1.msra.mxu0 0.0
    %2322 = vmatprep.subr.mxu0 0.0
    %2323 = vmatpush1.msra.mxu0 0.0
    %2324 = vmatprep.subr.mxu0 0.0
    %2325 = vmatpush1.msra.mxu0 0.0
    %2326 = vmatprep.subr.mxu0 0.0
    %2327 = vmatpush1.msra.mxu0 0.0
    %2328 = vmatprep.subr.mxu0 0.0
    %2329 = vmatpush1.msra.mxu0 0.0
    %2330 = vmatprep.subr.mxu0 0.0
    %2331 = vmatpush1.msra.mxu0 0.0
    %2332 = vmatprep.subr.mxu0 0.0
    %2333 = vmatpush1.msra.mxu0 0.0
    %2334 = vmatprep.subr.mxu0 0.0
    %2335 = vmatpush1.msra.mxu0 0.0
    %2336 = vmatprep.subr.mxu0 0.0
    %2337 = vmatpush1.msra.mxu0 0.0
    %2338 = vmatprep.subr.mxu0 0.0
    %2339 = vmatpush1.msra.mxu0 0.0
    %2340 = vmatprep.subr.mxu0 0.0
    %2341 = vmatpush1.msra.mxu0 0.0
    %2342 = vmatprep.subr.mxu0 0.0
    %2343 = vmatpush1.msra.mxu0 0.0
    %2344 = vmatprep.subr.mxu0 0.0
    %2345 = vmatpush1.msra.mxu0 0.0
    %2346 = vmatprep.subr.mxu0 0.0
    %2347 = vmatpush1.msra.mxu0 0.0
    %2348 = vmatprep.subr.mxu0 0.0
    %2349 = vmatpush1.msra.mxu0 0.0
    %2350 = vmatprep.subr.mxu0 0.0
    %2351 = vmatpush1.msra.mxu0 0.0
    %2352 = vmatprep.mubr.f32.mxu0 0.0
    %2353 = vmatmul.mubr.f32.gmra.mrb[0].mxu0 %v1785
    %v2354 = vpop.f32.mrb[0].mxu0
    %v2355 = vadd.f32 %v2285, %v2354
    %v2356 = vpop.f32.mrb[0].mxu0
    %2357 = vdwg.mxu0
    %v2358 = vmax.f32 %v2074, 0.0
    %v2359 = vmax.f32 %v2076, 0.0
    %v2360 = vmax.f32 %v2355, 0.0
    %v2361 = vld [vmem:[%s9] sm:$0xff]
    %v2362 = vld [vmem:[%s9 + $0x8] sm:$0xff]
    %v2363 = vld [vmem:[%s9 + $0x10] sm:$0xff]
    %v2364 = vld [vmem:[%s9 + $0x18] sm:$0xff]
    %v2365 = vld [vmem:[%s9 + $0x20] sm:$0xff]
    %v2366 = vld [vmem:[%s9 + $0x28] sm:$0xff]
    %v2367 = vld [vmem:[%s9 + $0x30] sm:$0xff]
    %v2368 = vld [vmem:[%s9 + $0x38] sm:$0xff]
    %v2369 = vld [vmem:[%s9 + $0x40] sm:$0xff]
    %v2370 = vld [vmem:[%s9 + $0x48] sm:$0xff]
    %v2371 = vld [vmem:[%s9 + $0x50] sm:$0xff]
    %v2372 = vld [vmem:[%s9 + $0x58] sm:$0xff]
    %v2373 = vld [vmem:[%s9 + $0x60] sm:$0xff]
    %v2374 = vld [vmem:[%s9 + $0x68] sm:$0xff]
    %v2375 = vld [vmem:[%s9 + $0x70] sm:$0xff]
    %v2376 = vld [vmem:[%s9 + $0x78] sm:$0xff]
    %v2377 = vld [vmem:[%s9 + $0x80] sm:$0xff]
    %v2378 = vld [vmem:[%s9 + $0x88] sm:$0xff]
    %v2379 = vld [vmem:[%s9 + $0x90] sm:$0xff]
    %v2380 = vld [vmem:[%s9 + $0x98] sm:$0xff]
    %v2381 = vld [vmem:[%s9 + $0xa0] sm:$0xff]
    %v2382 = vld [vmem:[%s9 + $0xa8] sm:$0xff]
    %v2383 = vld [vmem:[%s9 + $0xb0] sm:$0xff]
    %v2384 = vld [vmem:[%s9 + $0xb8] sm:$0xff]
    %v2385 = vld [vmem:[%s9 + $0xc0] sm:$0xff]
    %v2386 = vld [vmem:[%s9 + $0xc8] sm:$0xff]
    %v2387 = vld [vmem:[%s9 + $0xd0] sm:$0xff]
    %v2388 = vld [vmem:[%s9 + $0xd8] sm:$0xff]
    %v2389 = vld [vmem:[%s9 + $0xe0] sm:$0xff]
    %v2390 = vld [vmem:[%s9 + $0xe8] sm:$0xff]
    %v2391 = vld [vmem:[%s9 + $0xf0] sm:$0xff]
    %v2392 = vld [vmem:[%s9 + $0xf8] sm:$0xff]
    %v2393 = vld [vmem:[%s9 + $0x100] sm:$0xff]
    %v2394 = vld [vmem:[%s9 + $0x108] sm:$0xff]
    %v2395 = vld [vmem:[%s9 + $0x110] sm:$0xff]
    %v2396 = vld [vmem:[%s9 + $0x118] sm:$0xff]
    %v2397 = vld [vmem:[%s9 + $0x120] sm:$0xff]
    %v2398 = vld [vmem:[%s9 + $0x128] sm:$0xf]
    %v2399 = vld [vmem:[%s10] sm:$0x1]
    %v2401 = vlaneseq
    %v2402 = vshrl.u32 %v2401, 7
    %v2403 = vsub.s32 0, %v2402
    %v2404 = vrot.slane %v2399, %v2403
    %vm2406 = vcmask 359424
    %v2408 = vsel %vm2406, %v2360, 0
    %v2411 = vsel %vm711, %v2398, 0
    %2413 = vmatprep.subr.mxu0 0.0
    %2414 = vmatpush1.msra.mxu0 %v2361
    %2415 = vmatprep.subr.mxu0 0.0
    %2416 = vmatpush1.msra.mxu0 %v2362
    %2417 = vmatprep.subr.mxu0 0.0
    %2418 = vmatpush1.msra.mxu0 %v2363
    %2419 = vmatprep.subr.mxu0 0.0
    %2420 = vmatpush1.msra.mxu0 %v2364
    %2421 = vmatprep.subr.mxu0 0.0
    %2422 = vmatpush1.msra.mxu0 %v2365
    %2423 = vmatprep.subr.mxu0 0.0
    %2424 = vmatpush1.msra.mxu0 %v2366
    %2425 = vmatprep.subr.mxu0 0.0
    %2426 = vmatpush1.msra.mxu0 %v2367
    %2427 = vmatprep.subr.mxu0 0.0
    %2428 = vmatpush1.msra.mxu0 %v2368
    %2429 = vmatprep.subr.mxu0 0.0
    %2430 = vmatpush1.msra.mxu0 %v2369
    %2431 = vmatprep.subr.mxu0 0.0
    %2432 = vmatpush1.msra.mxu0 %v2370
    %2433 = vmatprep.subr.mxu0 0.0
    %2434 = vmatpush1.msra.mxu0 %v2371
    %2435 = vmatprep.subr.mxu0 0.0
    %2436 = vmatpush1.msra.mxu0 %v2372
    %2437 = vmatprep.subr.mxu0 0.0
    %2438 = vmatpush1.msra.mxu0 %v2373
    %2439 = vmatprep.subr.mxu0 0.0
    %2440 = vmatpush1.msra.mxu0 %v2374
    %2441 = vmatprep.subr.mxu0 0.0
    %2442 = vmatpush1.msra.mxu0 %v2375
    %2443 = vmatprep.subr.mxu0 0.0
    %2444 = vmatpush1.msra.mxu0 %v2376
    %2445 = vmatprep.subr.mxu0 0.0
    %2446 = vmatpush1.msra.mxu0 %v2377
    %2447 = vmatprep.subr.mxu0 0.0
    %2448 = vmatpush1.msra.mxu0 %v2378
    %2449 = vmatprep.subr.mxu0 0.0
    %2450 = vmatpush1.msra.mxu0 %v2379
    %2451 = vmatprep.subr.mxu0 0.0
    %2452 = vmatpush1.msra.mxu0 %v2380
    %2453 = vmatprep.subr.mxu0 0.0
    %2454 = vmatpush1.msra.mxu0 %v2381
    %2455 = vmatprep.subr.mxu0 0.0
    %2456 = vmatpush1.msra.mxu0 %v2382
    %2457 = vmatprep.subr.mxu0 0.0
    %2458 = vmatpush1.msra.mxu0 %v2383
    %2459 = vmatprep.subr.mxu0 0.0
    %2460 = vmatpush1.msra.mxu0 %v2384
    %2461 = vmatprep.subr.mxu0 0.0
    %2462 = vmatpush1.msra.mxu0 %v2385
    %2463 = vmatprep.subr.mxu0 0.0
    %2464 = vmatpush1.msra.mxu0 %v2386
    %2465 = vmatprep.subr.mxu0 0.0
    %2466 = vmatpush1.msra.mxu0 %v2387
    %2467 = vmatprep.subr.mxu0 0.0
    %2468 = vmatpush1.msra.mxu0 %v2388
    %2469 = vmatprep.subr.mxu0 0.0
    %2470 = vmatpush1.msra.mxu0 %v2389
    %2471 = vmatprep.subr.mxu0 0.0
    %2472 = vmatpush1.msra.mxu0 %v2390
    %2473 = vmatprep.subr.mxu0 0.0
    %2474 = vmatpush1.msra.mxu0 %v2391
    %2475 = vmatprep.subr.mxu0 0.0
    %2476 = vmatpush1.msra.mxu0 %v2392
    %2477 = vmatprep.mubr.f32.mxu0 %v2359
    %2478 = vmatmul.mubr.f32.gmra.mrb[0].mxu0 %v2358
    %v2479 = vpop.f32.mrb[0].mxu0
    %v2480 = vadd.f32 %v2404, %v2479
    %v2481 = vpop.f32.mrb[0].mxu0
    %2482 = vdwg.mxu0
    %2483 = vmatprep.subr.mxu0 0.0
    %2484 = vmatpush1.msra.mxu0 %v2393
    %2485 = vmatprep.subr.mxu0 0.0
    %2486 = vmatpush1.msra.mxu0 %v2394
    %2487 = vmatprep.subr.mxu0 0.0
    %2488 = vmatpush1.msra.mxu0 %v2395
    %2489 = vmatprep.subr.mxu0 0.0
    %2490 = vmatpush1.msra.mxu0 %v2396
    %2491 = vmatprep.subr.mxu0 0.0
    %2492 = vmatpush1.msra.mxu0 %v2397
    %2493 = vmatprep.subr.mxu0 0.0
    %2494 = vmatpush1.msra.mxu0 %v2411
    %2495 = vmatprep.subr.mxu0 0.0
    %2496 = vmatpush1.msra.mxu0 0.0
    %2497 = vmatprep.subr.mxu0 0.0
    %2498 = vmatpush1.msra.mxu0 0.0
    %2499 = vmatprep.subr.mxu0 0.0
    %2500 = vmatpush1.msra.mxu0 0.0
    %2501 = vmatprep.subr.mxu0 0.0
    %2502 = vmatpush1.msra.mxu0 0.0
    %2503 = vmatprep.subr.mxu0 0.0
    %2504 = vmatpush1.msra.mxu0 0.0
    %2505 = vmatprep.subr.mxu0 0.0
    %2506 = vmatpush1.msra.mxu0 0.0
    %2507 = vmatprep.subr.mxu0 0.0
    %2508 = vmatpush1.msra.mxu0 0.0
    %2509 = vmatprep.subr.mxu0 0.0
    %2510 = vmatpush1.msra.mxu0 0.0
    %2511 = vmatprep.subr.mxu0 0.0
    %2512 = vmatpush1.msra.mxu0 0.0
    %2513 = vmatprep.subr.mxu0 0.0
    %2514 = vmatpush1.msra.mxu0 0.0
    %2515 = vmatprep.subr.mxu0 0.0
    %2516 = vmatpush1.msra.mxu0 0.0
    %2517 = vmatprep.subr.mxu0 0.0
    %2518 = vmatpush1.msra.mxu0 0.0
    %2519 = vmatprep.subr.mxu0 0.0
    %2520 = vmatpush1.msra.mxu0 0.0
    %2521 = vmatprep.subr.mxu0 0.0
    %2522 = vmatpush1.msra.mxu0 0.0
    %2523 = vmatprep.subr.mxu0 0.0
    %2524 = vmatpush1.msra.mxu0 0.0
    %2525 = vmatprep.subr.mxu0 0.0
    %2526 = vmatpush1.msra.mxu0 0.0
    %2527 = vmatprep.subr.mxu0 0.0
    %2528 = vmatpush1.msra.mxu0 0.0
    %2529 = vmatprep.subr.mxu0 0.0
    %2530 = vmatpush1.msra.mxu0 0.0
    %2531 = vmatprep.subr.mxu0 0.0
    %2532 = vmatpush1.msra.mxu0 0.0
    %2533 = vmatprep.subr.mxu0 0.0
    %2534 = vmatpush1.msra.mxu0 0.0
    %2535 = vmatprep.subr.mxu0 0.0
    %2536 = vmatpush1.msra.mxu0 0.0
    %2537 = vmatprep.subr.mxu0 0.0
    %2538 = vmatpush1.msra.mxu0 0.0
    %2539 = vmatprep.subr.mxu0 0.0
    %2540 = vmatpush1.msra.mxu0 0.0
    %2541 = vmatprep.subr.mxu0 0.0
    %2542 = vmatpush1.msra.mxu0 0.0
    %2543 = vmatprep.subr.mxu0 0.0
    %2544 = vmatpush1.msra.mxu0 0.0
    %2545 = vmatprep.subr.mxu0 0.0
    %2546 = vmatpush1.msra.mxu0 0.0
    %2547 = vmatprep.mubr.f32.mxu0 0.0
    %2548 = vmatmul.mubr.f32.gmra.mrb[0].mxu0 %v2408
    %v2549 = vpop.f32.mrb[0].mxu0
    %v2550 = vadd.f32 %v2480, %v2549
    %v2551 = vpop.f32.mrb[0].mxu0
    %2552 = vdwg.mxu0
    %v2553 = vmax.f32 %v2550, 0.0
    %v2554 = vld [vmem:[%s11] sm:$0xff]
    %v2555 = vld [vmem:[%s11 + $0x8] sm:$0xff]
    %v2556 = vld [vmem:[%s11 + $0x10] sm:$0xff]
    %v2557 = vld [vmem:[%s11 + $0x18] sm:$0xff]
    %v2558 = vld [vmem:[%s11 + $0x20] sm:$0xff]
    %v2559 = vld [vmem:[%s11 + $0x28] sm:$0xff]
    %v2560 = vld [vmem:[%s11 + $0x30] sm:$0xff]
    %v2561 = vld [vmem:[%s11 + $0x38] sm:$0xff]
    %v2562 = vld [vmem:[%s11 + $0x40] sm:$0xff]
    %v2563 = vld [vmem:[%s11 + $0x48] sm:$0xff]
    %v2564 = vld [vmem:[%s11 + $0x50] sm:$0xff]
    %v2565 = vld [vmem:[%s11 + $0x58] sm:$0xff]
    %v2566 = vld [vmem:[%s11 + $0x60] sm:$0xf]
    %v2567 = vld [vmem:[%s12] sm:$0x1]
    %v2569 = vlaneseq
    %v2570 = vshrl.u32 %v2569, 7
    %v2571 = vsub.s32 0, %v2570
    %v2572 = vrot.slane %v2567, %v2571
    %v2575 = vsel %vm566, %v2553, 0
    %v2578 = vsel %vm711, %v2566, 0
    %2580 = vmatprep.subr.mxu0 0.0
    %2581 = vmatpush1.msra.mxu0 %v2554
    %2582 = vmatprep.subr.mxu0 0.0
    %2583 = vmatpush1.msra.mxu0 %v2555
    %2584 = vmatprep.subr.mxu0 0.0
    %2585 = vmatpush1.msra.mxu0 %v2556
    %2586 = vmatprep.subr.mxu0 0.0
    %2587 = vmatpush1.msra.mxu0 %v2557
    %2588 = vmatprep.subr.mxu0 0.0
    %2589 = vmatpush1.msra.mxu0 %v2558
    %2590 = vmatprep.subr.mxu0 0.0
    %2591 = vmatpush1.msra.mxu0 %v2559
    %2592 = vmatprep.subr.mxu0 0.0
    %2593 = vmatpush1.msra.mxu0 %v2560
    %2594 = vmatprep.subr.mxu0 0.0
    %2595 = vmatpush1.msra.mxu0 %v2561
    %2596 = vmatprep.subr.mxu0 0.0
    %2597 = vmatpush1.msra.mxu0 %v2562
    %2598 = vmatprep.subr.mxu0 0.0
    %2599 = vmatpush1.msra.mxu0 %v2563
    %2600 = vmatprep.subr.mxu0 0.0
    %2601 = vmatpush1.msra.mxu0 %v2564
    %2602 = vmatprep.subr.mxu0 0.0
    %2603 = vmatpush1.msra.mxu0 %v2565
    %2604 = vmatprep.subr.mxu0 0.0
    %2605 = vmatpush1.msra.mxu0 %v2578
    %2606 = vmatprep.subr.mxu0 0.0
    %2607 = vmatpush1.msra.mxu0 0.0
    %2608 = vmatprep.subr.mxu0 0.0
    %2609 = vmatpush1.msra.mxu0 0.0
    %2610 = vmatprep.subr.mxu0 0.0
    %2611 = vmatpush1.msra.mxu0 0.0
    %2612 = vmatprep.subr.mxu0 0.0
    %2613 = vmatpush1.msra.mxu0 0.0
    %2614 = vmatprep.subr.mxu0 0.0
    %2615 = vmatpush1.msra.mxu0 0.0
    %2616 = vmatprep.subr.mxu0 0.0
    %2617 = vmatpush1.msra.mxu0 0.0
    %2618 = vmatprep.subr.mxu0 0.0
    %2619 = vmatpush1.msra.mxu0 0.0
    %2620 = vmatprep.subr.mxu0 0.0
    %2621 = vmatpush1.msra.mxu0 0.0
    %2622 = vmatprep.subr.mxu0 0.0
    %2623 = vmatpush1.msra.mxu0 0.0
    %2624 = vmatprep.subr.mxu0 0.0
    %2625 = vmatpush1.msra.mxu0 0.0
    %2626 = vmatprep.subr.mxu0 0.0
    %2627 = vmatpush1.msra.mxu0 0.0
    %2628 = vmatprep.subr.mxu0 0.0
    %2629 = vmatpush1.msra.mxu0 0.0
    %2630 = vmatprep.subr.mxu0 0.0
    %2631 = vmatpush1.msra.mxu0 0.0
    %2632 = vmatprep.subr.mxu0 0.0
    %2633 = vmatpush1.msra.mxu0 0.0
    %2634 = vmatprep.subr.mxu0 0.0
    %2635 = vmatpush1.msra.mxu0 0.0
    %2636 = vmatprep.subr.mxu0 0.0
    %2637 = vmatpush1.msra.mxu0 0.0
    %2638 = vmatprep.subr.mxu0 0.0
    %2639 = vmatpush1.msra.mxu0 0.0
    %2640 = vmatprep.subr.mxu0 0.0
    %2641 = vmatpush1.msra.mxu0 0.0
    %2642 = vmatprep.subr.mxu0 0.0
    %2643 = vmatpush1.msra.mxu0 0.0
    %2644 = vmatprep.mubr.f32.mxu0 0.0
    %2645 = vmatmul.mubr.f32.gmra.mrb[0].mxu0 %v2575
    %v2646 = vpop.f32.mrb[0].mxu0
    %v2647 = vadd.f32 %v2572, %v2646
    %v2648 = vpop.f32.mrb[0].mxu0
    %2649 = vdwg.mxu0
    %vm2650 = vcmask 41984
    %v2651 = vsel %vm2650, %v2647, -inf
    %2652 = vmax.xlane.f32.xlu0 %v2651
    %v2653 = vpop.xlane.xlu0 %2652
    %v2654 = vsub.f32 %v2647, %v2653
    %v2655 = vmul.f32 %v2654, 1.442695
    %v2656 = vpow.pop %v2655
    %v2657 = vsel %vm2650, %v2656, 0.0
    %2658 = vadd.xlane.f32.xlu0 %v2657
    %v2659 = vpop.xlane.xlu0 %2658
    %v2660 = vlog2.pop %v2659
    %v2661 = vmul.f32 %v2660, 0.6931472
    %v2662 = vsub.f32 %v2654, %v2661
    %2663 = vst.msk [vmem:[#allocation9] sm:$0x3] %vm2650, %v2662
    // Predicated region
    $region54: #{mynn_forward.1} parent=1 // pred_check
      _
    $region55: #{mynn_forward.1} parent=1 // pred_check_branch
      %2665 = sbr.rel (0) target = $region57
    $region56: #{mynn_forward.1} parent=1 // pred_region
      %s2667 = ssub.s32 32, 32
      %2668 = vsyncadd [#allocation10], %s2667
      %s2670 = sshll.u32 [#allocation9], 4
      %s2671 = int_to_ptr.vmem [resolvable:$true] %s2670
      %2673 = dma.vmem_to_hbm [thread:$0]  %s2671, 32, %s13, [#allocation10]
    $region57: #{mynn_forward.1} parent=1 // pred_fallthru
      _
    // Predicated region
    $region58: #{mynn_forward.1} parent=1 // pred_check
      _
    $region59: #{mynn_forward.1} parent=1 // pred_check_branch
      %2675 = sbr.rel (0) target = $region61
    $region60: #{mynn_forward.1} parent=1 // pred_region
      %2676 = dma.done [#allocation10], 32
    $region61: #{mynn_forward.1} parent=1 // pred_fallthru
      _
    %2677 = vsyncpa [#allocation10], 1

</llo_original>
